<compile_context>
chip_gen: v6e
topology: v6e:2x2x1
jax: 0.10.0
libtpu: 0.0.40
codegen_flags: <defaults>
</compile_context>

<pallas_src>
import numpy as np
import jax
import jax.numpy as jnp
from jax.experimental import pallas as pl
from jax.experimental.pallas import tpu as pltpu


# ----------------------------------------------------------------------------
# Kernel factory: full BasicBlock_AP forward for TB samples per grid step.
# ----------------------------------------------------------------------------
def _make_kernel(TB, H, W, Cin, C, use_pool, identity, eps=1e-5):
    Ho, Wo = (H // 2, W // 2) if use_pool else (H, W)
    HW, HWo = H * W, Ho * Wo

    def conv3x3(v4, w_col, cin):
        """3x3 conv, stride 1, pad 1, as one fused im2col matmul.
        v4: (TB, Hc, Wc, cin); w_col: (9*cin, Cout)  ->  (TB*Hc*Wc, Cout)."""
        Hc, Wc = v4.shape[1], v4.shape[2]
        zr = jnp.zeros((TB, 1, Wc, cin), jnp.float32)
        vp = jnp.concatenate([zr, v4, zr], axis=1)              # zero-pad H
        zc = jnp.zeros((TB, Hc + 2, 1, cin), jnp.float32)
        vp = jnp.concatenate([zc, vp, zc], axis=2)              # zero-pad W
        # 9 shifted views (static slices of the padded tensor), concat on lanes.
        taps = [vp[:, dy:dy + Hc, dx:dx + Wc, :]
                for dy in range(3) for dx in range(3)]
        col = jnp.concatenate(taps, axis=-1)                    # (TB, Hc, Wc, 9*cin)
        col2d = col.reshape(TB * Hc * Wc, 9 * cin)
        return jnp.dot(col2d, w_col, preferred_element_type=jnp.float32)

    def instnorm(v2d, hw, g, b):
        """Per-sample, per-channel normalization over the spatial axis."""
        v = v2d.reshape(TB, hw, C)
        mean = jnp.mean(v, axis=1, keepdims=True)
        cen = v - mean
        var = jnp.mean(cen * cen, axis=1, keepdims=True)
        out = cen * jax.lax.rsqrt(var + eps) * g + b
        return out.reshape(TB * hw, C)

    def pool2x2(v2d, pbuf):
        """avg_pool2d(kernel=2, stride=2).  v2d: (TB*H*W, C) in (b,h,w) order.
        H-halving: leading-dim reshape + add.  W-halving: sublane-strided ref read
        (flat index of (b,ho,wo) is exactly 2*out_row [+1] because W == 2*Wo)."""
        v5 = v2d.reshape(TB, Ho, 2, W, C)
        vh = 0.5 * (v5[:, :, 0] + v5[:, :, 1])                  # (TB, Ho, W, C)
        pbuf[...] = vh.reshape(TB * Ho * W, C)
        n_out = TB * Ho * Wo
        return 0.5 * (pbuf[pl.ds(0, n_out, stride=2), :] +
                      pbuf[pl.ds(1, n_out, stride=2), :])       # (TB*HWo, C)

    if identity:
        # stride == 1 and Cin == C: no pooling anywhere, identity shortcut.
        def kernel(x_ref, w1_ref, g1_ref, b1_ref, w2_ref, g2_ref, b2_ref, out_ref):
            x = x_ref[...]                                      # (TB, H, W, Cin)
            h = conv3x3(x, w1_ref[...], Cin)                    # (TB*HW, C)
            h = jnp.maximum(instnorm(h, HW, g1_ref[...], b1_ref[...]), 0.0)
            o = conv3x3(h.reshape(TB, H, W, C), w2_ref[...], C)
            o = instnorm(o, HWo, g2_ref[...], b2_ref[...])
            sc = x.reshape(TB * HW, C)                          # Cin == C
            out_ref[...] = jnp.maximum(o + sc, 0.0).reshape(TB, HWo, C)
        return kernel

    def kernel(x_ref, w1_ref, g1_ref, b1_ref, w2_ref, g2_ref, b2_ref,
               wsc_ref, gsc_ref, bsc_ref, out_ref, pbuf):
        x = x_ref[...]                                          # (TB, H, W, Cin)
        # ---- main path: conv1 -> in1 -> relu -> avgpool -> conv2 -> in2 ----
        h = conv3x3(x, w1_ref[...], Cin)                        # (TB*HW, C)
        h = jnp.maximum(instnorm(h, HW, g1_ref[...], b1_ref[...]), 0.0)
        h = pool2x2(h, pbuf)                                    # (TB*HWo, C)
        o = conv3x3(h.reshape(TB, Ho, Wo, C), w2_ref[...], C)   # (TB*HWo, C)
        o = instnorm(o, HWo, g2_ref[...], b2_ref[...])
        # ---- shortcut: 1x1 conv -> avgpool(2,2) -> instance norm ----
        sc = jnp.dot(x.reshape(TB * HW, Cin), wsc_ref[...],
                     preferred_element_type=jnp.float32)        # (TB*HW, C)
        sc = pool2x2(sc, pbuf)
        sc = instnorm(sc, HWo, gsc_ref[...], bsc_ref[...])
        # ---- residual add + relu ----
        out_ref[...] = jnp.maximum(o + sc, 0.0).reshape(TB, HWo, C)

    return kernel


# ----------------------------------------------------------------------------
# Wrapper: parameter packing + pallas_call.
# ----------------------------------------------------------------------------
def basic_block_ap_forward(x_nchw, params, stride, samples_per_step=8):
    N, Cin, H, W = x_nchw.shape
    C = params["w1"].shape[0]
    use_pool = stride != 1
    identity = (stride == 1) and (Cin == C)
    if (not identity) and (not use_pool):
        raise ValueError("BasicBlock_AP with stride==1 and in_planes!=planes "
                         "is not shape-consistent (shortcut pools, main path does not)")
    Ho, Wo = (H // 2, W // 2) if use_pool else (H, W)
    HW, HWo = H * W, Ho * Wo

    # batch samples per grid step; pad N up to a multiple of TB
    TB = max(1, min(samples_per_step, N))
    n_blocks = (N + TB - 1) // TB
    N_pad = n_blocks * TB

    x_nhwc = jnp.transpose(x_nchw, (0, 2, 3, 1)).astype(jnp.float32)   # (N,H,W,Cin)
    if N_pad != N:
        x_nhwc = jnp.concatenate(
            [x_nhwc, jnp.zeros((N_pad - N, H, W, Cin), jnp.float32)], axis=0)

    # torch conv weight (Cout, Cin, 3, 3) -> im2col weight (9*Cin, Cout), tap-major.
    def pack3x3(w):
        return jnp.concatenate([w[:, :, ky, kx].T
                                for ky in range(3) for kx in range(3)], axis=0)

    w1_col = pack3x3(params["w1"]).astype(jnp.float32)                 # (9*Cin, C)
    w2_col = pack3x3(params["w2"]).astype(jnp.float32)                 # (9*C,  C)
    g1 = params["g1"].reshape(1, C).astype(jnp.float32)
    b1 = params["b1"].reshape(1, C).astype(jnp.float32)
    g2 = params["g2"].reshape(1, C).astype(jnp.float32)
    b2 = params["b2"].reshape(1, C).astype(jnp.float32)

    def const_spec(arr):
        nd = arr.ndim
        return pl.BlockSpec(arr.shape, lambda n, _nd=nd: (0,) * _nd)

    inputs = [x_nhwc, w1_col, g1, b1, w2_col, g2, b2]
    in_specs = [pl.BlockSpec((TB, H, W, Cin), lambda n: (n, 0, 0, 0)),
                const_spec(w1_col), const_spec(g1), const_spec(b1),
                const_spec(w2_col), const_spec(g2), const_spec(b2)]
    scratch = []
    if not identity:
        wsc = params["wsc"][:, :, 0, 0].T.astype(jnp.float32)          # (Cin, C)
        gsc = params["gsc"].reshape(1, C).astype(jnp.float32)
        bsc = params["bsc"].reshape(1, C).astype(jnp.float32)
        inputs += [wsc, gsc, bsc]
        in_specs += [const_spec(wsc), const_spec(gsc), const_spec(bsc)]
        scratch = [pltpu.VMEM((TB * Ho * W, C), jnp.float32)]          # pooling buffer

    kernel = _make_kernel(TB, H, W, Cin, C, use_pool, identity)

    # advisory cost estimate for the XLA scheduler
    flops = 2 * N_pad * (HW * 9 * Cin * C + HWo * 9 * C * C)
    if not identity:
        flops += 2 * N_pad * HW * Cin * C
    param_elems = w1_col.size + w2_col.size + 4 * C + (0 if identity else Cin * C + 2 * C)
    cost = pl.CostEstimate(
        flops=int(flops),
        transcendentals=int(N_pad * C * (2 if identity else 3)),
        bytes_accessed=int(4 * (N_pad * HW * Cin + N_pad * HWo * C + param_elems)))

    out = pl.pallas_call(
        kernel,
        out_shape=jax.ShapeDtypeStruct((N_pad, HWo, C), jnp.float32),
        grid=(n_blocks,),
        in_specs=in_specs,
        out_specs=pl.BlockSpec((TB, HWo, C), lambda n: (n, 0, 0)),
        scratch_shapes=scratch,
        compiler_params=pltpu.CompilerParams(
            dimension_semantics=("parallel",),        # batch blocks are independent
            vmem_limit_bytes=32 * 1024 * 1024),
        cost_estimate=cost,
    )(*inputs)

    out = out[:N].reshape(N, Ho, Wo, C)
    return jnp.transpose(out, (0, 3, 1, 2))           # back to NCHW


# ----------------------------------------------------------------------------
# Pure-JAX reference matching the PyTorch module (verification only).
# ----------------------------------------------------------------------------
def reference_forward(x, params, stride):
    w1, w2 = params["w1"], params["w2"]
    C, Cin = w1.shape[0], x.shape[1]

    def conv(v, w, pad):
        return jax.lax.conv_general_dilated(
            v, w, window_strides=(1, 1), padding=((pad, pad), (pad, pad)),
            dimension_numbers=("NCHW", "OIHW", "NCHW"),
            precision=jax.lax.Precision.HIGHEST)

    def inorm(v, g, b):
        mean = v.mean(axis=(2, 3), keepdims=True)
        var = ((v - mean) ** 2).mean(axis=(2, 3), keepdims=True)
        return ((v - mean) / jnp.sqrt(var + 1e-5)
                * g[None, :, None, None] + b[None, :, None, None])

    def avgpool(v):
        n, c, h, w = v.shape
        return v.reshape(n, c, h // 2, 2, w // 2, 2).mean(axis=(3, 5))

    out = jax.nn.relu(inorm(conv(x, w1, 1), params["g1"], params["b1"]))
    if stride != 1:
        out = avgpool(out)
    out = inorm(conv(out, w2, 1), params["g2"], params["b2"])
    if stride != 1 or Cin != C:
        sc = inorm(avgpool(conv(x, params["wsc"], 0)), params["gsc"], params["bsc"])
    else:
        sc = x
    return jax.nn.relu(out + sc)


if __name__ == "__main__":
    # config consistent with BasicBlock_AP(in_planes=4, planes=8, stride=2)
    N, Cin, C, H, W, stride = 2, 4, 8, 16, 16, 2

    key = jax.random.PRNGKey(0)
    ks = jax.random.split(key, 10)
    params = {
        "w1": jax.random.normal(ks[0], (C, Cin, 3, 3), jnp.float32) / np.sqrt(9 * Cin),
        "g1": 1.0 + 0.1 * jax.random.normal(ks[1], (C,), jnp.float32),
        "b1": 0.1 * jax.random.normal(ks[2], (C,), jnp.float32),
        "w2": jax.random.normal(ks[3], (C, C, 3, 3), jnp.float32) / np.sqrt(9 * C),
        "g2": 1.0 + 0.1 * jax.random.normal(ks[4], (C,), jnp.float32),
        "b2": 0.1 * jax.random.normal(ks[5], (C,), jnp.float32),
        "wsc": jax.random.normal(ks[6], (C, Cin, 1, 1), jnp.float32) / np.sqrt(Cin),
        "gsc": 1.0 + 0.1 * jax.random.normal(ks[7], (C,), jnp.float32),
        "bsc": 0.1 * jax.random.normal(ks[8], (C,), jnp.float32),
    }
    x = jax.random.normal(ks[9], (N, Cin, H, W), jnp.float32)

    out = basic_block_ap_forward(x, params, stride)
    out = jax.block_until_ready(out)

    ref = reference_forward(x, params, stride)
    if not np.allclose(np.asarray(out), np.asarray(ref), atol=5e-3, rtol=5e-3):
        err = float(jnp.max(jnp.abs(out - ref)))
        raise AssertionError(f"Pallas kernel mismatch vs reference, max abs err = {err}")

    print("KERNEL_OK")
</pallas_src>

<mosaic_0001>
module attributes {stable_mosaic.version = 11 : i64} {
  func.func @kernel(%arg0: i32, %arg1: memref<2x16x16x4xf32, #tpu.memory_space<vmem>>, %arg2: memref<36x8xf32, #tpu.memory_space<vmem>>, %arg3: memref<1x8xf32, #tpu.memory_space<vmem>>, %arg4: memref<1x8xf32, #tpu.memory_space<vmem>>, %arg5: memref<72x8xf32, #tpu.memory_space<vmem>>, %arg6: memref<1x8xf32, #tpu.memory_space<vmem>>, %arg7: memref<1x8xf32, #tpu.memory_space<vmem>>, %arg8: memref<4x8xf32, #tpu.memory_space<vmem>>, %arg9: memref<1x8xf32, #tpu.memory_space<vmem>>, %arg10: memref<1x8xf32, #tpu.memory_space<vmem>>, %arg11: memref<2x64x8xf32, #tpu.memory_space<vmem>>, %arg12: memref<256x8xf32, #tpu.memory_space<vmem>>) attributes {dimension_semantics = [#tpu.dimension_semantics<parallel>], iteration_bounds = array<i64: 1>, scalar_prefetch = 0 : i64, scratch_operands = 1 : i64, tpu.core_type = #tpu.core_type<tc>, window_params = [{transform_indices = @transform_0, window_bounds = array<i64: 2, 16, 16, 4>}, {pipeline_mode = #tpu.pipeline_mode<synchronous>, transform_indices = @transform_1, window_bounds = array<i64: 36, 8>}, {pipeline_mode = #tpu.pipeline_mode<synchronous>, transform_indices = @transform_2, window_bounds = array<i64: 1, 8>}, {pipeline_mode = #tpu.pipeline_mode<synchronous>, transform_indices = @transform_3, window_bounds = array<i64: 1, 8>}, {pipeline_mode = #tpu.pipeline_mode<synchronous>, transform_indices = @transform_4, window_bounds = array<i64: 72, 8>}, {pipeline_mode = #tpu.pipeline_mode<synchronous>, transform_indices = @transform_5, window_bounds = array<i64: 1, 8>}, {pipeline_mode = #tpu.pipeline_mode<synchronous>, transform_indices = @transform_6, window_bounds = array<i64: 1, 8>}, {pipeline_mode = #tpu.pipeline_mode<synchronous>, transform_indices = @transform_7, window_bounds = array<i64: 4, 8>}, {pipeline_mode = #tpu.pipeline_mode<synchronous>, transform_indices = @transform_8, window_bounds = array<i64: 1, 8>}, {pipeline_mode = #tpu.pipeline_mode<synchronous>, transform_indices = @transform_9, window_bounds = array<i64: 1, 8>}, {transform_indices = @transform_10, window_bounds = array<i64: 2, 64, 8>}]} {
    %c0 = arith.constant 0 : index
    %c0_0 = arith.constant 0 : index
    %c0_1 = arith.constant 0 : index
    %c0_2 = arith.constant 0 : index
    %0 = vector.load %arg1[%c0, %c0_0, %c0_1, %c0_2] : memref<2x16x16x4xf32, #tpu.memory_space<vmem>>, vector<2x16x16x4xf32>
    %c0_3 = arith.constant 0 : index
    %c0_4 = arith.constant 0 : index
    %1 = vector.load %arg2[%c0_3, %c0_4] : memref<36x8xf32, #tpu.memory_space<vmem>>, vector<36x8xf32>
    %cst = arith.constant 0.000000e+00 : f32
    %2 = vector.broadcast %cst : f32 to vector<2x1x16x4xf32>
    %3 = tpu.concatenate %2, %0, %2 in 1 : vector<2x1x16x4xf32>, vector<2x16x16x4xf32>, vector<2x1x16x4xf32> -> vector<2x18x16x4xf32>
    %cst_5 = arith.constant 0.000000e+00 : f32
    %4 = vector.broadcast %cst_5 : f32 to vector<2x18x1x4xf32>
    %5 = tpu.concatenate %4, %3, %4 in 2 : vector<2x18x1x4xf32>, vector<2x18x16x4xf32>, vector<2x18x1x4xf32> -> vector<2x18x18x4xf32>
    %6 = vector.extract_strided_slice %5 {offsets = [0, 0, 0, 0], sizes = [2, 16, 16, 4], strides = [1, 1, 1, 1]} : vector<2x18x18x4xf32> to vector<2x16x16x4xf32>
    %7 = vector.extract_strided_slice %5 {offsets = [0, 0, 1, 0], sizes = [2, 16, 16, 4], strides = [1, 1, 1, 1]} : vector<2x18x18x4xf32> to vector<2x16x16x4xf32>
    %8 = vector.extract_strided_slice %5 {offsets = [0, 0, 2, 0], sizes = [2, 16, 16, 4], strides = [1, 1, 1, 1]} : vector<2x18x18x4xf32> to vector<2x16x16x4xf32>
    %9 = vector.extract_strided_slice %5 {offsets = [0, 1, 0, 0], sizes = [2, 16, 16, 4], strides = [1, 1, 1, 1]} : vector<2x18x18x4xf32> to vector<2x16x16x4xf32>
    %10 = vector.extract_strided_slice %5 {offsets = [0, 1, 1, 0], sizes = [2, 16, 16, 4], strides = [1, 1, 1, 1]} : vector<2x18x18x4xf32> to vector<2x16x16x4xf32>
    %11 = vector.extract_strided_slice %5 {offsets = [0, 1, 2, 0], sizes = [2, 16, 16, 4], strides = [1, 1, 1, 1]} : vector<2x18x18x4xf32> to vector<2x16x16x4xf32>
    %12 = vector.extract_strided_slice %5 {offsets = [0, 2, 0, 0], sizes = [2, 16, 16, 4], strides = [1, 1, 1, 1]} : vector<2x18x18x4xf32> to vector<2x16x16x4xf32>
    %13 = vector.extract_strided_slice %5 {offsets = [0, 2, 1, 0], sizes = [2, 16, 16, 4], strides = [1, 1, 1, 1]} : vector<2x18x18x4xf32> to vector<2x16x16x4xf32>
    %14 = vector.extract_strided_slice %5 {offsets = [0, 2, 2, 0], sizes = [2, 16, 16, 4], strides = [1, 1, 1, 1]} : vector<2x18x18x4xf32> to vector<2x16x16x4xf32>
    %15 = tpu.concatenate %6, %7, %8, %9, %10, %11, %12, %13, %14 in 3 : vector<2x16x16x4xf32>, vector<2x16x16x4xf32>, vector<2x16x16x4xf32>, vector<2x16x16x4xf32>, vector<2x16x16x4xf32>, vector<2x16x16x4xf32>, vector<2x16x16x4xf32>, vector<2x16x16x4xf32>, vector<2x16x16x4xf32> -> vector<2x16x16x36xf32>
    %16 = vector.shape_cast %15 : vector<2x16x16x36xf32> to vector<512x36xf32>
    %cst_6 = arith.constant dense<0.000000e+00> : vector<512x8xf32>
    %17 = tpu.matmul %16, %1, %cst_6 {dimension_numbers = #tpu.dot_dimension_numbers<[1], [0], [0], [1], [0, 0, 1, 1], [], []>} : vector<512x36xf32>, vector<36x8xf32>, vector<512x8xf32> -> vector<512x8xf32>
    %c0_7 = arith.constant 0 : index
    %c0_8 = arith.constant 0 : index
    %18 = vector.load %arg3[%c0_7, %c0_8] : memref<1x8xf32, #tpu.memory_space<vmem>>, vector<1x8xf32>
    %c0_9 = arith.constant 0 : index
    %c0_10 = arith.constant 0 : index
    %19 = vector.load %arg4[%c0_9, %c0_10] : memref<1x8xf32, #tpu.memory_space<vmem>>, vector<1x8xf32>
    %20 = vector.shape_cast %17 : vector<512x8xf32> to vector<2x256x8xf32>
    %cst_11 = arith.constant dense<0.000000e+00> : vector<2x8xf32>
    %21 = vector.multi_reduction <add>, %20, %cst_11 [1] : vector<2x256x8xf32> to vector<2x8xf32>
    %22 = vector.shape_cast %21 : vector<2x8xf32> to vector<2x1x8xf32>
    %cst_12 = arith.constant 2.560000e+02 : f32
    %23 = vector.broadcast %cst_12 : f32 to vector<2x1x8xf32>
    %24 = arith.divf %22, %23 : vector<2x1x8xf32>
    %25 = vector.broadcast %24 : vector<2x1x8xf32> to vector<2x256x8xf32>
    %26 = arith.subf %20, %25 : vector<2x256x8xf32>
    %27 = arith.mulf %26, %26 : vector<2x256x8xf32>
    %cst_13 = arith.constant dense<0.000000e+00> : vector<2x8xf32>
    %28 = vector.multi_reduction <add>, %27, %cst_13 [1] : vector<2x256x8xf32> to vector<2x8xf32>
    %29 = vector.shape_cast %28 : vector<2x8xf32> to vector<2x1x8xf32>
    %cst_14 = arith.constant 2.560000e+02 : f32
    %30 = vector.broadcast %cst_14 : f32 to vector<2x1x8xf32>
    %31 = arith.divf %29, %30 : vector<2x1x8xf32>
    %cst_15 = arith.constant 9.99999974E-6 : f32
    %32 = vector.broadcast %cst_15 : f32 to vector<2x1x8xf32>
    %33 = arith.addf %31, %32 : vector<2x1x8xf32>
    %34 = math.rsqrt %33 : vector<2x1x8xf32>
    %35 = vector.broadcast %34 : vector<2x1x8xf32> to vector<2x256x8xf32>
    %36 = arith.mulf %26, %35 : vector<2x256x8xf32>
    %37 = vector.shape_cast %18 : vector<1x8xf32> to vector<1x1x8xf32>
    %38 = vector.broadcast %37 : vector<1x1x8xf32> to vector<2x256x8xf32>
    %39 = arith.mulf %36, %38 : vector<2x256x8xf32>
    %40 = vector.shape_cast %19 : vector<1x8xf32> to vector<1x1x8xf32>
    %41 = vector.broadcast %40 : vector<1x1x8xf32> to vector<2x256x8xf32>
    %42 = arith.addf %39, %41 : vector<2x256x8xf32>
    %43 = vector.shape_cast %42 : vector<2x256x8xf32> to vector<512x8xf32>
    %cst_16 = arith.constant 0.000000e+00 : f32
    %44 = vector.broadcast %cst_16 : f32 to vector<512x8xf32>
    %45 = arith.maximumf %43, %44 : vector<512x8xf32>
    %46 = vector.shape_cast %45 : vector<512x8xf32> to vector<2x8x2x16x8xf32>
    %47 = vector.extract_strided_slice %46 {offsets = [0, 0, 0, 0, 0], sizes = [2, 8, 1, 16, 8], strides = [1, 1, 1, 1, 1]} : vector<2x8x2x16x8xf32> to vector<2x8x1x16x8xf32>
    %48 = vector.shape_cast %47 : vector<2x8x1x16x8xf32> to vector<2x8x16x8xf32>
    %49 = vector.extract_strided_slice %46 {offsets = [0, 0, 1, 0, 0], sizes = [2, 8, 1, 16, 8], strides = [1, 1, 1, 1, 1]} : vector<2x8x2x16x8xf32> to vector<2x8x1x16x8xf32>
    %50 = vector.shape_cast %49 : vector<2x8x1x16x8xf32> to vector<2x8x16x8xf32>
    %51 = arith.addf %48, %50 : vector<2x8x16x8xf32>
    %cst_17 = arith.constant 5.000000e-01 : f32
    %52 = vector.broadcast %cst_17 : f32 to vector<2x8x16x8xf32>
    %53 = arith.mulf %52, %51 : vector<2x8x16x8xf32>
    %54 = vector.shape_cast %53 : vector<2x8x16x8xf32> to vector<256x8xf32>
    %c0_18 = arith.constant 0 : index
    %c0_19 = arith.constant 0 : index
    %55 = vector.load %arg12[%c0_18, %c0_19] : memref<256x8xf32, #tpu.memory_space<vmem>>, vector<256x8xf32>
    tpu.vector_store %arg12[%c0_18, %c0_19], %54 {strides = array<i32>} : memref<256x8xf32, #tpu.memory_space<vmem>>, vector<256x8xf32>,
    %c0_20 = arith.constant 0 : index
    %c0_21 = arith.constant 0 : index
    %56 = tpu.strided_load %arg12[%c0_20, %c0_21] {strides = array<i32: 2, 1>} : memref<256x8xf32, #tpu.memory_space<vmem>>, vector<128x8xf32>
    %c1 = arith.constant 1 : index
    %c0_22 = arith.constant 0 : index
    %57 = tpu.strided_load %arg12[%c1, %c0_22] {strides = array<i32: 2, 1>} : memref<256x8xf32, #tpu.memory_space<vmem>>, vector<128x8xf32>
    %58 = arith.addf %56, %57 : vector<128x8xf32>
    %cst_23 = arith.constant 5.000000e-01 : f32
    %59 = vector.broadcast %cst_23 : f32 to vector<128x8xf32>
    %60 = arith.mulf %59, %58 : vector<128x8xf32>
    %61 = vector.shape_cast %60 : vector<128x8xf32> to vector<2x8x8x8xf32>
    %c0_24 = arith.constant 0 : index
    %c0_25 = arith.constant 0 : index
    %62 = vector.load %arg5[%c0_24, %c0_25] : memref<72x8xf32, #tpu.memory_space<vmem>>, vector<72x8xf32>
    %cst_26 = arith.constant 0.000000e+00 : f32
    %63 = vector.broadcast %cst_26 : f32 to vector<2x1x8x8xf32>
    %64 = tpu.concatenate %63, %61, %63 in 1 : vector<2x1x8x8xf32>, vector<2x8x8x8xf32>, vector<2x1x8x8xf32> -> vector<2x10x8x8xf32>
    %cst_27 = arith.constant 0.000000e+00 : f32
    %65 = vector.broadcast %cst_27 : f32 to vector<2x10x1x8xf32>
    %66 = tpu.concatenate %65, %64, %65 in 2 : vector<2x10x1x8xf32>, vector<2x10x8x8xf32>, vector<2x10x1x8xf32> -> vector<2x10x10x8xf32>
    %67 = vector.extract_strided_slice %66 {offsets = [0, 0, 0, 0], sizes = [2, 8, 8, 8], strides = [1, 1, 1, 1]} : vector<2x10x10x8xf32> to vector<2x8x8x8xf32>
    %68 = vector.extract_strided_slice %66 {offsets = [0, 0, 1, 0], sizes = [2, 8, 8, 8], strides = [1, 1, 1, 1]} : vector<2x10x10x8xf32> to vector<2x8x8x8xf32>
    %69 = vector.extract_strided_slice %66 {offsets = [0, 0, 2, 0], sizes = [2, 8, 8, 8], strides = [1, 1, 1, 1]} : vector<2x10x10x8xf32> to vector<2x8x8x8xf32>
    %70 = vector.extract_strided_slice %66 {offsets = [0, 1, 0, 0], sizes = [2, 8, 8, 8], strides = [1, 1, 1, 1]} : vector<2x10x10x8xf32> to vector<2x8x8x8xf32>
    %71 = vector.extract_strided_slice %66 {offsets = [0, 1, 1, 0], sizes = [2, 8, 8, 8], strides = [1, 1, 1, 1]} : vector<2x10x10x8xf32> to vector<2x8x8x8xf32>
    %72 = vector.extract_strided_slice %66 {offsets = [0, 1, 2, 0], sizes = [2, 8, 8, 8], strides = [1, 1, 1, 1]} : vector<2x10x10x8xf32> to vector<2x8x8x8xf32>
    %73 = vector.extract_strided_slice %66 {offsets = [0, 2, 0, 0], sizes = [2, 8, 8, 8], strides = [1, 1, 1, 1]} : vector<2x10x10x8xf32> to vector<2x8x8x8xf32>
    %74 = vector.extract_strided_slice %66 {offsets = [0, 2, 1, 0], sizes = [2, 8, 8, 8], strides = [1, 1, 1, 1]} : vector<2x10x10x8xf32> to vector<2x8x8x8xf32>
    %75 = vector.extract_strided_slice %66 {offsets = [0, 2, 2, 0], sizes = [2, 8, 8, 8], strides = [1, 1, 1, 1]} : vector<2x10x10x8xf32> to vector<2x8x8x8xf32>
    %76 = tpu.concatenate %67, %68, %69, %70, %71, %72, %73, %74, %75 in 3 : vector<2x8x8x8xf32>, vector<2x8x8x8xf32>, vector<2x8x8x8xf32>, vector<2x8x8x8xf32>, vector<2x8x8x8xf32>, vector<2x8x8x8xf32>, vector<2x8x8x8xf32>, vector<2x8x8x8xf32>, vector<2x8x8x8xf32> -> vector<2x8x8x72xf32>
    %77 = vector.shape_cast %76 : vector<2x8x8x72xf32> to vector<128x72xf32>
    %cst_28 = arith.constant dense<0.000000e+00> : vector<128x8xf32>
    %78 = tpu.matmul %77, %62, %cst_28 {dimension_numbers = #tpu.dot_dimension_numbers<[1], [0], [0], [1], [0, 0, 1, 1], [], []>} : vector<128x72xf32>, vector<72x8xf32>, vector<128x8xf32> -> vector<128x8xf32>
    %c0_29 = arith.constant 0 : index
    %c0_30 = arith.constant 0 : index
    %79 = vector.load %arg6[%c0_29, %c0_30] : memref<1x8xf32, #tpu.memory_space<vmem>>, vector<1x8xf32>
    %c0_31 = arith.constant 0 : index
    %c0_32 = arith.constant 0 : index
    %80 = vector.load %arg7[%c0_31, %c0_32] : memref<1x8xf32, #tpu.memory_space<vmem>>, vector<1x8xf32>
    %81 = vector.shape_cast %78 : vector<128x8xf32> to vector<2x64x8xf32>
    %cst_33 = arith.constant dense<0.000000e+00> : vector<2x8xf32>
    %82 = vector.multi_reduction <add>, %81, %cst_33 [1] : vector<2x64x8xf32> to vector<2x8xf32>
    %83 = vector.shape_cast %82 : vector<2x8xf32> to vector<2x1x8xf32>
    %cst_34 = arith.constant 6.400000e+01 : f32
    %84 = vector.broadcast %cst_34 : f32 to vector<2x1x8xf32>
    %85 = arith.divf %83, %84 : vector<2x1x8xf32>
    %86 = vector.broadcast %85 : vector<2x1x8xf32> to vector<2x64x8xf32>
    %87 = arith.subf %81, %86 : vector<2x64x8xf32>
    %88 = arith.mulf %87, %87 : vector<2x64x8xf32>
    %cst_35 = arith.constant dense<0.000000e+00> : vector<2x8xf32>
    %89 = vector.multi_reduction <add>, %88, %cst_35 [1] : vector<2x64x8xf32> to vector<2x8xf32>
    %90 = vector.shape_cast %89 : vector<2x8xf32> to vector<2x1x8xf32>
    %cst_36 = arith.constant 6.400000e+01 : f32
    %91 = vector.broadcast %cst_36 : f32 to vector<2x1x8xf32>
    %92 = arith.divf %90, %91 : vector<2x1x8xf32>
    %cst_37 = arith.constant 9.99999974E-6 : f32
    %93 = vector.broadcast %cst_37 : f32 to vector<2x1x8xf32>
    %94 = arith.addf %92, %93 : vector<2x1x8xf32>
    %95 = math.rsqrt %94 : vector<2x1x8xf32>
    %96 = vector.broadcast %95 : vector<2x1x8xf32> to vector<2x64x8xf32>
    %97 = arith.mulf %87, %96 : vector<2x64x8xf32>
    %98 = vector.shape_cast %79 : vector<1x8xf32> to vector<1x1x8xf32>
    %99 = vector.broadcast %98 : vector<1x1x8xf32> to vector<2x64x8xf32>
    %100 = arith.mulf %97, %99 : vector<2x64x8xf32>
    %101 = vector.shape_cast %80 : vector<1x8xf32> to vector<1x1x8xf32>
    %102 = vector.broadcast %101 : vector<1x1x8xf32> to vector<2x64x8xf32>
    %103 = arith.addf %100, %102 : vector<2x64x8xf32>
    %104 = vector.shape_cast %103 : vector<2x64x8xf32> to vector<128x8xf32>
    %105 = vector.shape_cast %0 : vector<2x16x16x4xf32> to vector<512x4xf32>
    %c0_38 = arith.constant 0 : index
    %c0_39 = arith.constant 0 : index
    %106 = vector.load %arg8[%c0_38, %c0_39] : memref<4x8xf32, #tpu.memory_space<vmem>>, vector<4x8xf32>
    %cst_40 = arith.constant dense<0.000000e+00> : vector<512x8xf32>
    %107 = tpu.matmul %105, %106, %cst_40 {dimension_numbers = #tpu.dot_dimension_numbers<[1], [0], [0], [1], [0, 0, 1, 1], [], []>} : vector<512x4xf32>, vector<4x8xf32>, vector<512x8xf32> -> vector<512x8xf32>
    %108 = vector.shape_cast %107 : vector<512x8xf32> to vector<2x8x2x16x8xf32>
    %109 = vector.extract_strided_slice %108 {offsets = [0, 0, 0, 0, 0], sizes = [2, 8, 1, 16, 8], strides = [1, 1, 1, 1, 1]} : vector<2x8x2x16x8xf32> to vector<2x8x1x16x8xf32>
    %110 = vector.shape_cast %109 : vector<2x8x1x16x8xf32> to vector<2x8x16x8xf32>
    %111 = vector.extract_strided_slice %108 {offsets = [0, 0, 1, 0, 0], sizes = [2, 8, 1, 16, 8], strides = [1, 1, 1, 1, 1]} : vector<2x8x2x16x8xf32> to vector<2x8x1x16x8xf32>
    %112 = vector.shape_cast %111 : vector<2x8x1x16x8xf32> to vector<2x8x16x8xf32>
    %113 = arith.addf %110, %112 : vector<2x8x16x8xf32>
    %cst_41 = arith.constant 5.000000e-01 : f32
    %114 = vector.broadcast %cst_41 : f32 to vector<2x8x16x8xf32>
    %115 = arith.mulf %114, %113 : vector<2x8x16x8xf32>
    %116 = vector.shape_cast %115 : vector<2x8x16x8xf32> to vector<256x8xf32>
    %c0_42 = arith.constant 0 : index
    %c0_43 = arith.constant 0 : index
    %117 = vector.load %arg12[%c0_42, %c0_43] : memref<256x8xf32, #tpu.memory_space<vmem>>, vector<256x8xf32>
    tpu.vector_store %arg12[%c0_42, %c0_43], %116 {strides = array<i32>} : memref<256x8xf32, #tpu.memory_space<vmem>>, vector<256x8xf32>,
    %c0_44 = arith.constant 0 : index
    %c0_45 = arith.constant 0 : index
    %118 = tpu.strided_load %arg12[%c0_44, %c0_45] {strides = array<i32: 2, 1>} : memref<256x8xf32, #tpu.memory_space<vmem>>, vector<128x8xf32>
    %c1_46 = arith.constant 1 : index
    %c0_47 = arith.constant 0 : index
    %119 = tpu.strided_load %arg12[%c1_46, %c0_47] {strides = array<i32: 2, 1>} : memref<256x8xf32, #tpu.memory_space<vmem>>, vector<128x8xf32>
    %120 = arith.addf %118, %119 : vector<128x8xf32>
    %cst_48 = arith.constant 5.000000e-01 : f32
    %121 = vector.broadcast %cst_48 : f32 to vector<128x8xf32>
    %122 = arith.mulf %121, %120 : vector<128x8xf32>
    %c0_49 = arith.constant 0 : index
    %c0_50 = arith.constant 0 : index
    %123 = vector.load %arg9[%c0_49, %c0_50] : memref<1x8xf32, #tpu.memory_space<vmem>>, vector<1x8xf32>
    %c0_51 = arith.constant 0 : index
    %c0_52 = arith.constant 0 : index
    %124 = vector.load %arg10[%c0_51, %c0_52] : memref<1x8xf32, #tpu.memory_space<vmem>>, vector<1x8xf32>
    %125 = vector.shape_cast %122 : vector<128x8xf32> to vector<2x64x8xf32>
    %cst_53 = arith.constant dense<0.000000e+00> : vector<2x8xf32>
    %126 = vector.multi_reduction <add>, %125, %cst_53 [1] : vector<2x64x8xf32> to vector<2x8xf32>
    %127 = vector.shape_cast %126 : vector<2x8xf32> to vector<2x1x8xf32>
    %cst_54 = arith.constant 6.400000e+01 : f32
    %128 = vector.broadcast %cst_54 : f32 to vector<2x1x8xf32>
    %129 = arith.divf %127, %128 : vector<2x1x8xf32>
    %130 = vector.broadcast %129 : vector<2x1x8xf32> to vector<2x64x8xf32>
    %131 = arith.subf %125, %130 : vector<2x64x8xf32>
    %132 = arith.mulf %131, %131 : vector<2x64x8xf32>
    %cst_55 = arith.constant dense<0.000000e+00> : vector<2x8xf32>
    %133 = vector.multi_reduction <add>, %132, %cst_55 [1] : vector<2x64x8xf32> to vector<2x8xf32>
    %134 = vector.shape_cast %133 : vector<2x8xf32> to vector<2x1x8xf32>
    %cst_56 = arith.constant 6.400000e+01 : f32
    %135 = vector.broadcast %cst_56 : f32 to vector<2x1x8xf32>
    %136 = arith.divf %134, %135 : vector<2x1x8xf32>
    %cst_57 = arith.constant 9.99999974E-6 : f32
    %137 = vector.broadcast %cst_57 : f32 to vector<2x1x8xf32>
    %138 = arith.addf %136, %137 : vector<2x1x8xf32>
    %139 = math.rsqrt %138 : vector<2x1x8xf32>
    %140 = vector.broadcast %139 : vector<2x1x8xf32> to vector<2x64x8xf32>
    %141 = arith.mulf %131, %140 : vector<2x64x8xf32>
    %142 = vector.shape_cast %123 : vector<1x8xf32> to vector<1x1x8xf32>
    %143 = vector.broadcast %142 : vector<1x1x8xf32> to vector<2x64x8xf32>
    %144 = arith.mulf %141, %143 : vector<2x64x8xf32>
    %145 = vector.shape_cast %124 : vector<1x8xf32> to vector<1x1x8xf32>
    %146 = vector.broadcast %145 : vector<1x1x8xf32> to vector<2x64x8xf32>
    %147 = arith.addf %144, %146 : vector<2x64x8xf32>
    %148 = vector.shape_cast %147 : vector<2x64x8xf32> to vector<128x8xf32>
    %149 = arith.addf %104, %148 : vector<128x8xf32>
    %cst_58 = arith.constant 0.000000e+00 : f32
    %150 = vector.broadcast %cst_58 : f32 to vector<128x8xf32>
    %151 = arith.maximumf %149, %150 : vector<128x8xf32>
    %152 = vector.shape_cast %151 : vector<128x8xf32> to vector<2x64x8xf32>
    %c0_59 = arith.constant 0 : index
    %c0_60 = arith.constant 0 : index
    %c0_61 = arith.constant 0 : index
    %153 = vector.load %arg11[%c0_59, %c0_60, %c0_61] : memref<2x64x8xf32, #tpu.memory_space<vmem>>, vector<2x64x8xf32>
    tpu.vector_store %arg11[%c0_59, %c0_60, %c0_61], %152 {strides = array<i32>} : memref<2x64x8xf32, #tpu.memory_space<vmem>>, vector<2x64x8xf32>,
    return
  }
  func.func @transform_0(%arg0: i32) -> (i32, i32, i32, i32) {
    %c0_i32 = arith.constant 0 : i32
    %c0_i32_0 = arith.constant 0 : i32
    %c0_i32_1 = arith.constant 0 : i32
    %c0_i32_2 = arith.constant 0 : i32
    return %arg0, %c0_i32, %c0_i32_0, %c0_i32_1 : i32, i32, i32, i32
  }
  func.func @transform_1(%arg0: i32) -> (i32, i32) {
    %c0_i32 = arith.constant 0 : i32
    %c0_i32_0 = arith.constant 0 : i32
    %c0_i32_1 = arith.constant 0 : i32
    return %c0_i32, %c0_i32_0 : i32, i32
  }
  func.func @transform_2(%arg0: i32) -> (i32, i32) {
    %c0_i32 = arith.constant 0 : i32
    %c0_i32_0 = arith.constant 0 : i32
    %c0_i32_1 = arith.constant 0 : i32
    return %c0_i32, %c0_i32_0 : i32, i32
  }
  func.func @transform_3(%arg0: i32) -> (i32, i32) {
    %c0_i32 = arith.constant 0 : i32
    %c0_i32_0 = arith.constant 0 : i32
    %c0_i32_1 = arith.constant 0 : i32
    return %c0_i32, %c0_i32_0 : i32, i32
  }
  func.func @transform_4(%arg0: i32) -> (i32, i32) {
    %c0_i32 = arith.constant 0 : i32
    %c0_i32_0 = arith.constant 0 : i32
    %c0_i32_1 = arith.constant 0 : i32
    return %c0_i32, %c0_i32_0 : i32, i32
  }
  func.func @transform_5(%arg0: i32) -> (i32, i32) {
    %c0_i32 = arith.constant 0 : i32
    %c0_i32_0 = arith.constant 0 : i32
    %c0_i32_1 = arith.constant 0 : i32
    return %c0_i32, %c0_i32_0 : i32, i32
  }
  func.func @transform_6(%arg0: i32) -> (i32, i32) {
    %c0_i32 = arith.constant 0 : i32
    %c0_i32_0 = arith.constant 0 : i32
    %c0_i32_1 = arith.constant 0 : i32
    return %c0_i32, %c0_i32_0 : i32, i32
  }
  func.func @transform_7(%arg0: i32) -> (i32, i32) {
    %c0_i32 = arith.constant 0 : i32
    %c0_i32_0 = arith.constant 0 : i32
    %c0_i32_1 = arith.constant 0 : i32
    return %c0_i32, %c0_i32_0 : i32, i32
  }
  func.func @transform_8(%arg0: i32) -> (i32, i32) {
    %c0_i32 = arith.constant 0 : i32
    %c0_i32_0 = arith.constant 0 : i32
    %c0_i32_1 = arith.constant 0 : i32
    return %c0_i32, %c0_i32_0 : i32, i32
  }
  func.func @transform_9(%arg0: i32) -> (i32, i32) {
    %c0_i32 = arith.constant 0 : i32
    %c0_i32_0 = arith.constant 0 : i32
    %c0_i32_1 = arith.constant 0 : i32
    return %c0_i32, %c0_i32_0 : i32, i32
  }
  func.func @transform_10(%arg0: i32) -> (i32, i32, i32) {
    %c0_i32 = arith.constant 0 : i32
    %c0_i32_0 = arith.constant 0 : i32
    %c0_i32_1 = arith.constant 0 : i32
    return %arg0, %c0_i32, %c0_i32_0 : i32, i32, i32
  }
}

</mosaic_0001>

<llo_original>
// kernel: tpu_custom_call.1
$region0: #{tpu_custom_call.1}
  #allocation0 [shape = 'u32[]', space=smem, size = 0x4, offset = 0x4, fixed_abs, tag = 'smem constant byte address 0x4 - core index']
  #allocation1 [shape = 'u32[144,128]{1,0:T(1,128)}', space=vmem, size = 0x12000, scoped, tag = 'internal scratch']
  #allocation2 [shape = 'f32[256,8]{1,0:T(8,128)}', space=vmem, size = 0x20000, scoped, tag = 'scratch operand']
  %s0 = inlined_call_operand.vmem [shape: f32[2,16,16,4], index: 0, kind: input, shape index: {}]
  %s1 = inlined_call_operand.vmem [shape: f32[36,8], index: 1, kind: input, shape index: {}]
  %s2 = inlined_call_operand.vmem [shape: f32[1,8], index: 2, kind: input, shape index: {}]
  %s3 = inlined_call_operand.vmem [shape: f32[1,8], index: 3, kind: input, shape index: {}]
  %s4 = inlined_call_operand.vmem [shape: f32[72,8], index: 4, kind: input, shape index: {}]
  %s5 = inlined_call_operand.vmem [shape: f32[1,8], index: 5, kind: input, shape index: {}]
  %s6 = inlined_call_operand.vmem [shape: f32[1,8], index: 6, kind: input, shape index: {}]
  %s7 = inlined_call_operand.vmem [shape: f32[4,8], index: 7, kind: input, shape index: {}]
  %s8 = inlined_call_operand.vmem [shape: f32[1,8], index: 8, kind: input, shape index: {}]
  %s9 = inlined_call_operand.vmem [shape: f32[1,8], index: 9, kind: input, shape index: {}]
  %s10 = inlined_call_operand.vmem [shape: f32[2,64,8], index: 10, kind: output, shape index: {}]
  %s11 = sld [smem:[#allocation0]]
  $region50: #{tpu_custom_call.1} parent=0
    _
  %s13 = ssub.s32 1, %s11
  %s14 = scalar_select 0, %s13, %s11
  // Predicated region
  $region2: #{tpu_custom_call.1} parent=0 // pred_check
    _
  $region3: #{tpu_custom_call.1} parent=0 // pred_check_branch
    %16 = sbr.rel (0) target = $region5
  $region4: #{tpu_custom_call.1} parent=0 // pred_region
    _
  $region5: #{tpu_custom_call.1} parent=0 // pred_fallthru
    _
  // Predicated region
  $region6: #{tpu_custom_call.1} parent=0 // pred_check
    _
  $region7: #{tpu_custom_call.1} parent=0 // pred_check_branch
    %18 = sbr.rel (0) target = $region9
  $region8: #{tpu_custom_call.1} parent=0 // pred_region
    _
  $region9: #{tpu_custom_call.1} parent=0 // pred_fallthru
    _
  // Predicated region
  $region10: #{tpu_custom_call.1} parent=0 // pred_check
    _
  $region11: #{tpu_custom_call.1} parent=0 // pred_check_branch
    %20 = sbr.rel (0) target = $region13
  $region12: #{tpu_custom_call.1} parent=0 // pred_region
    _
  $region13: #{tpu_custom_call.1} parent=0 // pred_fallthru
    _
  // Predicated region
  $region14: #{tpu_custom_call.1} parent=0 // pred_check
    _
  $region15: #{tpu_custom_call.1} parent=0 // pred_check_branch
    %22 = sbr.rel (0) target = $region17
  $region16: #{tpu_custom_call.1} parent=0 // pred_region
    _
  $region17: #{tpu_custom_call.1} parent=0 // pred_fallthru
    _
  // Predicated region
  $region18: #{tpu_custom_call.1} parent=0 // pred_check
    _
  $region19: #{tpu_custom_call.1} parent=0 // pred_check_branch
    %24 = sbr.rel (0) target = $region21
  $region20: #{tpu_custom_call.1} parent=0 // pred_region
    _
  $region21: #{tpu_custom_call.1} parent=0 // pred_fallthru
    _
  // Predicated region
  $region22: #{tpu_custom_call.1} parent=0 // pred_check
    _
  $region23: #{tpu_custom_call.1} parent=0 // pred_check_branch
    %26 = sbr.rel (0) target = $region25
  $region24: #{tpu_custom_call.1} parent=0 // pred_region
    _
  $region25: #{tpu_custom_call.1} parent=0 // pred_fallthru
    _
  // Predicated region
  $region26: #{tpu_custom_call.1} parent=0 // pred_check
    _
  $region27: #{tpu_custom_call.1} parent=0 // pred_check_branch
    %28 = sbr.rel (0) target = $region29
  $region28: #{tpu_custom_call.1} parent=0 // pred_region
    _
  $region29: #{tpu_custom_call.1} parent=0 // pred_fallthru
    _
  // Predicated region
  $region30: #{tpu_custom_call.1} parent=0 // pred_check
    _
  $region31: #{tpu_custom_call.1} parent=0 // pred_check_branch
    %30 = sbr.rel (0) target = $region33
  $region32: #{tpu_custom_call.1} parent=0 // pred_region
    _
  $region33: #{tpu_custom_call.1} parent=0 // pred_fallthru
    _
  // Predicated region
  $region34: #{tpu_custom_call.1} parent=0 // pred_check
    _
  $region35: #{tpu_custom_call.1} parent=0 // pred_check_branch
    %32 = sbr.rel (0) target = $region37
  $region36: #{tpu_custom_call.1} parent=0 // pred_region
    _
  $region37: #{tpu_custom_call.1} parent=0 // pred_fallthru
    _
  // Predicated region
  $region38: #{tpu_custom_call.1} parent=0 // pred_check
    _
  $region39: #{tpu_custom_call.1} parent=0 // pred_check_branch
    %34 = sbr.rel (0) target = $region41
  $region40: #{tpu_custom_call.1} parent=0 // pred_region
    _
  $region41: #{tpu_custom_call.1} parent=0 // pred_fallthru
    _
  %v35 = vld [vmem:[%s0] sm:$0xff]
  %v36 = vld [vmem:[%s0 + $0x8] sm:$0xff]
  %v37 = vld [vmem:[%s0 + $0x10] sm:$0xff]
  %v38 = vld [vmem:[%s0 + $0x18] sm:$0xff]
  %v39 = vld [vmem:[%s0 + $0x20] sm:$0xff]
  %v40 = vld [vmem:[%s0 + $0x28] sm:$0xff]
  %v41 = vld [vmem:[%s0 + $0x30] sm:$0xff]
  %v42 = vld [vmem:[%s0 + $0x38] sm:$0xff]
  %v43 = vld [vmem:[%s0 + $0x40] sm:$0xff]
  %v44 = vld [vmem:[%s0 + $0x48] sm:$0xff]
  %v45 = vld [vmem:[%s0 + $0x50] sm:$0xff]
  %v46 = vld [vmem:[%s0 + $0x58] sm:$0xff]
  %v47 = vld [vmem:[%s0 + $0x60] sm:$0xff]
  %v48 = vld [vmem:[%s0 + $0x68] sm:$0xff]
  %v49 = vld [vmem:[%s0 + $0x70] sm:$0xff]
  %v50 = vld [vmem:[%s0 + $0x78] sm:$0xff]
  %v51 = vld [vmem:[%s0 + $0x80] sm:$0xff]
  %v52 = vld [vmem:[%s0 + $0x88] sm:$0xff]
  %v53 = vld [vmem:[%s0 + $0x90] sm:$0xff]
  %v54 = vld [vmem:[%s0 + $0x98] sm:$0xff]
  %v55 = vld [vmem:[%s0 + $0xa0] sm:$0xff]
  %v56 = vld [vmem:[%s0 + $0xa8] sm:$0xff]
  %v57 = vld [vmem:[%s0 + $0xb0] sm:$0xff]
  %v58 = vld [vmem:[%s0 + $0xb8] sm:$0xff]
  %v59 = vld [vmem:[%s0 + $0xc0] sm:$0xff]
  %v60 = vld [vmem:[%s0 + $0xc8] sm:$0xff]
  %v61 = vld [vmem:[%s0 + $0xd0] sm:$0xff]
  %v62 = vld [vmem:[%s0 + $0xd8] sm:$0xff]
  %v63 = vld [vmem:[%s0 + $0xe0] sm:$0xff]
  %v64 = vld [vmem:[%s0 + $0xe8] sm:$0xff]
  %v65 = vld [vmem:[%s0 + $0xf0] sm:$0xff]
  %v66 = vld [vmem:[%s0 + $0xf8] sm:$0xff]
  %v67 = vld [vmem:[%s0 + $0x100] sm:$0xff]
  %v68 = vld [vmem:[%s0 + $0x108] sm:$0xff]
  %v69 = vld [vmem:[%s0 + $0x110] sm:$0xff]
  %v70 = vld [vmem:[%s0 + $0x118] sm:$0xff]
  %v71 = vld [vmem:[%s0 + $0x120] sm:$0xff]
  %v72 = vld [vmem:[%s0 + $0x128] sm:$0xff]
  %v73 = vld [vmem:[%s0 + $0x130] sm:$0xff]
  %v74 = vld [vmem:[%s0 + $0x138] sm:$0xff]
  %v75 = vld [vmem:[%s0 + $0x140] sm:$0xff]
  %v76 = vld [vmem:[%s0 + $0x148] sm:$0xff]
  %v77 = vld [vmem:[%s0 + $0x150] sm:$0xff]
  %v78 = vld [vmem:[%s0 + $0x158] sm:$0xff]
  %v79 = vld [vmem:[%s0 + $0x160] sm:$0xff]
  %v80 = vld [vmem:[%s0 + $0x168] sm:$0xff]
  %v81 = vld [vmem:[%s0 + $0x170] sm:$0xff]
  %v82 = vld [vmem:[%s0 + $0x178] sm:$0xff]
  %v83 = vld [vmem:[%s0 + $0x180] sm:$0xff]
  %v84 = vld [vmem:[%s0 + $0x188] sm:$0xff]
  %v85 = vld [vmem:[%s0 + $0x190] sm:$0xff]
  %v86 = vld [vmem:[%s0 + $0x198] sm:$0xff]
  %v87 = vld [vmem:[%s0 + $0x1a0] sm:$0xff]
  %v88 = vld [vmem:[%s0 + $0x1a8] sm:$0xff]
  %v89 = vld [vmem:[%s0 + $0x1b0] sm:$0xff]
  %v90 = vld [vmem:[%s0 + $0x1b8] sm:$0xff]
  %v91 = vld [vmem:[%s0 + $0x1c0] sm:$0xff]
  %v92 = vld [vmem:[%s0 + $0x1c8] sm:$0xff]
  %v93 = vld [vmem:[%s0 + $0x1d0] sm:$0xff]
  %v94 = vld [vmem:[%s0 + $0x1d8] sm:$0xff]
  %v95 = vld [vmem:[%s0 + $0x1e0] sm:$0xff]
  %v96 = vld [vmem:[%s0 + $0x1e8] sm:$0xff]
  %v97 = vld [vmem:[%s0 + $0x1f0] sm:$0xff]
  %v98 = vld [vmem:[%s0 + $0x1f8] sm:$0xff]
  %v99 = vld [vmem:[%s1] sm:$0xff]
  %v100 = vld [vmem:[%s1 + $0x8] sm:$0xff]
  %v101 = vld [vmem:[%s1 + $0x10] sm:$0xff]
  %v102 = vld [vmem:[%s1 + $0x18] sm:$0xff]
  %v103 = vld [vmem:[%s1 + $0x20] sm:$0xf]
  %vm169 = vcmask 1040384
  %v170 = vrot.slane 0.0, 7
  %v171 = vsel %vm169, %v170, %v170
  %v172 = vrot.slane %v35, 7
  %v173 = vrot.slane %v36, 7
  %v174 = vsel %vm169, %v172, %v173
  %v175 = vrot.slane %v37, 7
  %v176 = vrot.slane %v38, 7
  %v177 = vsel %vm169, %v175, %v176
  %v178 = vrot.slane %v39, 7
  %v179 = vrot.slane %v40, 7
  %v180 = vsel %vm169, %v178, %v179
  %v181 = vrot.slane %v41, 7
  %v182 = vrot.slane %v42, 7
  %v183 = vsel %vm169, %v181, %v182
  %v184 = vrot.slane %v43, 7
  %v185 = vrot.slane %v44, 7
  %v186 = vsel %vm169, %v184, %v185
  %v187 = vrot.slane %v45, 7
  %v188 = vrot.slane %v46, 7
  %v189 = vsel %vm169, %v187, %v188
  %v190 = vrot.slane %v47, 7
  %v191 = vrot.slane %v48, 7
  %v192 = vsel %vm169, %v190, %v191
  %v193 = vrot.slane %v49, 7
  %v194 = vrot.slane %v50, 7
  %v195 = vsel %vm169, %v193, %v194
  %v196 = vrot.slane %v51, 7
  %v197 = vrot.slane %v52, 7
  %v198 = vsel %vm169, %v196, %v197
  %v199 = vrot.slane %v53, 7
  %v200 = vrot.slane %v54, 7
  %v201 = vsel %vm169, %v199, %v200
  %v202 = vrot.slane %v55, 7
  %v203 = vrot.slane %v56, 7
  %v204 = vsel %vm169, %v202, %v203
  %v205 = vrot.slane %v57, 7
  %v206 = vrot.slane %v58, 7
  %v207 = vsel %vm169, %v205, %v206
  %v208 = vrot.slane %v59, 7
  %v209 = vrot.slane %v60, 7
  %v210 = vsel %vm169, %v208, %v209
  %v211 = vrot.slane %v61, 7
  %v212 = vrot.slane %v62, 7
  %v213 = vsel %vm169, %v211, %v212
  %v214 = vrot.slane %v63, 7
  %v215 = vrot.slane %v64, 7
  %v216 = vsel %vm169, %v214, %v215
  %v217 = vrot.slane %v65, 7
  %v218 = vrot.slane %v66, 7
  %v219 = vsel %vm169, %v217, %v218
  %v220 = vrot.slane %v67, 7
  %v221 = vrot.slane %v68, 7
  %v222 = vsel %vm169, %v220, %v221
  %v223 = vrot.slane %v69, 7
  %v224 = vrot.slane %v70, 7
  %v225 = vsel %vm169, %v223, %v224
  %v226 = vrot.slane %v71, 7
  %v227 = vrot.slane %v72, 7
  %v228 = vsel %vm169, %v226, %v227
  %v229 = vrot.slane %v73, 7
  %v230 = vrot.slane %v74, 7
  %v231 = vsel %vm169, %v229, %v230
  %v232 = vrot.slane %v75, 7
  %v233 = vrot.slane %v76, 7
  %v234 = vsel %vm169, %v232, %v233
  %v235 = vrot.slane %v77, 7
  %v236 = vrot.slane %v78, 7
  %v237 = vsel %vm169, %v235, %v236
  %v238 = vrot.slane %v79, 7
  %v239 = vrot.slane %v80, 7
  %v240 = vsel %vm169, %v238, %v239
  %v241 = vrot.slane %v81, 7
  %v242 = vrot.slane %v82, 7
  %v243 = vsel %vm169, %v241, %v242
  %v244 = vrot.slane %v83, 7
  %v245 = vrot.slane %v84, 7
  %v246 = vsel %vm169, %v244, %v245
  %v247 = vrot.slane %v85, 7
  %v248 = vrot.slane %v86, 7
  %v249 = vsel %vm169, %v247, %v248
  %v250 = vrot.slane %v87, 7
  %v251 = vrot.slane %v88, 7
  %v252 = vsel %vm169, %v250, %v251
  %v253 = vrot.slane %v89, 7
  %v254 = vrot.slane %v90, 7
  %v255 = vsel %vm169, %v253, %v254
  %v256 = vrot.slane %v91, 7
  %v257 = vrot.slane %v92, 7
  %v258 = vsel %vm169, %v256, %v257
  %v259 = vrot.slane %v93, 7
  %v260 = vrot.slane %v94, 7
  %v261 = vsel %vm169, %v259, %v260
  %v262 = vrot.slane %v95, 7
  %v263 = vrot.slane %v96, 7
  %v264 = vsel %vm169, %v262, %v263
  %v265 = vrot.slane %v97, 7
  %v266 = vrot.slane %v98, 7
  %v267 = vsel %vm169, %v265, %v266
  %v364 = vsel %vm169, 0.0, %v170
  %v365 = vsel %vm169, 0.0, %v172
  %v366 = vsel %vm169, 0.0, %v175
  %v367 = vsel %vm169, 0.0, %v178
  %v368 = vsel %vm169, 0.0, %v181
  %v369 = vsel %vm169, 0.0, %v184
  %v370 = vsel %vm169, 0.0, %v187
  %v371 = vsel %vm169, 0.0, %v190
  %v372 = vsel %vm169, 0.0, %v193
  %v373 = vsel %vm169, 0.0, %v196
  %v374 = vsel %vm169, 0.0, %v199
  %v375 = vsel %vm169, 0.0, %v202
  %v376 = vsel %vm169, 0.0, %v205
  %v377 = vsel %vm169, 0.0, %v208
  %v378 = vsel %vm169, 0.0, %v211
  %v379 = vsel %vm169, 0.0, %v214
  %v380 = vsel %vm169, 0.0, %v217
  %v381 = vsel %vm169, 0.0, %v220
  %v382 = vsel %vm169, 0.0, %v223
  %v383 = vsel %vm169, 0.0, %v226
  %v384 = vsel %vm169, 0.0, %v229
  %v385 = vsel %vm169, 0.0, %v232
  %v386 = vsel %vm169, 0.0, %v235
  %v387 = vsel %vm169, 0.0, %v238
  %v388 = vsel %vm169, 0.0, %v241
  %v389 = vsel %vm169, 0.0, %v244
  %v390 = vsel %vm169, 0.0, %v247
  %v391 = vsel %vm169, 0.0, %v250
  %v392 = vsel %vm169, 0.0, %v253
  %v393 = vsel %vm169, 0.0, %v256
  %v394 = vsel %vm169, 0.0, %v259
  %v395 = vsel %vm169, 0.0, %v262
  %v396 = vsel %vm169, 0.0, %v265
  %v397 = vsel %vm169, %v170, 0.0
  %v398 = vsel %vm169, %v173, 0.0
  %v399 = vsel %vm169, %v176, 0.0
  %v400 = vsel %vm169, %v179, 0.0
  %v401 = vsel %vm169, %v182, 0.0
  %v402 = vsel %vm169, %v185, 0.0
  %v403 = vsel %vm169, %v188, 0.0
  %v404 = vsel %vm169, %v191, 0.0
  %v405 = vsel %vm169, %v194, 0.0
  %v406 = vsel %vm169, %v197, 0.0
  %v407 = vsel %vm169, %v200, 0.0
  %v408 = vsel %vm169, %v203, 0.0
  %v409 = vsel %vm169, %v206, 0.0
  %v410 = vsel %vm169, %v209, 0.0
  %v411 = vsel %vm169, %v212, 0.0
  %v412 = vsel %vm169, %v215, 0.0
  %v413 = vsel %vm169, %v218, 0.0
  %v414 = vsel %vm169, %v221, 0.0
  %v415 = vsel %vm169, %v224, 0.0
  %v416 = vsel %vm169, %v227, 0.0
  %v417 = vsel %vm169, %v230, 0.0
  %v418 = vsel %vm169, %v233, 0.0
  %v419 = vsel %vm169, %v236, 0.0
  %v420 = vsel %vm169, %v239, 0.0
  %v421 = vsel %vm169, %v242, 0.0
  %v422 = vsel %vm169, %v245, 0.0
  %v423 = vsel %vm169, %v248, 0.0
  %v424 = vsel %vm169, %v251, 0.0
  %v425 = vsel %vm169, %v254, 0.0
  %v426 = vsel %vm169, %v257, 0.0
  %v427 = vsel %vm169, %v260, 0.0
  %v428 = vsel %vm169, %v263, 0.0
  %v429 = vsel %vm169, %v266, 0.0
  %vm492 = vcmask 1046528
  %v493 = vrot.slane %v364, 1
  %v494 = vrot.slane %v171, 1
  %v495 = vsel %vm492, %v493, %v494
  %v496 = vrot.slane %v397, 1
  %v497 = vsel %vm492, %v494, %v496
  %v498 = vrot.slane %v365, 1
  %v499 = vrot.slane %v174, 1
  %v500 = vsel %vm492, %v498, %v499
  %v501 = vrot.slane %v398, 1
  %v502 = vsel %vm492, %v499, %v501
  %v503 = vrot.slane %v366, 1
  %v504 = vrot.slane %v177, 1
  %v505 = vsel %vm492, %v503, %v504
  %v506 = vrot.slane %v399, 1
  %v507 = vsel %vm492, %v504, %v506
  %v508 = vrot.slane %v367, 1
  %v509 = vrot.slane %v180, 1
  %v510 = vsel %vm492, %v508, %v509
  %v511 = vrot.slane %v400, 1
  %v512 = vsel %vm492, %v509, %v511
  %v513 = vrot.slane %v368, 1
  %v514 = vrot.slane %v183, 1
  %v515 = vsel %vm492, %v513, %v514
  %v516 = vrot.slane %v401, 1
  %v517 = vsel %vm492, %v514, %v516
  %v518 = vrot.slane %v369, 1
  %v519 = vrot.slane %v186, 1
  %v520 = vsel %vm492, %v518, %v519
  %v521 = vrot.slane %v402, 1
  %v522 = vsel %vm492, %v519, %v521
  %v523 = vrot.slane %v370, 1
  %v524 = vrot.slane %v189, 1
  %v525 = vsel %vm492, %v523, %v524
  %v526 = vrot.slane %v403, 1
  %v527 = vsel %vm492, %v524, %v526
  %v528 = vrot.slane %v371, 1
  %v529 = vrot.slane %v192, 1
  %v530 = vsel %vm492, %v528, %v529
  %v531 = vrot.slane %v404, 1
  %v532 = vsel %vm492, %v529, %v531
  %v533 = vrot.slane %v372, 1
  %v534 = vrot.slane %v195, 1
  %v535 = vsel %vm492, %v533, %v534
  %v536 = vrot.slane %v405, 1
  %v537 = vsel %vm492, %v534, %v536
  %v538 = vrot.slane %v373, 1
  %v539 = vrot.slane %v198, 1
  %v540 = vsel %vm492, %v538, %v539
  %v541 = vrot.slane %v406, 1
  %v542 = vsel %vm492, %v539, %v541
  %v543 = vrot.slane %v374, 1
  %v544 = vrot.slane %v201, 1
  %v545 = vsel %vm492, %v543, %v544
  %v546 = vrot.slane %v407, 1
  %v547 = vsel %vm492, %v544, %v546
  %v548 = vrot.slane %v375, 1
  %v549 = vrot.slane %v204, 1
  %v550 = vsel %vm492, %v548, %v549
  %v551 = vrot.slane %v408, 1
  %v552 = vsel %vm492, %v549, %v551
  %v553 = vrot.slane %v376, 1
  %v554 = vrot.slane %v207, 1
  %v555 = vsel %vm492, %v553, %v554
  %v556 = vrot.slane %v409, 1
  %v557 = vsel %vm492, %v554, %v556
  %v558 = vrot.slane %v377, 1
  %v559 = vrot.slane %v210, 1
  %v560 = vsel %vm492, %v558, %v559
  %v561 = vrot.slane %v410, 1
  %v562 = vsel %vm492, %v559, %v561
  %v563 = vrot.slane %v378, 1
  %v564 = vrot.slane %v213, 1
  %v565 = vsel %vm492, %v563, %v564
  %v566 = vrot.slane %v411, 1
  %v567 = vsel %vm492, %v564, %v566
  %v568 = vrot.slane %v379, 1
  %v569 = vrot.slane %v216, 1
  %v570 = vsel %vm492, %v568, %v569
  %v571 = vrot.slane %v412, 1
  %v572 = vsel %vm492, %v569, %v571
  %v573 = vrot.slane %v381, 1
  %v574 = vrot.slane %v222, 1
  %v575 = vsel %vm492, %v573, %v574
  %v576 = vrot.slane %v414, 1
  %v577 = vsel %vm492, %v574, %v576
  %v578 = vrot.slane %v382, 1
  %v579 = vrot.slane %v225, 1
  %v580 = vsel %vm492, %v578, %v579
  %v581 = vrot.slane %v415, 1
  %v582 = vsel %vm492, %v579, %v581
  %v583 = vrot.slane %v383, 1
  %v584 = vrot.slane %v228, 1
  %v585 = vsel %vm492, %v583, %v584
  %v586 = vrot.slane %v416, 1
  %v587 = vsel %vm492, %v584, %v586
  %v588 = vrot.slane %v384, 1
  %v589 = vrot.slane %v231, 1
  %v590 = vsel %vm492, %v588, %v589
  %v591 = vrot.slane %v417, 1
  %v592 = vsel %vm492, %v589, %v591
  %v593 = vrot.slane %v385, 1
  %v594 = vrot.slane %v234, 1
  %v595 = vsel %vm492, %v593, %v594
  %v596 = vrot.slane %v418, 1
  %v597 = vsel %vm492, %v594, %v596
  %v598 = vrot.slane %v386, 1
  %v599 = vrot.slane %v237, 1
  %v600 = vsel %vm492, %v598, %v599
  %v601 = vrot.slane %v419, 1
  %v602 = vsel %vm492, %v599, %v601
  %v603 = vrot.slane %v387, 1
  %v604 = vrot.slane %v240, 1
  %v605 = vsel %vm492, %v603, %v604
  %v606 = vrot.slane %v420, 1
  %v607 = vsel %vm492, %v604, %v606
  %v608 = vrot.slane %v388, 1
  %v609 = vrot.slane %v243, 1
  %v610 = vsel %vm492, %v608, %v609
  %v611 = vrot.slane %v421, 1
  %v612 = vsel %vm492, %v609, %v611
  %v613 = vrot.slane %v389, 1
  %v614 = vrot.slane %v246, 1
  %v615 = vsel %vm492, %v613, %v614
  %v616 = vrot.slane %v422, 1
  %v617 = vsel %vm492, %v614, %v616
  %v618 = vrot.slane %v390, 1
  %v619 = vrot.slane %v249, 1
  %v620 = vsel %vm492, %v618, %v619
  %v621 = vrot.slane %v423, 1
  %v622 = vsel %vm492, %v619, %v621
  %v623 = vrot.slane %v391, 1
  %v624 = vrot.slane %v252, 1
  %v625 = vsel %vm492, %v623, %v624
  %v626 = vrot.slane %v424, 1
  %v627 = vsel %vm492, %v624, %v626
  %v628 = vrot.slane %v392, 1
  %v629 = vrot.slane %v255, 1
  %v630 = vsel %vm492, %v628, %v629
  %v631 = vrot.slane %v425, 1
  %v632 = vsel %vm492, %v629, %v631
  %v633 = vrot.slane %v393, 1
  %v634 = vrot.slane %v258, 1
  %v635 = vsel %vm492, %v633, %v634
  %v636 = vrot.slane %v426, 1
  %v637 = vsel %vm492, %v634, %v636
  %v638 = vrot.slane %v394, 1
  %v639 = vrot.slane %v261, 1
  %v640 = vsel %vm492, %v638, %v639
  %v641 = vrot.slane %v427, 1
  %v642 = vsel %vm492, %v639, %v641
  %v643 = vrot.slane %v395, 1
  %v644 = vrot.slane %v264, 1
  %v645 = vsel %vm492, %v643, %v644
  %v646 = vrot.slane %v428, 1
  %v647 = vsel %vm492, %v644, %v646
  %648 = vrot.lane.b32.xlu0 %v495, 4
  %v649 = vpop.permute.xlu0 %648
  %650 = vrot.lane.b32.xlu0 %v497, 4
  %v651 = vpop.permute.xlu0 %650
  %652 = vrot.lane.b32.xlu0 %v500, 4
  %v653 = vpop.permute.xlu0 %652
  %654 = vrot.lane.b32.xlu0 %v502, 4
  %v655 = vpop.permute.xlu0 %654
  %656 = vrot.lane.b32.xlu0 %v505, 4
  %v657 = vpop.permute.xlu0 %656
  %658 = vrot.lane.b32.xlu0 %v507, 4
  %v659 = vpop.permute.xlu0 %658
  %660 = vrot.lane.b32.xlu0 %v510, 4
  %v661 = vpop.permute.xlu0 %660
  %662 = vrot.lane.b32.xlu0 %v512, 4
  %v663 = vpop.permute.xlu0 %662
  %664 = vrot.lane.b32.xlu0 %v515, 4
  %v665 = vpop.permute.xlu0 %664
  %666 = vrot.lane.b32.xlu0 %v517, 4
  %v667 = vpop.permute.xlu0 %666
  %668 = vrot.lane.b32.xlu0 %v520, 4
  %v669 = vpop.permute.xlu0 %668
  %670 = vrot.lane.b32.xlu0 %v522, 4
  %v671 = vpop.permute.xlu0 %670
  %672 = vrot.lane.b32.xlu0 %v525, 4
  %v673 = vpop.permute.xlu0 %672
  %674 = vrot.lane.b32.xlu0 %v527, 4
  %v675 = vpop.permute.xlu0 %674
  %676 = vrot.lane.b32.xlu0 %v530, 4
  %v677 = vpop.permute.xlu0 %676
  %678 = vrot.lane.b32.xlu0 %v532, 4
  %v679 = vpop.permute.xlu0 %678
  %680 = vrot.lane.b32.xlu0 %v535, 4
  %v681 = vpop.permute.xlu0 %680
  %682 = vrot.lane.b32.xlu0 %v537, 4
  %v683 = vpop.permute.xlu0 %682
  %684 = vrot.lane.b32.xlu0 %v540, 4
  %v685 = vpop.permute.xlu0 %684
  %686 = vrot.lane.b32.xlu0 %v542, 4
  %v687 = vpop.permute.xlu0 %686
  %688 = vrot.lane.b32.xlu0 %v545, 4
  %v689 = vpop.permute.xlu0 %688
  %690 = vrot.lane.b32.xlu0 %v547, 4
  %v691 = vpop.permute.xlu0 %690
  %692 = vrot.lane.b32.xlu0 %v550, 4
  %v693 = vpop.permute.xlu0 %692
  %694 = vrot.lane.b32.xlu0 %v552, 4
  %v695 = vpop.permute.xlu0 %694
  %696 = vrot.lane.b32.xlu0 %v555, 4
  %v697 = vpop.permute.xlu0 %696
  %698 = vrot.lane.b32.xlu0 %v557, 4
  %v699 = vpop.permute.xlu0 %698
  %700 = vrot.lane.b32.xlu0 %v560, 4
  %v701 = vpop.permute.xlu0 %700
  %702 = vrot.lane.b32.xlu0 %v562, 4
  %v703 = vpop.permute.xlu0 %702
  %704 = vrot.lane.b32.xlu0 %v565, 4
  %v705 = vpop.permute.xlu0 %704
  %706 = vrot.lane.b32.xlu0 %v567, 4
  %v707 = vpop.permute.xlu0 %706
  %708 = vrot.lane.b32.xlu0 %v570, 4
  %v709 = vpop.permute.xlu0 %708
  %710 = vrot.lane.b32.xlu0 %v572, 4
  %v711 = vpop.permute.xlu0 %710
  %712 = vrot.lane.b32.xlu0 %v575, 4
  %v713 = vpop.permute.xlu0 %712
  %714 = vrot.lane.b32.xlu0 %v577, 4
  %v715 = vpop.permute.xlu0 %714
  %716 = vrot.lane.b32.xlu0 %v580, 4
  %v717 = vpop.permute.xlu0 %716
  %718 = vrot.lane.b32.xlu0 %v582, 4
  %v719 = vpop.permute.xlu0 %718
  %720 = vrot.lane.b32.xlu0 %v585, 4
  %v721 = vpop.permute.xlu0 %720
  %722 = vrot.lane.b32.xlu0 %v587, 4
  %v723 = vpop.permute.xlu0 %722
  %724 = vrot.lane.b32.xlu0 %v590, 4
  %v725 = vpop.permute.xlu0 %724
  %726 = vrot.lane.b32.xlu0 %v592, 4
  %v727 = vpop.permute.xlu0 %726
  %728 = vrot.lane.b32.xlu0 %v595, 4
  %v729 = vpop.permute.xlu0 %728
  %730 = vrot.lane.b32.xlu0 %v597, 4
  %v731 = vpop.permute.xlu0 %730
  %732 = vrot.lane.b32.xlu0 %v600, 4
  %v733 = vpop.permute.xlu0 %732
  %734 = vrot.lane.b32.xlu0 %v602, 4
  %v735 = vpop.permute.xlu0 %734
  %736 = vrot.lane.b32.xlu0 %v605, 4
  %v737 = vpop.permute.xlu0 %736
  %738 = vrot.lane.b32.xlu0 %v607, 4
  %v739 = vpop.permute.xlu0 %738
  %740 = vrot.lane.b32.xlu0 %v610, 4
  %v741 = vpop.permute.xlu0 %740
  %742 = vrot.lane.b32.xlu0 %v612, 4
  %v743 = vpop.permute.xlu0 %742
  %744 = vrot.lane.b32.xlu0 %v615, 4
  %v745 = vpop.permute.xlu0 %744
  %746 = vrot.lane.b32.xlu0 %v617, 4
  %v747 = vpop.permute.xlu0 %746
  %748 = vrot.lane.b32.xlu0 %v620, 4
  %v749 = vpop.permute.xlu0 %748
  %750 = vrot.lane.b32.xlu0 %v622, 4
  %v751 = vpop.permute.xlu0 %750
  %752 = vrot.lane.b32.xlu0 %v625, 4
  %v753 = vpop.permute.xlu0 %752
  %754 = vrot.lane.b32.xlu0 %v627, 4
  %v755 = vpop.permute.xlu0 %754
  %756 = vrot.lane.b32.xlu0 %v630, 4
  %v757 = vpop.permute.xlu0 %756
  %758 = vrot.lane.b32.xlu0 %v632, 4
  %v759 = vpop.permute.xlu0 %758
  %760 = vrot.lane.b32.xlu0 %v635, 4
  %v761 = vpop.permute.xlu0 %760
  %762 = vrot.lane.b32.xlu0 %v637, 4
  %v763 = vpop.permute.xlu0 %762
  %764 = vrot.lane.b32.xlu0 %v640, 4
  %v765 = vpop.permute.xlu0 %764
  %766 = vrot.lane.b32.xlu0 %v642, 4
  %v767 = vpop.permute.xlu0 %766
  %768 = vrot.lane.b32.xlu0 %v645, 4
  %v769 = vpop.permute.xlu0 %768
  %770 = vrot.lane.b32.xlu0 %v647, 4
  %v771 = vpop.permute.xlu0 %770
  %vm834 = vcmask 1045504
  %v835 = vrot.slane %v364, 2
  %v836 = vrot.slane %v171, 2
  %v837 = vsel %vm834, %v835, %v836
  %v838 = vrot.slane %v397, 2
  %v839 = vsel %vm834, %v836, %v838
  %v840 = vrot.slane %v365, 2
  %v841 = vrot.slane %v174, 2
  %v842 = vsel %vm834, %v840, %v841
  %v843 = vrot.slane %v398, 2
  %v844 = vsel %vm834, %v841, %v843
  %v845 = vrot.slane %v366, 2
  %v846 = vrot.slane %v177, 2
  %v847 = vsel %vm834, %v845, %v846
  %v848 = vrot.slane %v399, 2
  %v849 = vsel %vm834, %v846, %v848
  %v850 = vrot.slane %v367, 2
  %v851 = vrot.slane %v180, 2
  %v852 = vsel %vm834, %v850, %v851
  %v853 = vrot.slane %v400, 2
  %v854 = vsel %vm834, %v851, %v853
  %v855 = vrot.slane %v368, 2
  %v856 = vrot.slane %v183, 2
  %v857 = vsel %vm834, %v855, %v856
  %v858 = vrot.slane %v401, 2
  %v859 = vsel %vm834, %v856, %v858
  %v860 = vrot.slane %v369, 2
  %v861 = vrot.slane %v186, 2
  %v862 = vsel %vm834, %v860, %v861
  %v863 = vrot.slane %v402, 2
  %v864 = vsel %vm834, %v861, %v863
  %v865 = vrot.slane %v370, 2
  %v866 = vrot.slane %v189, 2
  %v867 = vsel %vm834, %v865, %v866
  %v868 = vrot.slane %v403, 2
  %v869 = vsel %vm834, %v866, %v868
  %v870 = vrot.slane %v371, 2
  %v871 = vrot.slane %v192, 2
  %v872 = vsel %vm834, %v870, %v871
  %v873 = vrot.slane %v404, 2
  %v874 = vsel %vm834, %v871, %v873
  %v875 = vrot.slane %v372, 2
  %v876 = vrot.slane %v195, 2
  %v877 = vsel %vm834, %v875, %v876
  %v878 = vrot.slane %v405, 2
  %v879 = vsel %vm834, %v876, %v878
  %v880 = vrot.slane %v373, 2
  %v881 = vrot.slane %v198, 2
  %v882 = vsel %vm834, %v880, %v881
  %v883 = vrot.slane %v406, 2
  %v884 = vsel %vm834, %v881, %v883
  %v885 = vrot.slane %v374, 2
  %v886 = vrot.slane %v201, 2
  %v887 = vsel %vm834, %v885, %v886
  %v888 = vrot.slane %v407, 2
  %v889 = vsel %vm834, %v886, %v888
  %v890 = vrot.slane %v375, 2
  %v891 = vrot.slane %v204, 2
  %v892 = vsel %vm834, %v890, %v891
  %v893 = vrot.slane %v408, 2
  %v894 = vsel %vm834, %v891, %v893
  %v895 = vrot.slane %v376, 2
  %v896 = vrot.slane %v207, 2
  %v897 = vsel %vm834, %v895, %v896
  %v898 = vrot.slane %v409, 2
  %v899 = vsel %vm834, %v896, %v898
  %v900 = vrot.slane %v377, 2
  %v901 = vrot.slane %v210, 2
  %v902 = vsel %vm834, %v900, %v901
  %v903 = vrot.slane %v410, 2
  %v904 = vsel %vm834, %v901, %v903
  %v905 = vrot.slane %v378, 2
  %v906 = vrot.slane %v213, 2
  %v907 = vsel %vm834, %v905, %v906
  %v908 = vrot.slane %v411, 2
  %v909 = vsel %vm834, %v906, %v908
  %v910 = vrot.slane %v379, 2
  %v911 = vrot.slane %v216, 2
  %v912 = vsel %vm834, %v910, %v911
  %v913 = vrot.slane %v412, 2
  %v914 = vsel %vm834, %v911, %v913
  %v915 = vrot.slane %v381, 2
  %v916 = vrot.slane %v222, 2
  %v917 = vsel %vm834, %v915, %v916
  %v918 = vrot.slane %v414, 2
  %v919 = vsel %vm834, %v916, %v918
  %v920 = vrot.slane %v382, 2
  %v921 = vrot.slane %v225, 2
  %v922 = vsel %vm834, %v920, %v921
  %v923 = vrot.slane %v415, 2
  %v924 = vsel %vm834, %v921, %v923
  %v925 = vrot.slane %v383, 2
  %v926 = vrot.slane %v228, 2
  %v927 = vsel %vm834, %v925, %v926
  %v928 = vrot.slane %v416, 2
  %v929 = vsel %vm834, %v926, %v928
  %v930 = vrot.slane %v384, 2
  %v931 = vrot.slane %v231, 2
  %v932 = vsel %vm834, %v930, %v931
  %v933 = vrot.slane %v417, 2
  %v934 = vsel %vm834, %v931, %v933
  %v935 = vrot.slane %v385, 2
  %v936 = vrot.slane %v234, 2
  %v937 = vsel %vm834, %v935, %v936
  %v938 = vrot.slane %v418, 2
  %v939 = vsel %vm834, %v936, %v938
  %v940 = vrot.slane %v386, 2
  %v941 = vrot.slane %v237, 2
  %v942 = vsel %vm834, %v940, %v941
  %v943 = vrot.slane %v419, 2
  %v944 = vsel %vm834, %v941, %v943
  %v945 = vrot.slane %v387, 2
  %v946 = vrot.slane %v240, 2
  %v947 = vsel %vm834, %v945, %v946
  %v948 = vrot.slane %v420, 2
  %v949 = vsel %vm834, %v946, %v948
  %v950 = vrot.slane %v388, 2
  %v951 = vrot.slane %v243, 2
  %v952 = vsel %vm834, %v950, %v951
  %v953 = vrot.slane %v421, 2
  %v954 = vsel %vm834, %v951, %v953
  %v955 = vrot.slane %v389, 2
  %v956 = vrot.slane %v246, 2
  %v957 = vsel %vm834, %v955, %v956
  %v958 = vrot.slane %v422, 2
  %v959 = vsel %vm834, %v956, %v958
  %v960 = vrot.slane %v390, 2
  %v961 = vrot.slane %v249, 2
  %v962 = vsel %vm834, %v960, %v961
  %v963 = vrot.slane %v423, 2
  %v964 = vsel %vm834, %v961, %v963
  %v965 = vrot.slane %v391, 2
  %v966 = vrot.slane %v252, 2
  %v967 = vsel %vm834, %v965, %v966
  %v968 = vrot.slane %v424, 2
  %v969 = vsel %vm834, %v966, %v968
  %v970 = vrot.slane %v392, 2
  %v971 = vrot.slane %v255, 2
  %v972 = vsel %vm834, %v970, %v971
  %v973 = vrot.slane %v425, 2
  %v974 = vsel %vm834, %v971, %v973
  %v975 = vrot.slane %v393, 2
  %v976 = vrot.slane %v258, 2
  %v977 = vsel %vm834, %v975, %v976
  %v978 = vrot.slane %v426, 2
  %v979 = vsel %vm834, %v976, %v978
  %v980 = vrot.slane %v394, 2
  %v981 = vrot.slane %v261, 2
  %v982 = vsel %vm834, %v980, %v981
  %v983 = vrot.slane %v427, 2
  %v984 = vsel %vm834, %v981, %v983
  %v985 = vrot.slane %v395, 2
  %v986 = vrot.slane %v264, 2
  %v987 = vsel %vm834, %v985, %v986
  %v988 = vrot.slane %v428, 2
  %v989 = vsel %vm834, %v986, %v988
  %990 = vrot.lane.b32.xlu0 %v837, 8
  %v991 = vpop.permute.xlu0 %990
  %992 = vrot.lane.b32.xlu0 %v839, 8
  %v993 = vpop.permute.xlu0 %992
  %994 = vrot.lane.b32.xlu0 %v842, 8
  %v995 = vpop.permute.xlu0 %994
  %996 = vrot.lane.b32.xlu0 %v844, 8
  %v997 = vpop.permute.xlu0 %996
  %998 = vrot.lane.b32.xlu0 %v847, 8
  %v999 = vpop.permute.xlu0 %998
  %1000 = vrot.lane.b32.xlu0 %v849, 8
  %v1001 = vpop.permute.xlu0 %1000
  %1002 = vrot.lane.b32.xlu0 %v852, 8
  %v1003 = vpop.permute.xlu0 %1002
  %1004 = vrot.lane.b32.xlu0 %v854, 8
  %v1005 = vpop.permute.xlu0 %1004
  %1006 = vrot.lane.b32.xlu0 %v857, 8
  %v1007 = vpop.permute.xlu0 %1006
  %1008 = vrot.lane.b32.xlu0 %v859, 8
  %v1009 = vpop.permute.xlu0 %1008
  %1010 = vrot.lane.b32.xlu0 %v862, 8
  %v1011 = vpop.permute.xlu0 %1010
  %1012 = vrot.lane.b32.xlu0 %v864, 8
  %v1013 = vpop.permute.xlu0 %1012
  %1014 = vrot.lane.b32.xlu0 %v867, 8
  %v1015 = vpop.permute.xlu0 %1014
  %1016 = vrot.lane.b32.xlu0 %v869, 8
  %v1017 = vpop.permute.xlu0 %1016
  %1018 = vrot.lane.b32.xlu0 %v872, 8
  %v1019 = vpop.permute.xlu0 %1018
  %1020 = vrot.lane.b32.xlu0 %v874, 8
  %v1021 = vpop.permute.xlu0 %1020
  %1022 = vrot.lane.b32.xlu0 %v877, 8
  %v1023 = vpop.permute.xlu0 %1022
  %1024 = vrot.lane.b32.xlu0 %v879, 8
  %v1025 = vpop.permute.xlu0 %1024
  %1026 = vrot.lane.b32.xlu0 %v882, 8
  %v1027 = vpop.permute.xlu0 %1026
  %1028 = vrot.lane.b32.xlu0 %v884, 8
  %v1029 = vpop.permute.xlu0 %1028
  %1030 = vrot.lane.b32.xlu0 %v887, 8
  %v1031 = vpop.permute.xlu0 %1030
  %1032 = vrot.lane.b32.xlu0 %v889, 8
  %v1033 = vpop.permute.xlu0 %1032
  %1034 = vrot.lane.b32.xlu0 %v892, 8
  %v1035 = vpop.permute.xlu0 %1034
  %1036 = vrot.lane.b32.xlu0 %v894, 8
  %v1037 = vpop.permute.xlu0 %1036
  %1038 = vrot.lane.b32.xlu0 %v897, 8
  %v1039 = vpop.permute.xlu0 %1038
  %1040 = vrot.lane.b32.xlu0 %v899, 8
  %v1041 = vpop.permute.xlu0 %1040
  %1042 = vrot.lane.b32.xlu0 %v902, 8
  %v1043 = vpop.permute.xlu0 %1042
  %1044 = vrot.lane.b32.xlu0 %v904, 8
  %v1045 = vpop.permute.xlu0 %1044
  %1046 = vrot.lane.b32.xlu0 %v907, 8
  %v1047 = vpop.permute.xlu0 %1046
  %1048 = vrot.lane.b32.xlu0 %v909, 8
  %v1049 = vpop.permute.xlu0 %1048
  %1050 = vrot.lane.b32.xlu0 %v912, 8
  %v1051 = vpop.permute.xlu0 %1050
  %1052 = vrot.lane.b32.xlu0 %v914, 8
  %v1053 = vpop.permute.xlu0 %1052
  %1054 = vrot.lane.b32.xlu0 %v917, 8
  %v1055 = vpop.permute.xlu0 %1054
  %1056 = vrot.lane.b32.xlu0 %v919, 8
  %v1057 = vpop.permute.xlu0 %1056
  %1058 = vrot.lane.b32.xlu0 %v922, 8
  %v1059 = vpop.permute.xlu0 %1058
  %1060 = vrot.lane.b32.xlu0 %v924, 8
  %v1061 = vpop.permute.xlu0 %1060
  %1062 = vrot.lane.b32.xlu0 %v927, 8
  %v1063 = vpop.permute.xlu0 %1062
  %1064 = vrot.lane.b32.xlu0 %v929, 8
  %v1065 = vpop.permute.xlu0 %1064
  %1066 = vrot.lane.b32.xlu0 %v932, 8
  %v1067 = vpop.permute.xlu0 %1066
  %1068 = vrot.lane.b32.xlu0 %v934, 8
  %v1069 = vpop.permute.xlu0 %1068
  %1070 = vrot.lane.b32.xlu0 %v937, 8
  %v1071 = vpop.permute.xlu0 %1070
  %1072 = vrot.lane.b32.xlu0 %v939, 8
  %v1073 = vpop.permute.xlu0 %1072
  %1074 = vrot.lane.b32.xlu0 %v942, 8
  %v1075 = vpop.permute.xlu0 %1074
  %1076 = vrot.lane.b32.xlu0 %v944, 8
  %v1077 = vpop.permute.xlu0 %1076
  %1078 = vrot.lane.b32.xlu0 %v947, 8
  %v1079 = vpop.permute.xlu0 %1078
  %1080 = vrot.lane.b32.xlu0 %v949, 8
  %v1081 = vpop.permute.xlu0 %1080
  %1082 = vrot.lane.b32.xlu0 %v952, 8
  %v1083 = vpop.permute.xlu0 %1082
  %1084 = vrot.lane.b32.xlu0 %v954, 8
  %v1085 = vpop.permute.xlu0 %1084
  %1086 = vrot.lane.b32.xlu0 %v957, 8
  %v1087 = vpop.permute.xlu0 %1086
  %1088 = vrot.lane.b32.xlu0 %v959, 8
  %v1089 = vpop.permute.xlu0 %1088
  %1090 = vrot.lane.b32.xlu0 %v962, 8
  %v1091 = vpop.permute.xlu0 %1090
  %1092 = vrot.lane.b32.xlu0 %v964, 8
  %v1093 = vpop.permute.xlu0 %1092
  %1094 = vrot.lane.b32.xlu0 %v967, 8
  %v1095 = vpop.permute.xlu0 %1094
  %1096 = vrot.lane.b32.xlu0 %v969, 8
  %v1097 = vpop.permute.xlu0 %1096
  %1098 = vrot.lane.b32.xlu0 %v972, 8
  %v1099 = vpop.permute.xlu0 %1098
  %1100 = vrot.lane.b32.xlu0 %v974, 8
  %v1101 = vpop.permute.xlu0 %1100
  %1102 = vrot.lane.b32.xlu0 %v977, 8
  %v1103 = vpop.permute.xlu0 %1102
  %1104 = vrot.lane.b32.xlu0 %v979, 8
  %v1105 = vpop.permute.xlu0 %1104
  %1106 = vrot.lane.b32.xlu0 %v982, 8
  %v1107 = vpop.permute.xlu0 %1106
  %1108 = vrot.lane.b32.xlu0 %v984, 8
  %v1109 = vpop.permute.xlu0 %1108
  %1110 = vrot.lane.b32.xlu0 %v987, 8
  %v1111 = vpop.permute.xlu0 %1110
  %1112 = vrot.lane.b32.xlu0 %v989, 8
  %v1113 = vpop.permute.xlu0 %1112
  %1178 = vrot.lane.b32.xlu0 %v365, 12
  %v1179 = vpop.permute.xlu0 %1178
  %1180 = vrot.lane.b32.xlu0 %v174, 12
  %v1181 = vpop.permute.xlu0 %1180
  %1182 = vrot.lane.b32.xlu0 %v366, 12
  %v1183 = vpop.permute.xlu0 %1182
  %1184 = vrot.lane.b32.xlu0 %v177, 12
  %v1185 = vpop.permute.xlu0 %1184
  %1186 = vrot.lane.b32.xlu0 %v367, 12
  %v1187 = vpop.permute.xlu0 %1186
  %1188 = vrot.lane.b32.xlu0 %v180, 12
  %v1189 = vpop.permute.xlu0 %1188
  %1190 = vrot.lane.b32.xlu0 %v368, 12
  %v1191 = vpop.permute.xlu0 %1190
  %1192 = vrot.lane.b32.xlu0 %v183, 12
  %v1193 = vpop.permute.xlu0 %1192
  %1194 = vrot.lane.b32.xlu0 %v369, 12
  %v1195 = vpop.permute.xlu0 %1194
  %1196 = vrot.lane.b32.xlu0 %v186, 12
  %v1197 = vpop.permute.xlu0 %1196
  %1198 = vrot.lane.b32.xlu0 %v370, 12
  %v1199 = vpop.permute.xlu0 %1198
  %1200 = vrot.lane.b32.xlu0 %v189, 12
  %v1201 = vpop.permute.xlu0 %1200
  %1202 = vrot.lane.b32.xlu0 %v371, 12
  %v1203 = vpop.permute.xlu0 %1202
  %1204 = vrot.lane.b32.xlu0 %v192, 12
  %v1205 = vpop.permute.xlu0 %1204
  %1206 = vrot.lane.b32.xlu0 %v372, 12
  %v1207 = vpop.permute.xlu0 %1206
  %1208 = vrot.lane.b32.xlu0 %v195, 12
  %v1209 = vpop.permute.xlu0 %1208
  %1210 = vrot.lane.b32.xlu0 %v373, 12
  %v1211 = vpop.permute.xlu0 %1210
  %1212 = vrot.lane.b32.xlu0 %v198, 12
  %v1213 = vpop.permute.xlu0 %1212
  %1214 = vrot.lane.b32.xlu0 %v374, 12
  %v1215 = vpop.permute.xlu0 %1214
  %1216 = vrot.lane.b32.xlu0 %v201, 12
  %v1217 = vpop.permute.xlu0 %1216
  %1218 = vrot.lane.b32.xlu0 %v375, 12
  %v1219 = vpop.permute.xlu0 %1218
  %1220 = vrot.lane.b32.xlu0 %v204, 12
  %v1221 = vpop.permute.xlu0 %1220
  %1222 = vrot.lane.b32.xlu0 %v376, 12
  %v1223 = vpop.permute.xlu0 %1222
  %1224 = vrot.lane.b32.xlu0 %v207, 12
  %v1225 = vpop.permute.xlu0 %1224
  %1226 = vrot.lane.b32.xlu0 %v377, 12
  %v1227 = vpop.permute.xlu0 %1226
  %1228 = vrot.lane.b32.xlu0 %v210, 12
  %v1229 = vpop.permute.xlu0 %1228
  %1230 = vrot.lane.b32.xlu0 %v378, 12
  %v1231 = vpop.permute.xlu0 %1230
  %1232 = vrot.lane.b32.xlu0 %v213, 12
  %v1233 = vpop.permute.xlu0 %1232
  %1234 = vrot.lane.b32.xlu0 %v379, 12
  %v1235 = vpop.permute.xlu0 %1234
  %1236 = vrot.lane.b32.xlu0 %v216, 12
  %v1237 = vpop.permute.xlu0 %1236
  %1238 = vrot.lane.b32.xlu0 %v380, 12
  %v1239 = vpop.permute.xlu0 %1238
  %1240 = vrot.lane.b32.xlu0 %v219, 12
  %v1241 = vpop.permute.xlu0 %1240
  %1242 = vrot.lane.b32.xlu0 %v381, 12
  %v1243 = vpop.permute.xlu0 %1242
  %1244 = vrot.lane.b32.xlu0 %v222, 12
  %v1245 = vpop.permute.xlu0 %1244
  %1246 = vrot.lane.b32.xlu0 %v382, 12
  %v1247 = vpop.permute.xlu0 %1246
  %1248 = vrot.lane.b32.xlu0 %v225, 12
  %v1249 = vpop.permute.xlu0 %1248
  %1250 = vrot.lane.b32.xlu0 %v383, 12
  %v1251 = vpop.permute.xlu0 %1250
  %1252 = vrot.lane.b32.xlu0 %v228, 12
  %v1253 = vpop.permute.xlu0 %1252
  %1254 = vrot.lane.b32.xlu0 %v384, 12
  %v1255 = vpop.permute.xlu0 %1254
  %1256 = vrot.lane.b32.xlu0 %v231, 12
  %v1257 = vpop.permute.xlu0 %1256
  %1258 = vrot.lane.b32.xlu0 %v385, 12
  %v1259 = vpop.permute.xlu0 %1258
  %1260 = vrot.lane.b32.xlu0 %v234, 12
  %v1261 = vpop.permute.xlu0 %1260
  %1262 = vrot.lane.b32.xlu0 %v386, 12
  %v1263 = vpop.permute.xlu0 %1262
  %1264 = vrot.lane.b32.xlu0 %v237, 12
  %v1265 = vpop.permute.xlu0 %1264
  %1266 = vrot.lane.b32.xlu0 %v387, 12
  %v1267 = vpop.permute.xlu0 %1266
  %1268 = vrot.lane.b32.xlu0 %v240, 12
  %v1269 = vpop.permute.xlu0 %1268
  %1270 = vrot.lane.b32.xlu0 %v388, 12
  %v1271 = vpop.permute.xlu0 %1270
  %1272 = vrot.lane.b32.xlu0 %v243, 12
  %v1273 = vpop.permute.xlu0 %1272
  %1274 = vrot.lane.b32.xlu0 %v389, 12
  %v1275 = vpop.permute.xlu0 %1274
  %1276 = vrot.lane.b32.xlu0 %v246, 12
  %v1277 = vpop.permute.xlu0 %1276
  %1278 = vrot.lane.b32.xlu0 %v390, 12
  %v1279 = vpop.permute.xlu0 %1278
  %1280 = vrot.lane.b32.xlu0 %v249, 12
  %v1281 = vpop.permute.xlu0 %1280
  %1282 = vrot.lane.b32.xlu0 %v391, 12
  %v1283 = vpop.permute.xlu0 %1282
  %1284 = vrot.lane.b32.xlu0 %v252, 12
  %v1285 = vpop.permute.xlu0 %1284
  %1286 = vrot.lane.b32.xlu0 %v392, 12
  %v1287 = vpop.permute.xlu0 %1286
  %1288 = vrot.lane.b32.xlu0 %v255, 12
  %v1289 = vpop.permute.xlu0 %1288
  %1290 = vrot.lane.b32.xlu0 %v393, 12
  %v1291 = vpop.permute.xlu0 %1290
  %1292 = vrot.lane.b32.xlu0 %v258, 12
  %v1293 = vpop.permute.xlu0 %1292
  %1294 = vrot.lane.b32.xlu0 %v394, 12
  %v1295 = vpop.permute.xlu0 %1294
  %1296 = vrot.lane.b32.xlu0 %v261, 12
  %v1297 = vpop.permute.xlu0 %1296
  %1298 = vrot.lane.b32.xlu0 %v395, 12
  %v1299 = vpop.permute.xlu0 %1298
  %1300 = vrot.lane.b32.xlu0 %v264, 12
  %v1301 = vpop.permute.xlu0 %1300
  %1302 = vrot.lane.b32.xlu0 %v396, 12
  %v1303 = vpop.permute.xlu0 %1302
  %1304 = vrot.lane.b32.xlu0 %v267, 12
  %v1305 = vpop.permute.xlu0 %1304
  %v1372 = vrot.slane %v380, 1
  %v1373 = vrot.slane %v219, 1
  %v1374 = vsel %vm492, %v1372, %v1373
  %v1375 = vrot.slane %v413, 1
  %v1376 = vsel %vm492, %v1373, %v1375
  %v1377 = vrot.slane %v396, 1
  %v1378 = vrot.slane %v267, 1
  %v1379 = vsel %vm492, %v1377, %v1378
  %v1380 = vrot.slane %v429, 1
  %v1381 = vsel %vm492, %v1378, %v1380
  %1382 = vrot.lane.b32.xlu0 %v500, 16
  %v1383 = vpop.permute.xlu0 %1382
  %1384 = vrot.lane.b32.xlu0 %v502, 16
  %v1385 = vpop.permute.xlu0 %1384
  %1386 = vrot.lane.b32.xlu0 %v505, 16
  %v1387 = vpop.permute.xlu0 %1386
  %1388 = vrot.lane.b32.xlu0 %v507, 16
  %v1389 = vpop.permute.xlu0 %1388
  %1390 = vrot.lane.b32.xlu0 %v510, 16
  %v1391 = vpop.permute.xlu0 %1390
  %1392 = vrot.lane.b32.xlu0 %v512, 16
  %v1393 = vpop.permute.xlu0 %1392
  %1394 = vrot.lane.b32.xlu0 %v515, 16
  %v1395 = vpop.permute.xlu0 %1394
  %1396 = vrot.lane.b32.xlu0 %v517, 16
  %v1397 = vpop.permute.xlu0 %1396
  %1398 = vrot.lane.b32.xlu0 %v520, 16
  %v1399 = vpop.permute.xlu0 %1398
  %1400 = vrot.lane.b32.xlu0 %v522, 16
  %v1401 = vpop.permute.xlu0 %1400
  %1402 = vrot.lane.b32.xlu0 %v525, 16
  %v1403 = vpop.permute.xlu0 %1402
  %1404 = vrot.lane.b32.xlu0 %v527, 16
  %v1405 = vpop.permute.xlu0 %1404
  %1406 = vrot.lane.b32.xlu0 %v530, 16
  %v1407 = vpop.permute.xlu0 %1406
  %1408 = vrot.lane.b32.xlu0 %v532, 16
  %v1409 = vpop.permute.xlu0 %1408
  %1410 = vrot.lane.b32.xlu0 %v535, 16
  %v1411 = vpop.permute.xlu0 %1410
  %1412 = vrot.lane.b32.xlu0 %v537, 16
  %v1413 = vpop.permute.xlu0 %1412
  %1414 = vrot.lane.b32.xlu0 %v540, 16
  %v1415 = vpop.permute.xlu0 %1414
  %1416 = vrot.lane.b32.xlu0 %v542, 16
  %v1417 = vpop.permute.xlu0 %1416
  %1418 = vrot.lane.b32.xlu0 %v545, 16
  %v1419 = vpop.permute.xlu0 %1418
  %1420 = vrot.lane.b32.xlu0 %v547, 16
  %v1421 = vpop.permute.xlu0 %1420
  %1422 = vrot.lane.b32.xlu0 %v550, 16
  %v1423 = vpop.permute.xlu0 %1422
  %1424 = vrot.lane.b32.xlu0 %v552, 16
  %v1425 = vpop.permute.xlu0 %1424
  %1426 = vrot.lane.b32.xlu0 %v555, 16
  %v1427 = vpop.permute.xlu0 %1426
  %1428 = vrot.lane.b32.xlu0 %v557, 16
  %v1429 = vpop.permute.xlu0 %1428
  %1430 = vrot.lane.b32.xlu0 %v560, 16
  %v1431 = vpop.permute.xlu0 %1430
  %1432 = vrot.lane.b32.xlu0 %v562, 16
  %v1433 = vpop.permute.xlu0 %1432
  %1434 = vrot.lane.b32.xlu0 %v565, 16
  %v1435 = vpop.permute.xlu0 %1434
  %1436 = vrot.lane.b32.xlu0 %v567, 16
  %v1437 = vpop.permute.xlu0 %1436
  %1438 = vrot.lane.b32.xlu0 %v570, 16
  %v1439 = vpop.permute.xlu0 %1438
  %1440 = vrot.lane.b32.xlu0 %v572, 16
  %v1441 = vpop.permute.xlu0 %1440
  %1442 = vrot.lane.b32.xlu0 %v1374, 16
  %v1443 = vpop.permute.xlu0 %1442
  %1444 = vrot.lane.b32.xlu0 %v1376, 16
  %v1445 = vpop.permute.xlu0 %1444
  %1446 = vrot.lane.b32.xlu0 %v575, 16
  %v1447 = vpop.permute.xlu0 %1446
  %1448 = vrot.lane.b32.xlu0 %v577, 16
  %v1449 = vpop.permute.xlu0 %1448
  %1450 = vrot.lane.b32.xlu0 %v580, 16
  %v1451 = vpop.permute.xlu0 %1450
  %1452 = vrot.lane.b32.xlu0 %v582, 16
  %v1453 = vpop.permute.xlu0 %1452
  %1454 = vrot.lane.b32.xlu0 %v585, 16
  %v1455 = vpop.permute.xlu0 %1454
  %1456 = vrot.lane.b32.xlu0 %v587, 16
  %v1457 = vpop.permute.xlu0 %1456
  %1458 = vrot.lane.b32.xlu0 %v590, 16
  %v1459 = vpop.permute.xlu0 %1458
  %1460 = vrot.lane.b32.xlu0 %v592, 16
  %v1461 = vpop.permute.xlu0 %1460
  %1462 = vrot.lane.b32.xlu0 %v595, 16
  %v1463 = vpop.permute.xlu0 %1462
  %1464 = vrot.lane.b32.xlu0 %v597, 16
  %v1465 = vpop.permute.xlu0 %1464
  %1466 = vrot.lane.b32.xlu0 %v600, 16
  %v1467 = vpop.permute.xlu0 %1466
  %1468 = vrot.lane.b32.xlu0 %v602, 16
  %v1469 = vpop.permute.xlu0 %1468
  %1470 = vrot.lane.b32.xlu0 %v605, 16
  %v1471 = vpop.permute.xlu0 %1470
  %1472 = vrot.lane.b32.xlu0 %v607, 16
  %v1473 = vpop.permute.xlu0 %1472
  %1474 = vrot.lane.b32.xlu0 %v610, 16
  %v1475 = vpop.permute.xlu0 %1474
  %1476 = vrot.lane.b32.xlu0 %v612, 16
  %v1477 = vpop.permute.xlu0 %1476
  %1478 = vrot.lane.b32.xlu0 %v615, 16
  %v1479 = vpop.permute.xlu0 %1478
  %1480 = vrot.lane.b32.xlu0 %v617, 16
  %v1481 = vpop.permute.xlu0 %1480
  %1482 = vrot.lane.b32.xlu0 %v620, 16
  %v1483 = vpop.permute.xlu0 %1482
  %1484 = vrot.lane.b32.xlu0 %v622, 16
  %v1485 = vpop.permute.xlu0 %1484
  %1486 = vrot.lane.b32.xlu0 %v625, 16
  %v1487 = vpop.permute.xlu0 %1486
  %1488 = vrot.lane.b32.xlu0 %v627, 16
  %v1489 = vpop.permute.xlu0 %1488
  %1490 = vrot.lane.b32.xlu0 %v630, 16
  %v1491 = vpop.permute.xlu0 %1490
  %1492 = vrot.lane.b32.xlu0 %v632, 16
  %v1493 = vpop.permute.xlu0 %1492
  %1494 = vrot.lane.b32.xlu0 %v635, 16
  %v1495 = vpop.permute.xlu0 %1494
  %1496 = vrot.lane.b32.xlu0 %v637, 16
  %v1497 = vpop.permute.xlu0 %1496
  %1498 = vrot.lane.b32.xlu0 %v640, 16
  %v1499 = vpop.permute.xlu0 %1498
  %1500 = vrot.lane.b32.xlu0 %v642, 16
  %v1501 = vpop.permute.xlu0 %1500
  %1502 = vrot.lane.b32.xlu0 %v645, 16
  %v1503 = vpop.permute.xlu0 %1502
  %1504 = vrot.lane.b32.xlu0 %v647, 16
  %v1505 = vpop.permute.xlu0 %1504
  %1506 = vrot.lane.b32.xlu0 %v1379, 16
  %v1507 = vpop.permute.xlu0 %1506
  %1508 = vrot.lane.b32.xlu0 %v1381, 16
  %v1509 = vpop.permute.xlu0 %1508
  %v1574 = vrot.slane %v380, 2
  %v1575 = vrot.slane %v219, 2
  %v1576 = vsel %vm834, %v1574, %v1575
  %v1577 = vrot.slane %v413, 2
  %v1578 = vsel %vm834, %v1575, %v1577
  %v1579 = vrot.slane %v396, 2
  %v1580 = vrot.slane %v267, 2
  %v1581 = vsel %vm834, %v1579, %v1580
  %v1582 = vrot.slane %v429, 2
  %v1583 = vsel %vm834, %v1580, %v1582
  %1584 = vrot.lane.b32.xlu0 %v842, 20
  %v1585 = vpop.permute.xlu0 %1584
  %1586 = vrot.lane.b32.xlu0 %v844, 20
  %v1587 = vpop.permute.xlu0 %1586
  %1588 = vrot.lane.b32.xlu0 %v847, 20
  %v1589 = vpop.permute.xlu0 %1588
  %1590 = vrot.lane.b32.xlu0 %v849, 20
  %v1591 = vpop.permute.xlu0 %1590
  %1592 = vrot.lane.b32.xlu0 %v852, 20
  %v1593 = vpop.permute.xlu0 %1592
  %1594 = vrot.lane.b32.xlu0 %v854, 20
  %v1595 = vpop.permute.xlu0 %1594
  %1596 = vrot.lane.b32.xlu0 %v857, 20
  %v1597 = vpop.permute.xlu0 %1596
  %1598 = vrot.lane.b32.xlu0 %v859, 20
  %v1599 = vpop.permute.xlu0 %1598
  %1600 = vrot.lane.b32.xlu0 %v862, 20
  %v1601 = vpop.permute.xlu0 %1600
  %1602 = vrot.lane.b32.xlu0 %v864, 20
  %v1603 = vpop.permute.xlu0 %1602
  %1604 = vrot.lane.b32.xlu0 %v867, 20
  %v1605 = vpop.permute.xlu0 %1604
  %1606 = vrot.lane.b32.xlu0 %v869, 20
  %v1607 = vpop.permute.xlu0 %1606
  %1608 = vrot.lane.b32.xlu0 %v872, 20
  %v1609 = vpop.permute.xlu0 %1608
  %1610 = vrot.lane.b32.xlu0 %v874, 20
  %v1611 = vpop.permute.xlu0 %1610
  %1612 = vrot.lane.b32.xlu0 %v877, 20
  %v1613 = vpop.permute.xlu0 %1612
  %1614 = vrot.lane.b32.xlu0 %v879, 20
  %v1615 = vpop.permute.xlu0 %1614
  %1616 = vrot.lane.b32.xlu0 %v882, 20
  %v1617 = vpop.permute.xlu0 %1616
  %1618 = vrot.lane.b32.xlu0 %v884, 20
  %v1619 = vpop.permute.xlu0 %1618
  %1620 = vrot.lane.b32.xlu0 %v887, 20
  %v1621 = vpop.permute.xlu0 %1620
  %1622 = vrot.lane.b32.xlu0 %v889, 20
  %v1623 = vpop.permute.xlu0 %1622
  %1624 = vrot.lane.b32.xlu0 %v892, 20
  %v1625 = vpop.permute.xlu0 %1624
  %1626 = vrot.lane.b32.xlu0 %v894, 20
  %v1627 = vpop.permute.xlu0 %1626
  %1628 = vrot.lane.b32.xlu0 %v897, 20
  %v1629 = vpop.permute.xlu0 %1628
  %1630 = vrot.lane.b32.xlu0 %v899, 20
  %v1631 = vpop.permute.xlu0 %1630
  %1632 = vrot.lane.b32.xlu0 %v902, 20
  %v1633 = vpop.permute.xlu0 %1632
  %1634 = vrot.lane.b32.xlu0 %v904, 20
  %v1635 = vpop.permute.xlu0 %1634
  %1636 = vrot.lane.b32.xlu0 %v907, 20
  %v1637 = vpop.permute.xlu0 %1636
  %1638 = vrot.lane.b32.xlu0 %v909, 20
  %v1639 = vpop.permute.xlu0 %1638
  %1640 = vrot.lane.b32.xlu0 %v912, 20
  %v1641 = vpop.permute.xlu0 %1640
  %1642 = vrot.lane.b32.xlu0 %v914, 20
  %v1643 = vpop.permute.xlu0 %1642
  %1644 = vrot.lane.b32.xlu0 %v1576, 20
  %v1645 = vpop.permute.xlu0 %1644
  %1646 = vrot.lane.b32.xlu0 %v1578, 20
  %v1647 = vpop.permute.xlu0 %1646
  %1648 = vrot.lane.b32.xlu0 %v917, 20
  %v1649 = vpop.permute.xlu0 %1648
  %1650 = vrot.lane.b32.xlu0 %v919, 20
  %v1651 = vpop.permute.xlu0 %1650
  %1652 = vrot.lane.b32.xlu0 %v922, 20
  %v1653 = vpop.permute.xlu0 %1652
  %1654 = vrot.lane.b32.xlu0 %v924, 20
  %v1655 = vpop.permute.xlu0 %1654
  %1656 = vrot.lane.b32.xlu0 %v927, 20
  %v1657 = vpop.permute.xlu0 %1656
  %1658 = vrot.lane.b32.xlu0 %v929, 20
  %v1659 = vpop.permute.xlu0 %1658
  %1660 = vrot.lane.b32.xlu0 %v932, 20
  %v1661 = vpop.permute.xlu0 %1660
  %1662 = vrot.lane.b32.xlu0 %v934, 20
  %v1663 = vpop.permute.xlu0 %1662
  %1664 = vrot.lane.b32.xlu0 %v937, 20
  %v1665 = vpop.permute.xlu0 %1664
  %1666 = vrot.lane.b32.xlu0 %v939, 20
  %v1667 = vpop.permute.xlu0 %1666
  %1668 = vrot.lane.b32.xlu0 %v942, 20
  %v1669 = vpop.permute.xlu0 %1668
  %1670 = vrot.lane.b32.xlu0 %v944, 20
  %v1671 = vpop.permute.xlu0 %1670
  %1672 = vrot.lane.b32.xlu0 %v947, 20
  %v1673 = vpop.permute.xlu0 %1672
  %1674 = vrot.lane.b32.xlu0 %v949, 20
  %v1675 = vpop.permute.xlu0 %1674
  %1676 = vrot.lane.b32.xlu0 %v952, 20
  %v1677 = vpop.permute.xlu0 %1676
  %1678 = vrot.lane.b32.xlu0 %v954, 20
  %v1679 = vpop.permute.xlu0 %1678
  %1680 = vrot.lane.b32.xlu0 %v957, 20
  %v1681 = vpop.permute.xlu0 %1680
  %1682 = vrot.lane.b32.xlu0 %v959, 20
  %v1683 = vpop.permute.xlu0 %1682
  %1684 = vrot.lane.b32.xlu0 %v962, 20
  %v1685 = vpop.permute.xlu0 %1684
  %1686 = vrot.lane.b32.xlu0 %v964, 20
  %v1687 = vpop.permute.xlu0 %1686
  %1688 = vrot.lane.b32.xlu0 %v967, 20
  %v1689 = vpop.permute.xlu0 %1688
  %1690 = vrot.lane.b32.xlu0 %v969, 20
  %v1691 = vpop.permute.xlu0 %1690
  %1692 = vrot.lane.b32.xlu0 %v972, 20
  %v1693 = vpop.permute.xlu0 %1692
  %1694 = vrot.lane.b32.xlu0 %v974, 20
  %v1695 = vpop.permute.xlu0 %1694
  %1696 = vrot.lane.b32.xlu0 %v977, 20
  %v1697 = vpop.permute.xlu0 %1696
  %1698 = vrot.lane.b32.xlu0 %v979, 20
  %v1699 = vpop.permute.xlu0 %1698
  %1700 = vrot.lane.b32.xlu0 %v982, 20
  %v1701 = vpop.permute.xlu0 %1700
  %1702 = vrot.lane.b32.xlu0 %v984, 20
  %v1703 = vpop.permute.xlu0 %1702
  %1704 = vrot.lane.b32.xlu0 %v987, 20
  %v1705 = vpop.permute.xlu0 %1704
  %1706 = vrot.lane.b32.xlu0 %v989, 20
  %v1707 = vpop.permute.xlu0 %1706
  %1708 = vrot.lane.b32.xlu0 %v1581, 20
  %v1709 = vpop.permute.xlu0 %1708
  %1710 = vrot.lane.b32.xlu0 %v1583, 20
  %v1711 = vpop.permute.xlu0 %1710
  %1776 = vrot.lane.b32.xlu0 %v366, 24
  %v1777 = vpop.permute.xlu0 %1776
  %1778 = vrot.lane.b32.xlu0 %v177, 24
  %v1779 = vpop.permute.xlu0 %1778
  %1780 = vrot.lane.b32.xlu0 %v367, 24
  %v1781 = vpop.permute.xlu0 %1780
  %1782 = vrot.lane.b32.xlu0 %v180, 24
  %v1783 = vpop.permute.xlu0 %1782
  %1784 = vrot.lane.b32.xlu0 %v368, 24
  %v1785 = vpop.permute.xlu0 %1784
  %1786 = vrot.lane.b32.xlu0 %v183, 24
  %v1787 = vpop.permute.xlu0 %1786
  %1788 = vrot.lane.b32.xlu0 %v369, 24
  %v1789 = vpop.permute.xlu0 %1788
  %1790 = vrot.lane.b32.xlu0 %v186, 24
  %v1791 = vpop.permute.xlu0 %1790
  %1792 = vrot.lane.b32.xlu0 %v370, 24
  %v1793 = vpop.permute.xlu0 %1792
  %1794 = vrot.lane.b32.xlu0 %v189, 24
  %v1795 = vpop.permute.xlu0 %1794
  %1796 = vrot.lane.b32.xlu0 %v371, 24
  %v1797 = vpop.permute.xlu0 %1796
  %1798 = vrot.lane.b32.xlu0 %v192, 24
  %v1799 = vpop.permute.xlu0 %1798
  %1800 = vrot.lane.b32.xlu0 %v372, 24
  %v1801 = vpop.permute.xlu0 %1800
  %1802 = vrot.lane.b32.xlu0 %v195, 24
  %v1803 = vpop.permute.xlu0 %1802
  %1804 = vrot.lane.b32.xlu0 %v373, 24
  %v1805 = vpop.permute.xlu0 %1804
  %1806 = vrot.lane.b32.xlu0 %v198, 24
  %v1807 = vpop.permute.xlu0 %1806
  %1808 = vrot.lane.b32.xlu0 %v374, 24
  %v1809 = vpop.permute.xlu0 %1808
  %1810 = vrot.lane.b32.xlu0 %v201, 24
  %v1811 = vpop.permute.xlu0 %1810
  %1812 = vrot.lane.b32.xlu0 %v375, 24
  %v1813 = vpop.permute.xlu0 %1812
  %1814 = vrot.lane.b32.xlu0 %v204, 24
  %v1815 = vpop.permute.xlu0 %1814
  %1816 = vrot.lane.b32.xlu0 %v376, 24
  %v1817 = vpop.permute.xlu0 %1816
  %1818 = vrot.lane.b32.xlu0 %v207, 24
  %v1819 = vpop.permute.xlu0 %1818
  %1820 = vrot.lane.b32.xlu0 %v377, 24
  %v1821 = vpop.permute.xlu0 %1820
  %1822 = vrot.lane.b32.xlu0 %v210, 24
  %v1823 = vpop.permute.xlu0 %1822
  %1824 = vrot.lane.b32.xlu0 %v378, 24
  %v1825 = vpop.permute.xlu0 %1824
  %1826 = vrot.lane.b32.xlu0 %v213, 24
  %v1827 = vpop.permute.xlu0 %1826
  %1828 = vrot.lane.b32.xlu0 %v379, 24
  %v1829 = vpop.permute.xlu0 %1828
  %1830 = vrot.lane.b32.xlu0 %v216, 24
  %v1831 = vpop.permute.xlu0 %1830
  %1832 = vrot.lane.b32.xlu0 %v380, 24
  %v1833 = vpop.permute.xlu0 %1832
  %1834 = vrot.lane.b32.xlu0 %v219, 24
  %v1835 = vpop.permute.xlu0 %1834
  %1836 = vrot.lane.b32.xlu0 %v364, 24
  %v1837 = vpop.permute.xlu0 %1836
  %1838 = vrot.lane.b32.xlu0 %v171, 24
  %v1839 = vpop.permute.xlu0 %1838
  %1840 = vrot.lane.b32.xlu0 %v382, 24
  %v1841 = vpop.permute.xlu0 %1840
  %1842 = vrot.lane.b32.xlu0 %v225, 24
  %v1843 = vpop.permute.xlu0 %1842
  %1844 = vrot.lane.b32.xlu0 %v383, 24
  %v1845 = vpop.permute.xlu0 %1844
  %1846 = vrot.lane.b32.xlu0 %v228, 24
  %v1847 = vpop.permute.xlu0 %1846
  %1848 = vrot.lane.b32.xlu0 %v384, 24
  %v1849 = vpop.permute.xlu0 %1848
  %1850 = vrot.lane.b32.xlu0 %v231, 24
  %v1851 = vpop.permute.xlu0 %1850
  %1852 = vrot.lane.b32.xlu0 %v385, 24
  %v1853 = vpop.permute.xlu0 %1852
  %1854 = vrot.lane.b32.xlu0 %v234, 24
  %v1855 = vpop.permute.xlu0 %1854
  %1856 = vrot.lane.b32.xlu0 %v386, 24
  %v1857 = vpop.permute.xlu0 %1856
  %1858 = vrot.lane.b32.xlu0 %v237, 24
  %v1859 = vpop.permute.xlu0 %1858
  %1860 = vrot.lane.b32.xlu0 %v387, 24
  %v1861 = vpop.permute.xlu0 %1860
  %1862 = vrot.lane.b32.xlu0 %v240, 24
  %v1863 = vpop.permute.xlu0 %1862
  %1864 = vrot.lane.b32.xlu0 %v388, 24
  %v1865 = vpop.permute.xlu0 %1864
  %1866 = vrot.lane.b32.xlu0 %v243, 24
  %v1867 = vpop.permute.xlu0 %1866
  %1868 = vrot.lane.b32.xlu0 %v389, 24
  %v1869 = vpop.permute.xlu0 %1868
  %1870 = vrot.lane.b32.xlu0 %v246, 24
  %v1871 = vpop.permute.xlu0 %1870
  %1872 = vrot.lane.b32.xlu0 %v390, 24
  %v1873 = vpop.permute.xlu0 %1872
  %1874 = vrot.lane.b32.xlu0 %v249, 24
  %v1875 = vpop.permute.xlu0 %1874
  %1876 = vrot.lane.b32.xlu0 %v391, 24
  %v1877 = vpop.permute.xlu0 %1876
  %1878 = vrot.lane.b32.xlu0 %v252, 24
  %v1879 = vpop.permute.xlu0 %1878
  %1880 = vrot.lane.b32.xlu0 %v392, 24
  %v1881 = vpop.permute.xlu0 %1880
  %1882 = vrot.lane.b32.xlu0 %v255, 24
  %v1883 = vpop.permute.xlu0 %1882
  %1884 = vrot.lane.b32.xlu0 %v393, 24
  %v1885 = vpop.permute.xlu0 %1884
  %1886 = vrot.lane.b32.xlu0 %v258, 24
  %v1887 = vpop.permute.xlu0 %1886
  %1888 = vrot.lane.b32.xlu0 %v394, 24
  %v1889 = vpop.permute.xlu0 %1888
  %1890 = vrot.lane.b32.xlu0 %v261, 24
  %v1891 = vpop.permute.xlu0 %1890
  %1892 = vrot.lane.b32.xlu0 %v395, 24
  %v1893 = vpop.permute.xlu0 %1892
  %1894 = vrot.lane.b32.xlu0 %v264, 24
  %v1895 = vpop.permute.xlu0 %1894
  %1896 = vrot.lane.b32.xlu0 %v396, 24
  %v1897 = vpop.permute.xlu0 %1896
  %1898 = vrot.lane.b32.xlu0 %v267, 24
  %v1899 = vpop.permute.xlu0 %1898
  %1962 = vrot.lane.b32.xlu0 %v505, 28
  %v1963 = vpop.permute.xlu0 %1962
  %1964 = vrot.lane.b32.xlu0 %v507, 28
  %v1965 = vpop.permute.xlu0 %1964
  %1966 = vrot.lane.b32.xlu0 %v510, 28
  %v1967 = vpop.permute.xlu0 %1966
  %1968 = vrot.lane.b32.xlu0 %v512, 28
  %v1969 = vpop.permute.xlu0 %1968
  %1970 = vrot.lane.b32.xlu0 %v515, 28
  %v1971 = vpop.permute.xlu0 %1970
  %1972 = vrot.lane.b32.xlu0 %v517, 28
  %v1973 = vpop.permute.xlu0 %1972
  %1974 = vrot.lane.b32.xlu0 %v520, 28
  %v1975 = vpop.permute.xlu0 %1974
  %1976 = vrot.lane.b32.xlu0 %v522, 28
  %v1977 = vpop.permute.xlu0 %1976
  %1978 = vrot.lane.b32.xlu0 %v525, 28
  %v1979 = vpop.permute.xlu0 %1978
  %1980 = vrot.lane.b32.xlu0 %v527, 28
  %v1981 = vpop.permute.xlu0 %1980
  %1982 = vrot.lane.b32.xlu0 %v530, 28
  %v1983 = vpop.permute.xlu0 %1982
  %1984 = vrot.lane.b32.xlu0 %v532, 28
  %v1985 = vpop.permute.xlu0 %1984
  %1986 = vrot.lane.b32.xlu0 %v535, 28
  %v1987 = vpop.permute.xlu0 %1986
  %1988 = vrot.lane.b32.xlu0 %v537, 28
  %v1989 = vpop.permute.xlu0 %1988
  %1990 = vrot.lane.b32.xlu0 %v540, 28
  %v1991 = vpop.permute.xlu0 %1990
  %1992 = vrot.lane.b32.xlu0 %v542, 28
  %v1993 = vpop.permute.xlu0 %1992
  %1994 = vrot.lane.b32.xlu0 %v545, 28
  %v1995 = vpop.permute.xlu0 %1994
  %1996 = vrot.lane.b32.xlu0 %v547, 28
  %v1997 = vpop.permute.xlu0 %1996
  %1998 = vrot.lane.b32.xlu0 %v550, 28
  %v1999 = vpop.permute.xlu0 %1998
  %2000 = vrot.lane.b32.xlu0 %v552, 28
  %v2001 = vpop.permute.xlu0 %2000
  %2002 = vrot.lane.b32.xlu0 %v555, 28
  %v2003 = vpop.permute.xlu0 %2002
  %2004 = vrot.lane.b32.xlu0 %v557, 28
  %v2005 = vpop.permute.xlu0 %2004
  %2006 = vrot.lane.b32.xlu0 %v560, 28
  %v2007 = vpop.permute.xlu0 %2006
  %2008 = vrot.lane.b32.xlu0 %v562, 28
  %v2009 = vpop.permute.xlu0 %2008
  %2010 = vrot.lane.b32.xlu0 %v565, 28
  %v2011 = vpop.permute.xlu0 %2010
  %2012 = vrot.lane.b32.xlu0 %v567, 28
  %v2013 = vpop.permute.xlu0 %2012
  %2014 = vrot.lane.b32.xlu0 %v570, 28
  %v2015 = vpop.permute.xlu0 %2014
  %2016 = vrot.lane.b32.xlu0 %v572, 28
  %v2017 = vpop.permute.xlu0 %2016
  %2018 = vrot.lane.b32.xlu0 %v1374, 28
  %v2019 = vpop.permute.xlu0 %2018
  %2020 = vrot.lane.b32.xlu0 %v1376, 28
  %v2021 = vpop.permute.xlu0 %2020
  %2022 = vrot.lane.b32.xlu0 %v495, 28
  %v2023 = vpop.permute.xlu0 %2022
  %2024 = vrot.lane.b32.xlu0 %v497, 28
  %v2025 = vpop.permute.xlu0 %2024
  %2026 = vrot.lane.b32.xlu0 %v580, 28
  %v2027 = vpop.permute.xlu0 %2026
  %2028 = vrot.lane.b32.xlu0 %v582, 28
  %v2029 = vpop.permute.xlu0 %2028
  %2030 = vrot.lane.b32.xlu0 %v585, 28
  %v2031 = vpop.permute.xlu0 %2030
  %2032 = vrot.lane.b32.xlu0 %v587, 28
  %v2033 = vpop.permute.xlu0 %2032
  %2034 = vrot.lane.b32.xlu0 %v590, 28
  %v2035 = vpop.permute.xlu0 %2034
  %2036 = vrot.lane.b32.xlu0 %v592, 28
  %v2037 = vpop.permute.xlu0 %2036
  %2038 = vrot.lane.b32.xlu0 %v595, 28
  %v2039 = vpop.permute.xlu0 %2038
  %2040 = vrot.lane.b32.xlu0 %v597, 28
  %v2041 = vpop.permute.xlu0 %2040
  %2042 = vrot.lane.b32.xlu0 %v600, 28
  %v2043 = vpop.permute.xlu0 %2042
  %2044 = vrot.lane.b32.xlu0 %v602, 28
  %v2045 = vpop.permute.xlu0 %2044
  %2046 = vrot.lane.b32.xlu0 %v605, 28
  %v2047 = vpop.permute.xlu0 %2046
  %2048 = vrot.lane.b32.xlu0 %v607, 28
  %v2049 = vpop.permute.xlu0 %2048
  %2050 = vrot.lane.b32.xlu0 %v610, 28
  %v2051 = vpop.permute.xlu0 %2050
  %2052 = vrot.lane.b32.xlu0 %v612, 28
  %v2053 = vpop.permute.xlu0 %2052
  %2054 = vrot.lane.b32.xlu0 %v615, 28
  %v2055 = vpop.permute.xlu0 %2054
  %2056 = vrot.lane.b32.xlu0 %v617, 28
  %v2057 = vpop.permute.xlu0 %2056
  %2058 = vrot.lane.b32.xlu0 %v620, 28
  %v2059 = vpop.permute.xlu0 %2058
  %2060 = vrot.lane.b32.xlu0 %v622, 28
  %v2061 = vpop.permute.xlu0 %2060
  %2062 = vrot.lane.b32.xlu0 %v625, 28
  %v2063 = vpop.permute.xlu0 %2062
  %2064 = vrot.lane.b32.xlu0 %v627, 28
  %v2065 = vpop.permute.xlu0 %2064
  %2066 = vrot.lane.b32.xlu0 %v630, 28
  %v2067 = vpop.permute.xlu0 %2066
  %2068 = vrot.lane.b32.xlu0 %v632, 28
  %v2069 = vpop.permute.xlu0 %2068
  %2070 = vrot.lane.b32.xlu0 %v635, 28
  %v2071 = vpop.permute.xlu0 %2070
  %2072 = vrot.lane.b32.xlu0 %v637, 28
  %v2073 = vpop.permute.xlu0 %2072
  %2074 = vrot.lane.b32.xlu0 %v640, 28
  %v2075 = vpop.permute.xlu0 %2074
  %2076 = vrot.lane.b32.xlu0 %v642, 28
  %v2077 = vpop.permute.xlu0 %2076
  %2078 = vrot.lane.b32.xlu0 %v645, 28
  %v2079 = vpop.permute.xlu0 %2078
  %2080 = vrot.lane.b32.xlu0 %v647, 28
  %v2081 = vpop.permute.xlu0 %2080
  %2082 = vrot.lane.b32.xlu0 %v1379, 28
  %v2083 = vpop.permute.xlu0 %2082
  %2084 = vrot.lane.b32.xlu0 %v1381, 28
  %v2085 = vpop.permute.xlu0 %2084
  %2148 = vrot.lane.b32.xlu0 %v847, 32
  %v2149 = vpop.permute.xlu0 %2148
  %2150 = vrot.lane.b32.xlu0 %v849, 32
  %v2151 = vpop.permute.xlu0 %2150
  %2152 = vrot.lane.b32.xlu0 %v852, 32
  %v2153 = vpop.permute.xlu0 %2152
  %2154 = vrot.lane.b32.xlu0 %v854, 32
  %v2155 = vpop.permute.xlu0 %2154
  %2156 = vrot.lane.b32.xlu0 %v857, 32
  %v2157 = vpop.permute.xlu0 %2156
  %2158 = vrot.lane.b32.xlu0 %v859, 32
  %v2159 = vpop.permute.xlu0 %2158
  %2160 = vrot.lane.b32.xlu0 %v862, 32
  %v2161 = vpop.permute.xlu0 %2160
  %2162 = vrot.lane.b32.xlu0 %v864, 32
  %v2163 = vpop.permute.xlu0 %2162
  %2164 = vrot.lane.b32.xlu0 %v867, 32
  %v2165 = vpop.permute.xlu0 %2164
  %2166 = vrot.lane.b32.xlu0 %v869, 32
  %v2167 = vpop.permute.xlu0 %2166
  %2168 = vrot.lane.b32.xlu0 %v872, 32
  %v2169 = vpop.permute.xlu0 %2168
  %2170 = vrot.lane.b32.xlu0 %v874, 32
  %v2171 = vpop.permute.xlu0 %2170
  %2172 = vrot.lane.b32.xlu0 %v877, 32
  %v2173 = vpop.permute.xlu0 %2172
  %2174 = vrot.lane.b32.xlu0 %v879, 32
  %v2175 = vpop.permute.xlu0 %2174
  %2176 = vrot.lane.b32.xlu0 %v882, 32
  %v2177 = vpop.permute.xlu0 %2176
  %2178 = vrot.lane.b32.xlu0 %v884, 32
  %v2179 = vpop.permute.xlu0 %2178
  %2180 = vrot.lane.b32.xlu0 %v887, 32
  %v2181 = vpop.permute.xlu0 %2180
  %2182 = vrot.lane.b32.xlu0 %v889, 32
  %v2183 = vpop.permute.xlu0 %2182
  %2184 = vrot.lane.b32.xlu0 %v892, 32
  %v2185 = vpop.permute.xlu0 %2184
  %2186 = vrot.lane.b32.xlu0 %v894, 32
  %v2187 = vpop.permute.xlu0 %2186
  %2188 = vrot.lane.b32.xlu0 %v897, 32
  %v2189 = vpop.permute.xlu0 %2188
  %2190 = vrot.lane.b32.xlu0 %v899, 32
  %v2191 = vpop.permute.xlu0 %2190
  %2192 = vrot.lane.b32.xlu0 %v902, 32
  %v2193 = vpop.permute.xlu0 %2192
  %2194 = vrot.lane.b32.xlu0 %v904, 32
  %v2195 = vpop.permute.xlu0 %2194
  %2196 = vrot.lane.b32.xlu0 %v907, 32
  %v2197 = vpop.permute.xlu0 %2196
  %2198 = vrot.lane.b32.xlu0 %v909, 32
  %v2199 = vpop.permute.xlu0 %2198
  %2200 = vrot.lane.b32.xlu0 %v912, 32
  %v2201 = vpop.permute.xlu0 %2200
  %2202 = vrot.lane.b32.xlu0 %v914, 32
  %v2203 = vpop.permute.xlu0 %2202
  %2204 = vrot.lane.b32.xlu0 %v1576, 32
  %v2205 = vpop.permute.xlu0 %2204
  %2206 = vrot.lane.b32.xlu0 %v1578, 32
  %v2207 = vpop.permute.xlu0 %2206
  %2208 = vrot.lane.b32.xlu0 %v837, 32
  %v2209 = vpop.permute.xlu0 %2208
  %2210 = vrot.lane.b32.xlu0 %v839, 32
  %v2211 = vpop.permute.xlu0 %2210
  %2212 = vrot.lane.b32.xlu0 %v922, 32
  %v2213 = vpop.permute.xlu0 %2212
  %2214 = vrot.lane.b32.xlu0 %v924, 32
  %v2215 = vpop.permute.xlu0 %2214
  %2216 = vrot.lane.b32.xlu0 %v927, 32
  %v2217 = vpop.permute.xlu0 %2216
  %2218 = vrot.lane.b32.xlu0 %v929, 32
  %v2219 = vpop.permute.xlu0 %2218
  %2220 = vrot.lane.b32.xlu0 %v932, 32
  %v2221 = vpop.permute.xlu0 %2220
  %2222 = vrot.lane.b32.xlu0 %v934, 32
  %v2223 = vpop.permute.xlu0 %2222
  %2224 = vrot.lane.b32.xlu0 %v937, 32
  %v2225 = vpop.permute.xlu0 %2224
  %2226 = vrot.lane.b32.xlu0 %v939, 32
  %v2227 = vpop.permute.xlu0 %2226
  %2228 = vrot.lane.b32.xlu0 %v942, 32
  %v2229 = vpop.permute.xlu0 %2228
  %2230 = vrot.lane.b32.xlu0 %v944, 32
  %v2231 = vpop.permute.xlu0 %2230
  %2232 = vrot.lane.b32.xlu0 %v947, 32
  %v2233 = vpop.permute.xlu0 %2232
  %2234 = vrot.lane.b32.xlu0 %v949, 32
  %v2235 = vpop.permute.xlu0 %2234
  %2236 = vrot.lane.b32.xlu0 %v952, 32
  %v2237 = vpop.permute.xlu0 %2236
  %2238 = vrot.lane.b32.xlu0 %v954, 32
  %v2239 = vpop.permute.xlu0 %2238
  %2240 = vrot.lane.b32.xlu0 %v957, 32
  %v2241 = vpop.permute.xlu0 %2240
  %2242 = vrot.lane.b32.xlu0 %v959, 32
  %v2243 = vpop.permute.xlu0 %2242
  %2244 = vrot.lane.b32.xlu0 %v962, 32
  %v2245 = vpop.permute.xlu0 %2244
  %2246 = vrot.lane.b32.xlu0 %v964, 32
  %v2247 = vpop.permute.xlu0 %2246
  %2248 = vrot.lane.b32.xlu0 %v967, 32
  %v2249 = vpop.permute.xlu0 %2248
  %2250 = vrot.lane.b32.xlu0 %v969, 32
  %v2251 = vpop.permute.xlu0 %2250
  %2252 = vrot.lane.b32.xlu0 %v972, 32
  %v2253 = vpop.permute.xlu0 %2252
  %2254 = vrot.lane.b32.xlu0 %v974, 32
  %v2255 = vpop.permute.xlu0 %2254
  %2256 = vrot.lane.b32.xlu0 %v977, 32
  %v2257 = vpop.permute.xlu0 %2256
  %2258 = vrot.lane.b32.xlu0 %v979, 32
  %v2259 = vpop.permute.xlu0 %2258
  %2260 = vrot.lane.b32.xlu0 %v982, 32
  %v2261 = vpop.permute.xlu0 %2260
  %2262 = vrot.lane.b32.xlu0 %v984, 32
  %v2263 = vpop.permute.xlu0 %2262
  %2264 = vrot.lane.b32.xlu0 %v987, 32
  %v2265 = vpop.permute.xlu0 %2264
  %2266 = vrot.lane.b32.xlu0 %v989, 32
  %v2267 = vpop.permute.xlu0 %2266
  %2268 = vrot.lane.b32.xlu0 %v1581, 32
  %v2269 = vpop.permute.xlu0 %2268
  %2270 = vrot.lane.b32.xlu0 %v1583, 32
  %v2271 = vpop.permute.xlu0 %2270
  %vm2334 = vcmask 31744
  %v2335 = vsel %vm2334, %v364, %v649
  %v2336 = vsel %vm2334, %v171, %v651
  %v2337 = vsel %vm2334, %v365, %v653
  %v2338 = vsel %vm2334, %v174, %v655
  %v2339 = vsel %vm2334, %v366, %v657
  %v2340 = vsel %vm2334, %v177, %v659
  %v2341 = vsel %vm2334, %v367, %v661
  %v2342 = vsel %vm2334, %v180, %v663
  %v2343 = vsel %vm2334, %v368, %v665
  %v2344 = vsel %vm2334, %v183, %v667
  %v2345 = vsel %vm2334, %v369, %v669
  %v2346 = vsel %vm2334, %v186, %v671
  %v2347 = vsel %vm2334, %v370, %v673
  %v2348 = vsel %vm2334, %v189, %v675
  %v2349 = vsel %vm2334, %v371, %v677
  %v2350 = vsel %vm2334, %v192, %v679
  %v2351 = vsel %vm2334, %v372, %v681
  %v2352 = vsel %vm2334, %v195, %v683
  %v2353 = vsel %vm2334, %v373, %v685
  %v2354 = vsel %vm2334, %v198, %v687
  %v2355 = vsel %vm2334, %v374, %v689
  %v2356 = vsel %vm2334, %v201, %v691
  %v2357 = vsel %vm2334, %v375, %v693
  %v2358 = vsel %vm2334, %v204, %v695
  %v2359 = vsel %vm2334, %v376, %v697
  %v2360 = vsel %vm2334, %v207, %v699
  %v2361 = vsel %vm2334, %v377, %v701
  %v2362 = vsel %vm2334, %v210, %v703
  %v2363 = vsel %vm2334, %v378, %v705
  %v2364 = vsel %vm2334, %v213, %v707
  %v2365 = vsel %vm2334, %v379, %v709
  %v2366 = vsel %vm2334, %v216, %v711
  %v2367 = vsel %vm2334, %v381, %v713
  %v2368 = vsel %vm2334, %v222, %v715
  %v2369 = vsel %vm2334, %v382, %v717
  %v2370 = vsel %vm2334, %v225, %v719
  %v2371 = vsel %vm2334, %v383, %v721
  %v2372 = vsel %vm2334, %v228, %v723
  %v2373 = vsel %vm2334, %v384, %v725
  %v2374 = vsel %vm2334, %v231, %v727
  %v2375 = vsel %vm2334, %v385, %v729
  %v2376 = vsel %vm2334, %v234, %v731
  %v2377 = vsel %vm2334, %v386, %v733
  %v2378 = vsel %vm2334, %v237, %v735
  %v2379 = vsel %vm2334, %v387, %v737
  %v2380 = vsel %vm2334, %v240, %v739
  %v2381 = vsel %vm2334, %v388, %v741
  %v2382 = vsel %vm2334, %v243, %v743
  %v2383 = vsel %vm2334, %v389, %v745
  %v2384 = vsel %vm2334, %v246, %v747
  %v2385 = vsel %vm2334, %v390, %v749
  %v2386 = vsel %vm2334, %v249, %v751
  %v2387 = vsel %vm2334, %v391, %v753
  %v2388 = vsel %vm2334, %v252, %v755
  %v2389 = vsel %vm2334, %v392, %v757
  %v2390 = vsel %vm2334, %v255, %v759
  %v2391 = vsel %vm2334, %v393, %v761
  %v2392 = vsel %vm2334, %v258, %v763
  %v2393 = vsel %vm2334, %v394, %v765
  %v2394 = vsel %vm2334, %v261, %v767
  %v2395 = vsel %vm2334, %v395, %v769
  %v2396 = vsel %vm2334, %v264, %v771
  %vm2397 = vcmask 64512
  %v2398 = vsel %vm2397, %v2335, %v991
  %v2399 = vsel %vm2397, %v2336, %v993
  %v2400 = vsel %vm2397, %v2337, %v995
  %v2401 = vsel %vm2397, %v2338, %v997
  %v2402 = vsel %vm2397, %v2339, %v999
  %v2403 = vsel %vm2397, %v2340, %v1001
  %v2404 = vsel %vm2397, %v2341, %v1003
  %v2405 = vsel %vm2397, %v2342, %v1005
  %v2406 = vsel %vm2397, %v2343, %v1007
  %v2407 = vsel %vm2397, %v2344, %v1009
  %v2408 = vsel %vm2397, %v2345, %v1011
  %v2409 = vsel %vm2397, %v2346, %v1013
  %v2410 = vsel %vm2397, %v2347, %v1015
  %v2411 = vsel %vm2397, %v2348, %v1017
  %v2412 = vsel %vm2397, %v2349, %v1019
  %v2413 = vsel %vm2397, %v2350, %v1021
  %v2414 = vsel %vm2397, %v2351, %v1023
  %v2415 = vsel %vm2397, %v2352, %v1025
  %v2416 = vsel %vm2397, %v2353, %v1027
  %v2417 = vsel %vm2397, %v2354, %v1029
  %v2418 = vsel %vm2397, %v2355, %v1031
  %v2419 = vsel %vm2397, %v2356, %v1033
  %v2420 = vsel %vm2397, %v2357, %v1035
  %v2421 = vsel %vm2397, %v2358, %v1037
  %v2422 = vsel %vm2397, %v2359, %v1039
  %v2423 = vsel %vm2397, %v2360, %v1041
  %v2424 = vsel %vm2397, %v2361, %v1043
  %v2425 = vsel %vm2397, %v2362, %v1045
  %v2426 = vsel %vm2397, %v2363, %v1047
  %v2427 = vsel %vm2397, %v2364, %v1049
  %v2428 = vsel %vm2397, %v2365, %v1051
  %v2429 = vsel %vm2397, %v2366, %v1053
  %v2430 = vsel %vm2397, %v2367, %v1055
  %v2431 = vsel %vm2397, %v2368, %v1057
  %v2432 = vsel %vm2397, %v2369, %v1059
  %v2433 = vsel %vm2397, %v2370, %v1061
  %v2434 = vsel %vm2397, %v2371, %v1063
  %v2435 = vsel %vm2397, %v2372, %v1065
  %v2436 = vsel %vm2397, %v2373, %v1067
  %v2437 = vsel %vm2397, %v2374, %v1069
  %v2438 = vsel %vm2397, %v2375, %v1071
  %v2439 = vsel %vm2397, %v2376, %v1073
  %v2440 = vsel %vm2397, %v2377, %v1075
  %v2441 = vsel %vm2397, %v2378, %v1077
  %v2442 = vsel %vm2397, %v2379, %v1079
  %v2443 = vsel %vm2397, %v2380, %v1081
  %v2444 = vsel %vm2397, %v2381, %v1083
  %v2445 = vsel %vm2397, %v2382, %v1085
  %v2446 = vsel %vm2397, %v2383, %v1087
  %v2447 = vsel %vm2397, %v2384, %v1089
  %v2448 = vsel %vm2397, %v2385, %v1091
  %v2449 = vsel %vm2397, %v2386, %v1093
  %v2450 = vsel %vm2397, %v2387, %v1095
  %v2451 = vsel %vm2397, %v2388, %v1097
  %v2452 = vsel %vm2397, %v2389, %v1099
  %v2453 = vsel %vm2397, %v2390, %v1101
  %v2454 = vsel %vm2397, %v2391, %v1103
  %v2455 = vsel %vm2397, %v2392, %v1105
  %v2456 = vsel %vm2397, %v2393, %v1107
  %v2457 = vsel %vm2397, %v2394, %v1109
  %v2458 = vsel %vm2397, %v2395, %v1111
  %v2459 = vsel %vm2397, %v2396, %v1113
  %vm2460 = vcmask 97280
  %v2461 = vsel %vm2460, %v2398, %v1179
  %v2462 = vsel %vm2460, %v2399, %v1181
  %v2463 = vsel %vm2460, %v2400, %v1183
  %v2464 = vsel %vm2460, %v2401, %v1185
  %v2465 = vsel %vm2460, %v2402, %v1187
  %v2466 = vsel %vm2460, %v2403, %v1189
  %v2467 = vsel %vm2460, %v2404, %v1191
  %v2468 = vsel %vm2460, %v2405, %v1193
  %v2469 = vsel %vm2460, %v2406, %v1195
  %v2470 = vsel %vm2460, %v2407, %v1197
  %v2471 = vsel %vm2460, %v2408, %v1199
  %v2472 = vsel %vm2460, %v2409, %v1201
  %v2473 = vsel %vm2460, %v2410, %v1203
  %v2474 = vsel %vm2460, %v2411, %v1205
  %v2475 = vsel %vm2460, %v2412, %v1207
  %v2476 = vsel %vm2460, %v2413, %v1209
  %v2477 = vsel %vm2460, %v2414, %v1211
  %v2478 = vsel %vm2460, %v2415, %v1213
  %v2479 = vsel %vm2460, %v2416, %v1215
  %v2480 = vsel %vm2460, %v2417, %v1217
  %v2481 = vsel %vm2460, %v2418, %v1219
  %v2482 = vsel %vm2460, %v2419, %v1221
  %v2483 = vsel %vm2460, %v2420, %v1223
  %v2484 = vsel %vm2460, %v2421, %v1225
  %v2485 = vsel %vm2460, %v2422, %v1227
  %v2486 = vsel %vm2460, %v2423, %v1229
  %v2487 = vsel %vm2460, %v2424, %v1231
  %v2488 = vsel %vm2460, %v2425, %v1233
  %v2489 = vsel %vm2460, %v2426, %v1235
  %v2490 = vsel %vm2460, %v2427, %v1237
  %v2491 = vsel %vm2460, %v2428, %v1239
  %v2492 = vsel %vm2460, %v2429, %v1241
  %v2493 = vsel %vm2460, %v2398, %v1243
  %v2494 = vsel %vm2460, %v2399, %v1245
  %v2495 = vsel %vm2460, %v2430, %v1247
  %v2496 = vsel %vm2460, %v2431, %v1249
  %v2497 = vsel %vm2460, %v2432, %v1251
  %v2498 = vsel %vm2460, %v2433, %v1253
  %v2499 = vsel %vm2460, %v2434, %v1255
  %v2500 = vsel %vm2460, %v2435, %v1257
  %v2501 = vsel %vm2460, %v2436, %v1259
  %v2502 = vsel %vm2460, %v2437, %v1261
  %v2503 = vsel %vm2460, %v2438, %v1263
  %v2504 = vsel %vm2460, %v2439, %v1265
  %v2505 = vsel %vm2460, %v2440, %v1267
  %v2506 = vsel %vm2460, %v2441, %v1269
  %v2507 = vsel %vm2460, %v2442, %v1271
  %v2508 = vsel %vm2460, %v2443, %v1273
  %v2509 = vsel %vm2460, %v2444, %v1275
  %v2510 = vsel %vm2460, %v2445, %v1277
  %v2511 = vsel %vm2460, %v2446, %v1279
  %v2512 = vsel %vm2460, %v2447, %v1281
  %v2513 = vsel %vm2460, %v2448, %v1283
  %v2514 = vsel %vm2460, %v2449, %v1285
  %v2515 = vsel %vm2460, %v2450, %v1287
  %v2516 = vsel %vm2460, %v2451, %v1289
  %v2517 = vsel %vm2460, %v2452, %v1291
  %v2518 = vsel %vm2460, %v2453, %v1293
  %v2519 = vsel %vm2460, %v2454, %v1295
  %v2520 = vsel %vm2460, %v2455, %v1297
  %v2521 = vsel %vm2460, %v2456, %v1299
  %v2522 = vsel %vm2460, %v2457, %v1301
  %v2523 = vsel %vm2460, %v2458, %v1303
  %v2524 = vsel %vm2460, %v2459, %v1305
  %vm2525 = vcmask 130048
  %v2526 = vsel %vm2525, %v2461, %v1383
  %v2527 = vsel %vm2525, %v2462, %v1385
  %v2528 = vsel %vm2525, %v2463, %v1387
  %v2529 = vsel %vm2525, %v2464, %v1389
  %v2530 = vsel %vm2525, %v2465, %v1391
  %v2531 = vsel %vm2525, %v2466, %v1393
  %v2532 = vsel %vm2525, %v2467, %v1395
  %v2533 = vsel %vm2525, %v2468, %v1397
  %v2534 = vsel %vm2525, %v2469, %v1399
  %v2535 = vsel %vm2525, %v2470, %v1401
  %v2536 = vsel %vm2525, %v2471, %v1403
  %v2537 = vsel %vm2525, %v2472, %v1405
  %v2538 = vsel %vm2525, %v2473, %v1407
  %v2539 = vsel %vm2525, %v2474, %v1409
  %v2540 = vsel %vm2525, %v2475, %v1411
  %v2541 = vsel %vm2525, %v2476, %v1413
  %v2542 = vsel %vm2525, %v2477, %v1415
  %v2543 = vsel %vm2525, %v2478, %v1417
  %v2544 = vsel %vm2525, %v2479, %v1419
  %v2545 = vsel %vm2525, %v2480, %v1421
  %v2546 = vsel %vm2525, %v2481, %v1423
  %v2547 = vsel %vm2525, %v2482, %v1425
  %v2548 = vsel %vm2525, %v2483, %v1427
  %v2549 = vsel %vm2525, %v2484, %v1429
  %v2550 = vsel %vm2525, %v2485, %v1431
  %v2551 = vsel %vm2525, %v2486, %v1433
  %v2552 = vsel %vm2525, %v2487, %v1435
  %v2553 = vsel %vm2525, %v2488, %v1437
  %v2554 = vsel %vm2525, %v2489, %v1439
  %v2555 = vsel %vm2525, %v2490, %v1441
  %v2556 = vsel %vm2525, %v2491, %v1443
  %v2557 = vsel %vm2525, %v2492, %v1445
  %v2558 = vsel %vm2525, %v2493, %v1447
  %v2559 = vsel %vm2525, %v2494, %v1449
  %v2560 = vsel %vm2525, %v2495, %v1451
  %v2561 = vsel %vm2525, %v2496, %v1453
  %v2562 = vsel %vm2525, %v2497, %v1455
  %v2563 = vsel %vm2525, %v2498, %v1457
  %v2564 = vsel %vm2525, %v2499, %v1459
  %v2565 = vsel %vm2525, %v2500, %v1461
  %v2566 = vsel %vm2525, %v2501, %v1463
  %v2567 = vsel %vm2525, %v2502, %v1465
  %v2568 = vsel %vm2525, %v2503, %v1467
  %v2569 = vsel %vm2525, %v2504, %v1469
  %v2570 = vsel %vm2525, %v2505, %v1471
  %v2571 = vsel %vm2525, %v2506, %v1473
  %v2572 = vsel %vm2525, %v2507, %v1475
  %v2573 = vsel %vm2525, %v2508, %v1477
  %v2574 = vsel %vm2525, %v2509, %v1479
  %v2575 = vsel %vm2525, %v2510, %v1481
  %v2576 = vsel %vm2525, %v2511, %v1483
  %v2577 = vsel %vm2525, %v2512, %v1485
  %v2578 = vsel %vm2525, %v2513, %v1487
  %v2579 = vsel %vm2525, %v2514, %v1489
  %v2580 = vsel %vm2525, %v2515, %v1491
  %v2581 = vsel %vm2525, %v2516, %v1493
  %v2582 = vsel %vm2525, %v2517, %v1495
  %v2583 = vsel %vm2525, %v2518, %v1497
  %v2584 = vsel %vm2525, %v2519, %v1499
  %v2585 = vsel %vm2525, %v2520, %v1501
  %v2586 = vsel %vm2525, %v2521, %v1503
  %v2587 = vsel %vm2525, %v2522, %v1505
  %v2588 = vsel %vm2525, %v2523, %v1507
  %v2589 = vsel %vm2525, %v2524, %v1509
  %vm2590 = vcmask 162816
  %v2591 = vsel %vm2590, %v2526, %v1585
  %v2592 = vsel %vm2590, %v2527, %v1587
  %v2593 = vsel %vm2590, %v2528, %v1589
  %v2594 = vsel %vm2590, %v2529, %v1591
  %v2595 = vsel %vm2590, %v2530, %v1593
  %v2596 = vsel %vm2590, %v2531, %v1595
  %v2597 = vsel %vm2590, %v2532, %v1597
  %v2598 = vsel %vm2590, %v2533, %v1599
  %v2599 = vsel %vm2590, %v2534, %v1601
  %v2600 = vsel %vm2590, %v2535, %v1603
  %v2601 = vsel %vm2590, %v2536, %v1605
  %v2602 = vsel %vm2590, %v2537, %v1607
  %v2603 = vsel %vm2590, %v2538, %v1609
  %v2604 = vsel %vm2590, %v2539, %v1611
  %v2605 = vsel %vm2590, %v2540, %v1613
  %v2606 = vsel %vm2590, %v2541, %v1615
  %v2607 = vsel %vm2590, %v2542, %v1617
  %v2608 = vsel %vm2590, %v2543, %v1619
  %v2609 = vsel %vm2590, %v2544, %v1621
  %v2610 = vsel %vm2590, %v2545, %v1623
  %v2611 = vsel %vm2590, %v2546, %v1625
  %v2612 = vsel %vm2590, %v2547, %v1627
  %v2613 = vsel %vm2590, %v2548, %v1629
  %v2614 = vsel %vm2590, %v2549, %v1631
  %v2615 = vsel %vm2590, %v2550, %v1633
  %v2616 = vsel %vm2590, %v2551, %v1635
  %v2617 = vsel %vm2590, %v2552, %v1637
  %v2618 = vsel %vm2590, %v2553, %v1639
  %v2619 = vsel %vm2590, %v2554, %v1641
  %v2620 = vsel %vm2590, %v2555, %v1643
  %v2621 = vsel %vm2590, %v2556, %v1645
  %v2622 = vsel %vm2590, %v2557, %v1647
  %v2623 = vsel %vm2590, %v2558, %v1649
  %v2624 = vsel %vm2590, %v2559, %v1651
  %v2625 = vsel %vm2590, %v2560, %v1653
  %v2626 = vsel %vm2590, %v2561, %v1655
  %v2627 = vsel %vm2590, %v2562, %v1657
  %v2628 = vsel %vm2590, %v2563, %v1659
  %v2629 = vsel %vm2590, %v2564, %v1661
  %v2630 = vsel %vm2590, %v2565, %v1663
  %v2631 = vsel %vm2590, %v2566, %v1665
  %v2632 = vsel %vm2590, %v2567, %v1667
  %v2633 = vsel %vm2590, %v2568, %v1669
  %v2634 = vsel %vm2590, %v2569, %v1671
  %v2635 = vsel %vm2590, %v2570, %v1673
  %v2636 = vsel %vm2590, %v2571, %v1675
  %v2637 = vsel %vm2590, %v2572, %v1677
  %v2638 = vsel %vm2590, %v2573, %v1679
  %v2639 = vsel %vm2590, %v2574, %v1681
  %v2640 = vsel %vm2590, %v2575, %v1683
  %v2641 = vsel %vm2590, %v2576, %v1685
  %v2642 = vsel %vm2590, %v2577, %v1687
  %v2643 = vsel %vm2590, %v2578, %v1689
  %v2644 = vsel %vm2590, %v2579, %v1691
  %v2645 = vsel %vm2590, %v2580, %v1693
  %v2646 = vsel %vm2590, %v2581, %v1695
  %v2647 = vsel %vm2590, %v2582, %v1697
  %v2648 = vsel %vm2590, %v2583, %v1699
  %v2649 = vsel %vm2590, %v2584, %v1701
  %v2650 = vsel %vm2590, %v2585, %v1703
  %v2651 = vsel %vm2590, %v2586, %v1705
  %v2652 = vsel %vm2590, %v2587, %v1707
  %v2653 = vsel %vm2590, %v2588, %v1709
  %v2654 = vsel %vm2590, %v2589, %v1711
  %vm2655 = vcmask 195584
  %v2656 = vsel %vm2655, %v2591, %v1777
  %v2657 = vsel %vm2655, %v2592, %v1779
  %v2658 = vsel %vm2655, %v2593, %v1781
  %v2659 = vsel %vm2655, %v2594, %v1783
  %v2660 = vsel %vm2655, %v2595, %v1785
  %v2661 = vsel %vm2655, %v2596, %v1787
  %v2662 = vsel %vm2655, %v2597, %v1789
  %v2663 = vsel %vm2655, %v2598, %v1791
  %v2664 = vsel %vm2655, %v2599, %v1793
  %v2665 = vsel %vm2655, %v2600, %v1795
  %v2666 = vsel %vm2655, %v2601, %v1797
  %v2667 = vsel %vm2655, %v2602, %v1799
  %v2668 = vsel %vm2655, %v2603, %v1801
  %v2669 = vsel %vm2655, %v2604, %v1803
  %v2670 = vsel %vm2655, %v2605, %v1805
  %v2671 = vsel %vm2655, %v2606, %v1807
  %v2672 = vsel %vm2655, %v2607, %v1809
  %v2673 = vsel %vm2655, %v2608, %v1811
  %v2674 = vsel %vm2655, %v2609, %v1813
  %v2675 = vsel %vm2655, %v2610, %v1815
  %v2676 = vsel %vm2655, %v2611, %v1817
  %v2677 = vsel %vm2655, %v2612, %v1819
  %v2678 = vsel %vm2655, %v2613, %v1821
  %v2679 = vsel %vm2655, %v2614, %v1823
  %v2680 = vsel %vm2655, %v2615, %v1825
  %v2681 = vsel %vm2655, %v2616, %v1827
  %v2682 = vsel %vm2655, %v2617, %v1829
  %v2683 = vsel %vm2655, %v2618, %v1831
  %v2684 = vsel %vm2655, %v2619, %v1833
  %v2685 = vsel %vm2655, %v2620, %v1835
  %v2686 = vsel %vm2655, %v2621, %v1837
  %v2687 = vsel %vm2655, %v2622, %v1839
  %v2688 = vsel %vm2655, %v2623, %v1841
  %v2689 = vsel %vm2655, %v2624, %v1843
  %v2690 = vsel %vm2655, %v2625, %v1845
  %v2691 = vsel %vm2655, %v2626, %v1847
  %v2692 = vsel %vm2655, %v2627, %v1849
  %v2693 = vsel %vm2655, %v2628, %v1851
  %v2694 = vsel %vm2655, %v2629, %v1853
  %v2695 = vsel %vm2655, %v2630, %v1855
  %v2696 = vsel %vm2655, %v2631, %v1857
  %v2697 = vsel %vm2655, %v2632, %v1859
  %v2698 = vsel %vm2655, %v2633, %v1861
  %v2699 = vsel %vm2655, %v2634, %v1863
  %v2700 = vsel %vm2655, %v2635, %v1865
  %v2701 = vsel %vm2655, %v2636, %v1867
  %v2702 = vsel %vm2655, %v2637, %v1869
  %v2703 = vsel %vm2655, %v2638, %v1871
  %v2704 = vsel %vm2655, %v2639, %v1873
  %v2705 = vsel %vm2655, %v2640, %v1875
  %v2706 = vsel %vm2655, %v2641, %v1877
  %v2707 = vsel %vm2655, %v2642, %v1879
  %v2708 = vsel %vm2655, %v2643, %v1881
  %v2709 = vsel %vm2655, %v2644, %v1883
  %v2710 = vsel %vm2655, %v2645, %v1885
  %v2711 = vsel %vm2655, %v2646, %v1887
  %v2712 = vsel %vm2655, %v2647, %v1889
  %v2713 = vsel %vm2655, %v2648, %v1891
  %v2714 = vsel %vm2655, %v2649, %v1893
  %v2715 = vsel %vm2655, %v2650, %v1895
  %v2716 = vsel %vm2655, %v2651, %v1897
  %v2717 = vsel %vm2655, %v2652, %v1899
  %v2718 = vsel %vm2655, %v2653, %v1837
  %v2719 = vsel %vm2655, %v2654, %v1839
  %vm2720 = vcmask 228352
  %v2721 = vsel %vm2720, %v2656, %v1963
  %v2722 = vsel %vm2720, %v2657, %v1965
  %v2723 = vsel %vm2720, %v2658, %v1967
  %v2724 = vsel %vm2720, %v2659, %v1969
  %v2725 = vsel %vm2720, %v2660, %v1971
  %v2726 = vsel %vm2720, %v2661, %v1973
  %v2727 = vsel %vm2720, %v2662, %v1975
  %v2728 = vsel %vm2720, %v2663, %v1977
  %v2729 = vsel %vm2720, %v2664, %v1979
  %v2730 = vsel %vm2720, %v2665, %v1981
  %v2731 = vsel %vm2720, %v2666, %v1983
  %v2732 = vsel %vm2720, %v2667, %v1985
  %v2733 = vsel %vm2720, %v2668, %v1987
  %v2734 = vsel %vm2720, %v2669, %v1989
  %v2735 = vsel %vm2720, %v2670, %v1991
  %v2736 = vsel %vm2720, %v2671, %v1993
  %v2737 = vsel %vm2720, %v2672, %v1995
  %v2738 = vsel %vm2720, %v2673, %v1997
  %v2739 = vsel %vm2720, %v2674, %v1999
  %v2740 = vsel %vm2720, %v2675, %v2001
  %v2741 = vsel %vm2720, %v2676, %v2003
  %v2742 = vsel %vm2720, %v2677, %v2005
  %v2743 = vsel %vm2720, %v2678, %v2007
  %v2744 = vsel %vm2720, %v2679, %v2009
  %v2745 = vsel %vm2720, %v2680, %v2011
  %v2746 = vsel %vm2720, %v2681, %v2013
  %v2747 = vsel %vm2720, %v2682, %v2015
  %v2748 = vsel %vm2720, %v2683, %v2017
  %v2749 = vsel %vm2720, %v2684, %v2019
  %v2750 = vsel %vm2720, %v2685, %v2021
  %v2751 = vsel %vm2720, %v2686, %v2023
  %v2752 = vsel %vm2720, %v2687, %v2025
  %v2753 = vsel %vm2720, %v2688, %v2027
  %v2754 = vsel %vm2720, %v2689, %v2029
  %v2755 = vsel %vm2720, %v2690, %v2031
  %v2756 = vsel %vm2720, %v2691, %v2033
  %v2757 = vsel %vm2720, %v2692, %v2035
  %v2758 = vsel %vm2720, %v2693, %v2037
  %v2759 = vsel %vm2720, %v2694, %v2039
  %v2760 = vsel %vm2720, %v2695, %v2041
  %v2761 = vsel %vm2720, %v2696, %v2043
  %v2762 = vsel %vm2720, %v2697, %v2045
  %v2763 = vsel %vm2720, %v2698, %v2047
  %v2764 = vsel %vm2720, %v2699, %v2049
  %v2765 = vsel %vm2720, %v2700, %v2051
  %v2766 = vsel %vm2720, %v2701, %v2053
  %v2767 = vsel %vm2720, %v2702, %v2055
  %v2768 = vsel %vm2720, %v2703, %v2057
  %v2769 = vsel %vm2720, %v2704, %v2059
  %v2770 = vsel %vm2720, %v2705, %v2061
  %v2771 = vsel %vm2720, %v2706, %v2063
  %v2772 = vsel %vm2720, %v2707, %v2065
  %v2773 = vsel %vm2720, %v2708, %v2067
  %v2774 = vsel %vm2720, %v2709, %v2069
  %v2775 = vsel %vm2720, %v2710, %v2071
  %v2776 = vsel %vm2720, %v2711, %v2073
  %v2777 = vsel %vm2720, %v2712, %v2075
  %v2778 = vsel %vm2720, %v2713, %v2077
  %v2779 = vsel %vm2720, %v2714, %v2079
  %v2780 = vsel %vm2720, %v2715, %v2081
  %v2781 = vsel %vm2720, %v2716, %v2083
  %v2782 = vsel %vm2720, %v2717, %v2085
  %v2783 = vsel %vm2720, %v2718, %v2023
  %v2784 = vsel %vm2720, %v2719, %v2025
  %vm2785 = vcmask 261120
  %v2786 = vsel %vm2785, %v2721, %v2149
  %v2787 = vsel %vm2785, %v2722, %v2151
  %v2788 = vsel %vm2785, %v2723, %v2153
  %v2789 = vsel %vm2785, %v2724, %v2155
  %v2790 = vsel %vm2785, %v2725, %v2157
  %v2791 = vsel %vm2785, %v2726, %v2159
  %v2792 = vsel %vm2785, %v2727, %v2161
  %v2793 = vsel %vm2785, %v2728, %v2163
  %v2794 = vsel %vm2785, %v2729, %v2165
  %v2795 = vsel %vm2785, %v2730, %v2167
  %v2796 = vsel %vm2785, %v2731, %v2169
  %v2797 = vsel %vm2785, %v2732, %v2171
  %v2798 = vsel %vm2785, %v2733, %v2173
  %v2799 = vsel %vm2785, %v2734, %v2175
  %v2800 = vsel %vm2785, %v2735, %v2177
  %v2801 = vsel %vm2785, %v2736, %v2179
  %v2802 = vsel %vm2785, %v2737, %v2181
  %v2803 = vsel %vm2785, %v2738, %v2183
  %v2804 = vsel %vm2785, %v2739, %v2185
  %v2805 = vsel %vm2785, %v2740, %v2187
  %v2806 = vsel %vm2785, %v2741, %v2189
  %v2807 = vsel %vm2785, %v2742, %v2191
  %v2808 = vsel %vm2785, %v2743, %v2193
  %v2809 = vsel %vm2785, %v2744, %v2195
  %v2810 = vsel %vm2785, %v2745, %v2197
  %v2811 = vsel %vm2785, %v2746, %v2199
  %v2812 = vsel %vm2785, %v2747, %v2201
  %v2813 = vsel %vm2785, %v2748, %v2203
  %v2814 = vsel %vm2785, %v2749, %v2205
  %v2815 = vsel %vm2785, %v2750, %v2207
  %v2816 = vsel %vm2785, %v2751, %v2209
  %v2817 = vsel %vm2785, %v2752, %v2211
  %v2818 = vsel %vm2785, %v2753, %v2213
  %v2819 = vsel %vm2785, %v2754, %v2215
  %v2820 = vsel %vm2785, %v2755, %v2217
  %v2821 = vsel %vm2785, %v2756, %v2219
  %v2822 = vsel %vm2785, %v2757, %v2221
  %v2823 = vsel %vm2785, %v2758, %v2223
  %v2824 = vsel %vm2785, %v2759, %v2225
  %v2825 = vsel %vm2785, %v2760, %v2227
  %v2826 = vsel %vm2785, %v2761, %v2229
  %v2827 = vsel %vm2785, %v2762, %v2231
  %v2828 = vsel %vm2785, %v2763, %v2233
  %v2829 = vsel %vm2785, %v2764, %v2235
  %v2830 = vsel %vm2785, %v2765, %v2237
  %v2831 = vsel %vm2785, %v2766, %v2239
  %v2832 = vsel %vm2785, %v2767, %v2241
  %v2833 = vsel %vm2785, %v2768, %v2243
  %v2834 = vsel %vm2785, %v2769, %v2245
  %v2835 = vsel %vm2785, %v2770, %v2247
  %v2836 = vsel %vm2785, %v2771, %v2249
  %v2837 = vsel %vm2785, %v2772, %v2251
  %v2838 = vsel %vm2785, %v2773, %v2253
  %v2839 = vsel %vm2785, %v2774, %v2255
  %v2840 = vsel %vm2785, %v2775, %v2257
  %v2841 = vsel %vm2785, %v2776, %v2259
  %v2842 = vsel %vm2785, %v2777, %v2261
  %v2843 = vsel %vm2785, %v2778, %v2263
  %v2844 = vsel %vm2785, %v2779, %v2265
  %v2845 = vsel %vm2785, %v2780, %v2267
  %v2846 = vsel %vm2785, %v2781, %v2269
  %v2847 = vsel %vm2785, %v2782, %v2271
  %v2848 = vsel %vm2785, %v2783, %v2209
  %v2849 = vsel %vm2785, %v2784, %v2211
  %vm2850 = vcmask 293888
  %v2852 = vsel %vm2850, %v2786, 0
  %v2855 = vsel %vm2850, %v2787, 0
  %v2858 = vsel %vm2850, %v2788, 0
  %v2861 = vsel %vm2850, %v2789, 0
  %v2864 = vsel %vm2850, %v2790, 0
  %v2867 = vsel %vm2850, %v2791, 0
  %v2870 = vsel %vm2850, %v2792, 0
  %v2873 = vsel %vm2850, %v2793, 0
  %v2876 = vsel %vm2850, %v2794, 0
  %v2879 = vsel %vm2850, %v2795, 0
  %v2882 = vsel %vm2850, %v2796, 0
  %v2885 = vsel %vm2850, %v2797, 0
  %v2888 = vsel %vm2850, %v2798, 0
  %v2891 = vsel %vm2850, %v2799, 0
  %v2894 = vsel %vm2850, %v2800, 0
  %v2897 = vsel %vm2850, %v2801, 0
  %v2900 = vsel %vm2850, %v2802, 0
  %v2903 = vsel %vm2850, %v2803, 0
  %v2906 = vsel %vm2850, %v2804, 0
  %v2909 = vsel %vm2850, %v2805, 0
  %v2912 = vsel %vm2850, %v2806, 0
  %v2915 = vsel %vm2850, %v2807, 0
  %v2918 = vsel %vm2850, %v2808, 0
  %v2921 = vsel %vm2850, %v2809, 0
  %v2924 = vsel %vm2850, %v2810, 0
  %v2927 = vsel %vm2850, %v2811, 0
  %v2930 = vsel %vm2850, %v2812, 0
  %v2933 = vsel %vm2850, %v2813, 0
  %v2936 = vsel %vm2850, %v2814, 0
  %v2939 = vsel %vm2850, %v2815, 0
  %v2942 = vsel %vm2850, %v2816, 0
  %v2945 = vsel %vm2850, %v2817, 0
  %v2948 = vsel %vm2850, %v2818, 0
  %v2951 = vsel %vm2850, %v2819, 0
  %v2954 = vsel %vm2850, %v2820, 0
  %v2957 = vsel %vm2850, %v2821, 0
  %v2960 = vsel %vm2850, %v2822, 0
  %v2963 = vsel %vm2850, %v2823, 0
  %v2966 = vsel %vm2850, %v2824, 0
  %v2969 = vsel %vm2850, %v2825, 0
  %v2972 = vsel %vm2850, %v2826, 0
  %v2975 = vsel %vm2850, %v2827, 0
  %v2978 = vsel %vm2850, %v2828, 0
  %v2981 = vsel %vm2850, %v2829, 0
  %v2984 = vsel %vm2850, %v2830, 0
  %v2987 = vsel %vm2850, %v2831, 0
  %v2990 = vsel %vm2850, %v2832, 0
  %v2993 = vsel %vm2850, %v2833, 0
  %v2996 = vsel %vm2850, %v2834, 0
  %v2999 = vsel %vm2850, %v2835, 0
  %v3002 = vsel %vm2850, %v2836, 0
  %v3005 = vsel %vm2850, %v2837, 0
  %v3008 = vsel %vm2850, %v2838, 0
  %v3011 = vsel %vm2850, %v2839, 0
  %v3014 = vsel %vm2850, %v2840, 0
  %v3017 = vsel %vm2850, %v2841, 0
  %v3020 = vsel %vm2850, %v2842, 0
  %v3023 = vsel %vm2850, %v2843, 0
  %v3026 = vsel %vm2850, %v2844, 0
  %v3029 = vsel %vm2850, %v2845, 0
  %v3032 = vsel %vm2850, %v2846, 0
  %v3035 = vsel %vm2850, %v2847, 0
  %v3038 = vsel %vm2850, %v2848, 0
  %v3041 = vsel %vm2850, %v2849, 0
  %vm3043 = vcmask 1043456
  %v3045 = vsel %vm3043, %v103, 0
  %3047 = vmatprep.subr.mxu0 0.0
  %3048 = vmatpush1.msra.mxu0 0.0
  %3049 = vmatprep.subr.mxu0 0.0
  %3050 = vmatpush1.msra.mxu0 0.0
  %3051 = vmatprep.subr.mxu0 0.0
  %3052 = vmatpush1.msra.mxu0 0.0
  %3053 = vmatprep.subr.mxu0 0.0
  %3054 = vmatpush1.msra.mxu0 0.0
  %3055 = vmatprep.subr.mxu0 0.0
  %3056 = vmatpush1.msra.mxu0 0.0
  %3057 = vmatprep.subr.mxu0 0.0
  %3058 = vmatpush1.msra.mxu0 0.0
  %3059 = vmatprep.subr.mxu0 0.0
  %3060 = vmatpush1.msra.mxu0 0.0
  %3061 = vmatprep.subr.mxu0 0.0
  %3062 = vmatpush1.msra.mxu0 0.0
  %3063 = vmatprep.subr.mxu0 0.0
  %3064 = vmatpush1.msra.mxu0 0.0
  %3065 = vmatprep.subr.mxu0 0.0
  %3066 = vmatpush1.msra.mxu0 0.0
  %3067 = vmatprep.subr.mxu0 0.0
  %3068 = vmatpush1.msra.mxu0 0.0
  %3069 = vmatprep.subr.mxu0 0.0
  %3070 = vmatpush1.msra.mxu0 %v3045
  %3071 = vmatprep.subr.mxu0 0.0
  %3072 = vmatpush1.msra.mxu0 %v102
  %3073 = vmatprep.subr.mxu0 0.0
  %3074 = vmatpush1.msra.mxu0 %v101
  %3075 = vmatprep.subr.mxu0 0.0
  %3076 = vmatpush1.msra.mxu0 %v100
  %3077 = vmatprep.subr.mxu0 0.0
  %3078 = vmatpush1.msra.mxu0 %v99
  %3079 = vmatprep.subr.mxu0 0.0
  %3080 = vmatpush2.msra.mxu0 0.0
  %3081 = vmatprep.subr.mxu0 0.0
  %3082 = vmatpush2.msra.mxu0 0.0
  %3083 = vmatprep.subr.mxu0 0.0
  %3084 = vmatpush2.msra.mxu0 0.0
  %3085 = vmatprep.subr.mxu0 0.0
  %3086 = vmatpush2.msra.mxu0 0.0
  %3087 = vmatprep.subr.mxu0 0.0
  %3088 = vmatpush2.msra.mxu0 0.0
  %3089 = vmatprep.subr.mxu0 0.0
  %3090 = vmatpush2.msra.mxu0 0.0
  %3091 = vmatprep.subr.mxu0 0.0
  %3092 = vmatpush2.msra.mxu0 0.0
  %3093 = vmatprep.subr.mxu0 0.0
  %3094 = vmatpush2.msra.mxu0 0.0
  %3095 = vmatprep.subr.mxu0 0.0
  %3096 = vmatpush2.msra.mxu0 0.0
  %3097 = vmatprep.subr.mxu0 0.0
  %3098 = vmatpush2.msra.mxu0 0.0
  %3099 = vmatprep.subr.mxu0 0.0
  %3100 = vmatpush2.msra.mxu0 0.0
  %3101 = vmatprep.subr.mxu0 0.0
  %3102 = vmatpush2.msra.mxu0 0.0
  %3103 = vmatprep.subr.mxu0 0.0
  %3104 = vmatpush2.msra.mxu0 0.0
  %3105 = vmatprep.subr.mxu0 0.0
  %3106 = vmatpush2.msra.mxu0 0.0
  %3107 = vmatprep.subr.mxu0 0.0
  %3108 = vmatpush2.msra.mxu0 0.0
  %3109 = vmatprep.subr.mxu0 0.0
  %3110 = vmatpush2.msra.mxu0 0.0
  %3111 = vmatprep.mubr.f32.mxu0 0.0
  %3112 = vmatmul.mubr.f32.gmra.mxu0 %v2852
  %v3113 = vpop.f32.mrf.mxu0
  %v3114 = vadd.f32 0.0, %v3113
  %v3115 = vpop.f32.mrf.mxu0
  %3116 = vmatprep.mubr.f32.mxu0 0.0
  %3117 = vmatmul.mubr.f32.gmra.mxu0 %v2855
  %v3118 = vpop.f32.mrf.mxu0
  %v3119 = vadd.f32 0.0, %v3118
  %v3120 = vpop.f32.mrf.mxu0
  %3121 = vmatprep.mubr.f32.mxu0 0.0
  %3122 = vmatmul.mubr.f32.gmra.mxu0 %v2858
  %v3123 = vpop.f32.mrf.mxu0
  %v3124 = vadd.f32 0.0, %v3123
  %v3125 = vpop.f32.mrf.mxu0
  %3126 = vmatprep.mubr.f32.mxu0 0.0
  %3127 = vmatmul.mubr.f32.gmra.mxu0 %v2861
  %v3128 = vpop.f32.mrf.mxu0
  %v3129 = vadd.f32 0.0, %v3128
  %v3130 = vpop.f32.mrf.mxu0
  %3131 = vmatprep.mubr.f32.mxu0 0.0
  %3132 = vmatmul.mubr.f32.gmra.mxu0 %v2864
  %v3133 = vpop.f32.mrf.mxu0
  %v3134 = vadd.f32 0.0, %v3133
  %v3135 = vpop.f32.mrf.mxu0
  %3136 = vmatprep.mubr.f32.mxu0 0.0
  %3137 = vmatmul.mubr.f32.gmra.mxu0 %v2867
  %v3138 = vpop.f32.mrf.mxu0
  %v3139 = vadd.f32 0.0, %v3138
  %v3140 = vpop.f32.mrf.mxu0
  %3141 = vmatprep.mubr.f32.mxu0 0.0
  %3142 = vmatmul.mubr.f32.gmra.mxu0 %v2870
  %v3143 = vpop.f32.mrf.mxu0
  %v3144 = vadd.f32 0.0, %v3143
  %v3145 = vpop.f32.mrf.mxu0
  %3146 = vmatprep.mubr.f32.mxu0 0.0
  %3147 = vmatmul.mubr.f32.gmra.mxu0 %v2873
  %v3148 = vpop.f32.mrf.mxu0
  %v3149 = vadd.f32 0.0, %v3148
  %v3150 = vpop.f32.mrf.mxu0
  %3151 = vmatprep.mubr.f32.mxu0 0.0
  %3152 = vmatmul.mubr.f32.gmra.mxu0 %v2876
  %v3153 = vpop.f32.mrf.mxu0
  %v3154 = vadd.f32 0.0, %v3153
  %v3155 = vpop.f32.mrf.mxu0
  %3156 = vmatprep.mubr.f32.mxu0 0.0
  %3157 = vmatmul.mubr.f32.gmra.mxu0 %v2879
  %v3158 = vpop.f32.mrf.mxu0
  %v3159 = vadd.f32 0.0, %v3158
  %v3160 = vpop.f32.mrf.mxu0
  %3161 = vmatprep.mubr.f32.mxu0 0.0
  %3162 = vmatmul.mubr.f32.gmra.mxu0 %v2882
  %v3163 = vpop.f32.mrf.mxu0
  %v3164 = vadd.f32 0.0, %v3163
  %v3165 = vpop.f32.mrf.mxu0
  %3166 = vmatprep.mubr.f32.mxu0 0.0
  %3167 = vmatmul.mubr.f32.gmra.mxu0 %v2885
  %v3168 = vpop.f32.mrf.mxu0
  %v3169 = vadd.f32 0.0, %v3168
  %v3170 = vpop.f32.mrf.mxu0
  %3171 = vmatprep.mubr.f32.mxu0 0.0
  %3172 = vmatmul.mubr.f32.gmra.mxu0 %v2888
  %v3173 = vpop.f32.mrf.mxu0
  %v3174 = vadd.f32 0.0, %v3173
  %v3175 = vpop.f32.mrf.mxu0
  %3176 = vmatprep.mubr.f32.mxu0 0.0
  %3177 = vmatmul.mubr.f32.gmra.mxu0 %v2891
  %v3178 = vpop.f32.mrf.mxu0
  %v3179 = vadd.f32 0.0, %v3178
  %v3180 = vpop.f32.mrf.mxu0
  %3181 = vmatprep.mubr.f32.mxu0 0.0
  %3182 = vmatmul.mubr.f32.gmra.mxu0 %v2894
  %v3183 = vpop.f32.mrf.mxu0
  %v3184 = vadd.f32 0.0, %v3183
  %v3185 = vpop.f32.mrf.mxu0
  %3186 = vmatprep.mubr.f32.mxu0 0.0
  %3187 = vmatmul.mubr.f32.gmra.mxu0 %v2897
  %v3188 = vpop.f32.mrf.mxu0
  %v3189 = vadd.f32 0.0, %v3188
  %v3190 = vpop.f32.mrf.mxu0
  %3191 = vmatprep.mubr.f32.mxu0 0.0
  %3192 = vmatmul.mubr.f32.gmra.mxu0 %v2900
  %v3193 = vpop.f32.mrf.mxu0
  %v3194 = vadd.f32 0.0, %v3193
  %v3195 = vpop.f32.mrf.mxu0
  %3196 = vmatprep.mubr.f32.mxu0 0.0
  %3197 = vmatmul.mubr.f32.gmra.mxu0 %v2903
  %v3198 = vpop.f32.mrf.mxu0
  %v3199 = vadd.f32 0.0, %v3198
  %v3200 = vpop.f32.mrf.mxu0
  %3201 = vmatprep.mubr.f32.mxu0 0.0
  %3202 = vmatmul.mubr.f32.gmra.mxu0 %v2906
  %v3203 = vpop.f32.mrf.mxu0
  %v3204 = vadd.f32 0.0, %v3203
  %v3205 = vpop.f32.mrf.mxu0
  %3206 = vmatprep.mubr.f32.mxu0 0.0
  %3207 = vmatmul.mubr.f32.gmra.mxu0 %v2909
  %v3208 = vpop.f32.mrf.mxu0
  %v3209 = vadd.f32 0.0, %v3208
  %v3210 = vpop.f32.mrf.mxu0
  %3211 = vmatprep.mubr.f32.mxu0 0.0
  %3212 = vmatmul.mubr.f32.gmra.mxu0 %v2912
  %v3213 = vpop.f32.mrf.mxu0
  %v3214 = vadd.f32 0.0, %v3213
  %v3215 = vpop.f32.mrf.mxu0
  %3216 = vmatprep.mubr.f32.mxu0 0.0
  %3217 = vmatmul.mubr.f32.gmra.mxu0 %v2915
  %v3218 = vpop.f32.mrf.mxu0
  %v3219 = vadd.f32 0.0, %v3218
  %v3220 = vpop.f32.mrf.mxu0
  %3221 = vmatprep.mubr.f32.mxu0 0.0
  %3222 = vmatmul.mubr.f32.gmra.mxu0 %v2918
  %v3223 = vpop.f32.mrf.mxu0
  %v3224 = vadd.f32 0.0, %v3223
  %v3225 = vpop.f32.mrf.mxu0
  %3226 = vmatprep.mubr.f32.mxu0 0.0
  %3227 = vmatmul.mubr.f32.gmra.mxu0 %v2921
  %v3228 = vpop.f32.mrf.mxu0
  %v3229 = vadd.f32 0.0, %v3228
  %v3230 = vpop.f32.mrf.mxu0
  %3231 = vmatprep.mubr.f32.mxu0 0.0
  %3232 = vmatmul.mubr.f32.gmra.mxu0 %v2924
  %v3233 = vpop.f32.mrf.mxu0
  %v3234 = vadd.f32 0.0, %v3233
  %v3235 = vpop.f32.mrf.mxu0
  %3236 = vmatprep.mubr.f32.mxu0 0.0
  %3237 = vmatmul.mubr.f32.gmra.mxu0 %v2927
  %v3238 = vpop.f32.mrf.mxu0
  %v3239 = vadd.f32 0.0, %v3238
  %v3240 = vpop.f32.mrf.mxu0
  %3241 = vmatprep.mubr.f32.mxu0 0.0
  %3242 = vmatmul.mubr.f32.gmra.mxu0 %v2930
  %v3243 = vpop.f32.mrf.mxu0
  %v3244 = vadd.f32 0.0, %v3243
  %v3245 = vpop.f32.mrf.mxu0
  %3246 = vmatprep.mubr.f32.mxu0 0.0
  %3247 = vmatmul.mubr.f32.gmra.mxu0 %v2933
  %v3248 = vpop.f32.mrf.mxu0
  %v3249 = vadd.f32 0.0, %v3248
  %v3250 = vpop.f32.mrf.mxu0
  %3251 = vmatprep.mubr.f32.mxu0 0.0
  %3252 = vmatmul.mubr.f32.gmra.mxu0 %v2936
  %v3253 = vpop.f32.mrf.mxu0
  %v3254 = vadd.f32 0.0, %v3253
  %v3255 = vpop.f32.mrf.mxu0
  %3256 = vmatprep.mubr.f32.mxu0 0.0
  %3257 = vmatmul.mubr.f32.gmra.mxu0 %v2939
  %v3258 = vpop.f32.mrf.mxu0
  %v3259 = vadd.f32 0.0, %v3258
  %v3260 = vpop.f32.mrf.mxu0
  %3261 = vmatprep.mubr.f32.mxu0 0.0
  %3262 = vmatmul.mubr.f32.gmra.mxu0 %v2942
  %v3263 = vpop.f32.mrf.mxu0
  %v3264 = vadd.f32 0.0, %v3263
  %v3265 = vpop.f32.mrf.mxu0
  %3266 = vmatprep.mubr.f32.mxu0 0.0
  %3267 = vmatmul.mubr.f32.gmra.mxu0 %v2945
  %v3268 = vpop.f32.mrf.mxu0
  %v3269 = vadd.f32 0.0, %v3268
  %v3270 = vpop.f32.mrf.mxu0
  %3271 = vmatprep.mubr.f32.mxu0 0.0
  %3272 = vmatmul.mubr.f32.gmra.mxu0 %v2948
  %v3273 = vpop.f32.mrf.mxu0
  %v3274 = vadd.f32 0.0, %v3273
  %v3275 = vpop.f32.mrf.mxu0
  %3276 = vmatprep.mubr.f32.mxu0 0.0
  %3277 = vmatmul.mubr.f32.gmra.mxu0 %v2951
  %v3278 = vpop.f32.mrf.mxu0
  %v3279 = vadd.f32 0.0, %v3278
  %v3280 = vpop.f32.mrf.mxu0
  %3281 = vmatprep.mubr.f32.mxu0 0.0
  %3282 = vmatmul.mubr.f32.gmra.mxu0 %v2954
  %v3283 = vpop.f32.mrf.mxu0
  %v3284 = vadd.f32 0.0, %v3283
  %v3285 = vpop.f32.mrf.mxu0
  %3286 = vmatprep.mubr.f32.mxu0 0.0
  %3287 = vmatmul.mubr.f32.gmra.mxu0 %v2957
  %v3288 = vpop.f32.mrf.mxu0
  %v3289 = vadd.f32 0.0, %v3288
  %v3290 = vpop.f32.mrf.mxu0
  %3291 = vmatprep.mubr.f32.mxu0 0.0
  %3292 = vmatmul.mubr.f32.gmra.mxu0 %v2960
  %v3293 = vpop.f32.mrf.mxu0
  %v3294 = vadd.f32 0.0, %v3293
  %v3295 = vpop.f32.mrf.mxu0
  %3296 = vmatprep.mubr.f32.mxu0 0.0
  %3297 = vmatmul.mubr.f32.gmra.mxu0 %v2963
  %v3298 = vpop.f32.mrf.mxu0
  %v3299 = vadd.f32 0.0, %v3298
  %v3300 = vpop.f32.mrf.mxu0
  %3301 = vmatprep.mubr.f32.mxu0 0.0
  %3302 = vmatmul.mubr.f32.gmra.mxu0 %v2966
  %v3303 = vpop.f32.mrf.mxu0
  %v3304 = vadd.f32 0.0, %v3303
  %v3305 = vpop.f32.mrf.mxu0
  %3306 = vmatprep.mubr.f32.mxu0 0.0
  %3307 = vmatmul.mubr.f32.gmra.mxu0 %v2969
  %v3308 = vpop.f32.mrf.mxu0
  %v3309 = vadd.f32 0.0, %v3308
  %v3310 = vpop.f32.mrf.mxu0
  %3311 = vmatprep.mubr.f32.mxu0 0.0
  %3312 = vmatmul.mubr.f32.gmra.mxu0 %v2972
  %v3313 = vpop.f32.mrf.mxu0
  %v3314 = vadd.f32 0.0, %v3313
  %v3315 = vpop.f32.mrf.mxu0
  %3316 = vmatprep.mubr.f32.mxu0 0.0
  %3317 = vmatmul.mubr.f32.gmra.mxu0 %v2975
  %v3318 = vpop.f32.mrf.mxu0
  %v3319 = vadd.f32 0.0, %v3318
  %v3320 = vpop.f32.mrf.mxu0
  %3321 = vmatprep.mubr.f32.mxu0 0.0
  %3322 = vmatmul.mubr.f32.gmra.mxu0 %v2978
  %v3323 = vpop.f32.mrf.mxu0
  %v3324 = vadd.f32 0.0, %v3323
  %v3325 = vpop.f32.mrf.mxu0
  %3326 = vmatprep.mubr.f32.mxu0 0.0
  %3327 = vmatmul.mubr.f32.gmra.mxu0 %v2981
  %v3328 = vpop.f32.mrf.mxu0
  %v3329 = vadd.f32 0.0, %v3328
  %v3330 = vpop.f32.mrf.mxu0
  %3331 = vmatprep.mubr.f32.mxu0 0.0
  %3332 = vmatmul.mubr.f32.gmra.mxu0 %v2984
  %v3333 = vpop.f32.mrf.mxu0
  %v3334 = vadd.f32 0.0, %v3333
  %v3335 = vpop.f32.mrf.mxu0
  %3336 = vmatprep.mubr.f32.mxu0 0.0
  %3337 = vmatmul.mubr.f32.gmra.mxu0 %v2987
  %v3338 = vpop.f32.mrf.mxu0
  %v3339 = vadd.f32 0.0, %v3338
  %v3340 = vpop.f32.mrf.mxu0
  %3341 = vmatprep.mubr.f32.mxu0 0.0
  %3342 = vmatmul.mubr.f32.gmra.mxu0 %v2990
  %v3343 = vpop.f32.mrf.mxu0
  %v3344 = vadd.f32 0.0, %v3343
  %v3345 = vpop.f32.mrf.mxu0
  %3346 = vmatprep.mubr.f32.mxu0 0.0
  %3347 = vmatmul.mubr.f32.gmra.mxu0 %v2993
  %v3348 = vpop.f32.mrf.mxu0
  %v3349 = vadd.f32 0.0, %v3348
  %v3350 = vpop.f32.mrf.mxu0
  %3351 = vmatprep.mubr.f32.mxu0 0.0
  %3352 = vmatmul.mubr.f32.gmra.mxu0 %v2996
  %v3353 = vpop.f32.mrf.mxu0
  %v3354 = vadd.f32 0.0, %v3353
  %v3355 = vpop.f32.mrf.mxu0
  %3356 = vmatprep.mubr.f32.mxu0 0.0
  %3357 = vmatmul.mubr.f32.gmra.mxu0 %v2999
  %v3358 = vpop.f32.mrf.mxu0
  %v3359 = vadd.f32 0.0, %v3358
  %v3360 = vpop.f32.mrf.mxu0
  %3361 = vmatprep.mubr.f32.mxu0 0.0
  %3362 = vmatmul.mubr.f32.gmra.mxu0 %v3002
  %v3363 = vpop.f32.mrf.mxu0
  %v3364 = vadd.f32 0.0, %v3363
  %v3365 = vpop.f32.mrf.mxu0
  %3366 = vmatprep.mubr.f32.mxu0 0.0
  %3367 = vmatmul.mubr.f32.gmra.mxu0 %v3005
  %v3368 = vpop.f32.mrf.mxu0
  %v3369 = vadd.f32 0.0, %v3368
  %v3370 = vpop.f32.mrf.mxu0
  %3371 = vmatprep.mubr.f32.mxu0 0.0
  %3372 = vmatmul.mubr.f32.gmra.mxu0 %v3008
  %v3373 = vpop.f32.mrf.mxu0
  %v3374 = vadd.f32 0.0, %v3373
  %v3375 = vpop.f32.mrf.mxu0
  %3376 = vmatprep.mubr.f32.mxu0 0.0
  %3377 = vmatmul.mubr.f32.gmra.mxu0 %v3011
  %v3378 = vpop.f32.mrf.mxu0
  %v3379 = vadd.f32 0.0, %v3378
  %v3380 = vpop.f32.mrf.mxu0
  %3381 = vmatprep.mubr.f32.mxu0 0.0
  %3382 = vmatmul.mubr.f32.gmra.mxu0 %v3014
  %v3383 = vpop.f32.mrf.mxu0
  %v3384 = vadd.f32 0.0, %v3383
  %v3385 = vpop.f32.mrf.mxu0
  %3386 = vmatprep.mubr.f32.mxu0 0.0
  %3387 = vmatmul.mubr.f32.gmra.mxu0 %v3017
  %v3388 = vpop.f32.mrf.mxu0
  %v3389 = vadd.f32 0.0, %v3388
  %v3390 = vpop.f32.mrf.mxu0
  %3391 = vmatprep.mubr.f32.mxu0 0.0
  %3392 = vmatmul.mubr.f32.gmra.mxu0 %v3020
  %v3393 = vpop.f32.mrf.mxu0
  %v3394 = vadd.f32 0.0, %v3393
  %v3395 = vpop.f32.mrf.mxu0
  %3396 = vmatprep.mubr.f32.mxu0 0.0
  %3397 = vmatmul.mubr.f32.gmra.mxu0 %v3023
  %v3398 = vpop.f32.mrf.mxu0
  %v3399 = vadd.f32 0.0, %v3398
  %v3400 = vpop.f32.mrf.mxu0
  %3401 = vmatprep.mubr.f32.mxu0 0.0
  %3402 = vmatmul.mubr.f32.gmra.mxu0 %v3026
  %v3403 = vpop.f32.mrf.mxu0
  %v3404 = vadd.f32 0.0, %v3403
  %v3405 = vpop.f32.mrf.mxu0
  %3406 = vmatprep.mubr.f32.mxu0 0.0
  %3407 = vmatmul.mubr.f32.gmra.mxu0 %v3029
  %v3408 = vpop.f32.mrf.mxu0
  %v3409 = vadd.f32 0.0, %v3408
  %v3410 = vpop.f32.mrf.mxu0
  %3411 = vmatprep.mubr.f32.mxu0 0.0
  %3412 = vmatmul.mubr.f32.gmra.mxu0 %v3032
  %v3413 = vpop.f32.mrf.mxu0
  %v3414 = vadd.f32 0.0, %v3413
  %v3415 = vpop.f32.mrf.mxu0
  %3416 = vmatprep.mubr.f32.mxu0 0.0
  %3417 = vmatmul.mubr.f32.gmra.mxu0 %v3035
  %v3418 = vpop.f32.mrf.mxu0
  %v3419 = vadd.f32 0.0, %v3418
  %v3420 = vpop.f32.mrf.mxu0
  %3421 = vmatprep.mubr.f32.mxu0 0.0
  %3422 = vmatmul.mubr.f32.gmra.mxu0 %v3038
  %v3423 = vpop.f32.mrf.mxu0
  %v3424 = vadd.f32 0.0, %v3423
  %v3425 = vpop.f32.mrf.mxu0
  %3426 = vmatprep.mubr.f32.mxu0 0.0
  %3427 = vmatmul.mubr.f32.gmra.mxu0 %v3041
  %v3428 = vpop.f32.mrf.mxu0
  %v3429 = vadd.f32 0.0, %v3428
  %v3430 = vpop.f32.mrf.mxu0
  %3431 = vdwg.mxu0
  %v3432 = vld [vmem:[%s2] sm:$0x1]
  %v3433 = vld [vmem:[%s3] sm:$0x1]
  %v3434 = vsel %vm2397, %v3114, 0.0
  %v3435 = vsel %vm2397, %v3119, 0.0
  %v3436 = vadd.f32 %v3434, %v3435
  %v3437 = vsel %vm2397, %v3124, 0.0
  %v3438 = vadd.f32 %v3436, %v3437
  %v3439 = vsel %vm2397, %v3129, 0.0
  %v3440 = vadd.f32 %v3438, %v3439
  %v3441 = vsel %vm2397, %v3134, 0.0
  %v3442 = vadd.f32 %v3440, %v3441
  %v3443 = vsel %vm2397, %v3139, 0.0
  %v3444 = vadd.f32 %v3442, %v3443
  %v3445 = vsel %vm2397, %v3144, 0.0
  %v3446 = vadd.f32 %v3444, %v3445
  %v3447 = vsel %vm2397, %v3149, 0.0
  %v3448 = vadd.f32 %v3446, %v3447
  %v3449 = vsel %vm2397, %v3154, 0.0
  %v3450 = vadd.f32 %v3448, %v3449
  %v3451 = vsel %vm2397, %v3159, 0.0
  %v3452 = vadd.f32 %v3450, %v3451
  %v3453 = vsel %vm2397, %v3164, 0.0
  %v3454 = vadd.f32 %v3452, %v3453
  %v3455 = vsel %vm2397, %v3169, 0.0
  %v3456 = vadd.f32 %v3454, %v3455
  %v3457 = vsel %vm2397, %v3174, 0.0
  %v3458 = vadd.f32 %v3456, %v3457
  %v3459 = vsel %vm2397, %v3179, 0.0
  %v3460 = vadd.f32 %v3458, %v3459
  %v3461 = vsel %vm2397, %v3184, 0.0
  %v3462 = vadd.f32 %v3460, %v3461
  %v3463 = vsel %vm2397, %v3189, 0.0
  %v3464 = vadd.f32 %v3462, %v3463
  %v3465 = vsel %vm2397, %v3194, 0.0
  %v3466 = vadd.f32 %v3464, %v3465
  %v3467 = vsel %vm2397, %v3199, 0.0
  %v3468 = vadd.f32 %v3466, %v3467
  %v3469 = vsel %vm2397, %v3204, 0.0
  %v3470 = vadd.f32 %v3468, %v3469
  %v3471 = vsel %vm2397, %v3209, 0.0
  %v3472 = vadd.f32 %v3470, %v3471
  %v3473 = vsel %vm2397, %v3214, 0.0
  %v3474 = vadd.f32 %v3472, %v3473
  %v3475 = vsel %vm2397, %v3219, 0.0
  %v3476 = vadd.f32 %v3474, %v3475
  %v3477 = vsel %vm2397, %v3224, 0.0
  %v3478 = vadd.f32 %v3476, %v3477
  %v3479 = vsel %vm2397, %v3229, 0.0
  %v3480 = vadd.f32 %v3478, %v3479
  %v3481 = vsel %vm2397, %v3234, 0.0
  %v3482 = vadd.f32 %v3480, %v3481
  %v3483 = vsel %vm2397, %v3239, 0.0
  %v3484 = vadd.f32 %v3482, %v3483
  %v3485 = vsel %vm2397, %v3244, 0.0
  %v3486 = vadd.f32 %v3484, %v3485
  %v3487 = vsel %vm2397, %v3249, 0.0
  %v3488 = vadd.f32 %v3486, %v3487
  %v3489 = vsel %vm2397, %v3254, 0.0
  %v3490 = vadd.f32 %v3488, %v3489
  %v3491 = vsel %vm2397, %v3259, 0.0
  %v3492 = vadd.f32 %v3490, %v3491
  %v3493 = vsel %vm2397, %v3264, 0.0
  %v3494 = vadd.f32 %v3492, %v3493
  %v3495 = vsel %vm2397, %v3269, 0.0
  %v3496 = vadd.f32 %v3494, %v3495
  %v3497 = vrot.slane %v3496, 4
  %v3498 = vadd.f32 %v3496, %v3497
  %v3499 = vrot.slane %v3498, 2
  %v3500 = vadd.f32 %v3498, %v3499
  %v3501 = vrot.slane %v3500, 1
  %v3502 = vadd.f32 %v3500, %v3501
  %v3503 = vsel %vm2397, %v3274, 0.0
  %v3504 = vsel %vm2397, %v3279, 0.0
  %v3505 = vadd.f32 %v3503, %v3504
  %v3506 = vsel %vm2397, %v3284, 0.0
  %v3507 = vadd.f32 %v3505, %v3506
  %v3508 = vsel %vm2397, %v3289, 0.0
  %v3509 = vadd.f32 %v3507, %v3508
  %v3510 = vsel %vm2397, %v3294, 0.0
  %v3511 = vadd.f32 %v3509, %v3510
  %v3512 = vsel %vm2397, %v3299, 0.0
  %v3513 = vadd.f32 %v3511, %v3512
  %v3514 = vsel %vm2397, %v3304, 0.0
  %v3515 = vadd.f32 %v3513, %v3514
  %v3516 = vsel %vm2397, %v3309, 0.0
  %v3517 = vadd.f32 %v3515, %v3516
  %v3518 = vsel %vm2397, %v3314, 0.0
  %v3519 = vadd.f32 %v3517, %v3518
  %v3520 = vsel %vm2397, %v3319, 0.0
  %v3521 = vadd.f32 %v3519, %v3520
  %v3522 = vsel %vm2397, %v3324, 0.0
  %v3523 = vadd.f32 %v3521, %v3522
  %v3524 = vsel %vm2397, %v3329, 0.0
  %v3525 = vadd.f32 %v3523, %v3524
  %v3526 = vsel %vm2397, %v3334, 0.0
  %v3527 = vadd.f32 %v3525, %v3526
  %v3528 = vsel %vm2397, %v3339, 0.0
  %v3529 = vadd.f32 %v3527, %v3528
  %v3530 = vsel %vm2397, %v3344, 0.0
  %v3531 = vadd.f32 %v3529, %v3530
  %v3532 = vsel %vm2397, %v3349, 0.0
  %v3533 = vadd.f32 %v3531, %v3532
  %v3534 = vsel %vm2397, %v3354, 0.0
  %v3535 = vadd.f32 %v3533, %v3534
  %v3536 = vsel %vm2397, %v3359, 0.0
  %v3537 = vadd.f32 %v3535, %v3536
  %v3538 = vsel %vm2397, %v3364, 0.0
  %v3539 = vadd.f32 %v3537, %v3538
  %v3540 = vsel %vm2397, %v3369, 0.0
  %v3541 = vadd.f32 %v3539, %v3540
  %v3542 = vsel %vm2397, %v3374, 0.0
  %v3543 = vadd.f32 %v3541, %v3542
  %v3544 = vsel %vm2397, %v3379, 0.0
  %v3545 = vadd.f32 %v3543, %v3544
  %v3546 = vsel %vm2397, %v3384, 0.0
  %v3547 = vadd.f32 %v3545, %v3546
  %v3548 = vsel %vm2397, %v3389, 0.0
  %v3549 = vadd.f32 %v3547, %v3548
  %v3550 = vsel %vm2397, %v3394, 0.0
  %v3551 = vadd.f32 %v3549, %v3550
  %v3552 = vsel %vm2397, %v3399, 0.0
  %v3553 = vadd.f32 %v3551, %v3552
  %v3554 = vsel %vm2397, %v3404, 0.0
  %v3555 = vadd.f32 %v3553, %v3554
  %v3556 = vsel %vm2397, %v3409, 0.0
  %v3557 = vadd.f32 %v3555, %v3556
  %v3558 = vsel %vm2397, %v3414, 0.0
  %v3559 = vadd.f32 %v3557, %v3558
  %v3560 = vsel %vm2397, %v3419, 0.0
  %v3561 = vadd.f32 %v3559, %v3560
  %v3562 = vsel %vm2397, %v3424, 0.0
  %v3563 = vadd.f32 %v3561, %v3562
  %v3564 = vsel %vm2397, %v3429, 0.0
  %v3565 = vadd.f32 %v3563, %v3564
  %v3566 = vrot.slane %v3565, 4
  %v3567 = vadd.f32 %v3565, %v3566
  %v3568 = vrot.slane %v3567, 2
  %v3569 = vadd.f32 %v3567, %v3568
  %v3570 = vrot.slane %v3569, 1
  %v3571 = vadd.f32 %v3569, %v3570
  %v3572 = vrcp.pop 256.0
  %v3573 = vmul.f32 %v3502, %v3572
  %v3574 = vmul.f32 %v3571, %v3572
  %v3575 = vsub.f32 %v3114, %v3573
  %v3576 = vsub.f32 %v3119, %v3573
  %v3577 = vsub.f32 %v3124, %v3573
  %v3578 = vsub.f32 %v3129, %v3573
  %v3579 = vsub.f32 %v3134, %v3573
  %v3580 = vsub.f32 %v3139, %v3573
  %v3581 = vsub.f32 %v3144, %v3573
  %v3582 = vsub.f32 %v3149, %v3573
  %v3583 = vsub.f32 %v3154, %v3573
  %v3584 = vsub.f32 %v3159, %v3573
  %v3585 = vsub.f32 %v3164, %v3573
  %v3586 = vsub.f32 %v3169, %v3573
  %v3587 = vsub.f32 %v3174, %v3573
  %v3588 = vsub.f32 %v3179, %v3573
  %v3589 = vsub.f32 %v3184, %v3573
  %v3590 = vsub.f32 %v3189, %v3573
  %v3591 = vsub.f32 %v3194, %v3573
  %v3592 = vsub.f32 %v3199, %v3573
  %v3593 = vsub.f32 %v3204, %v3573
  %v3594 = vsub.f32 %v3209, %v3573
  %v3595 = vsub.f32 %v3214, %v3573
  %v3596 = vsub.f32 %v3219, %v3573
  %v3597 = vsub.f32 %v3224, %v3573
  %v3598 = vsub.f32 %v3229, %v3573
  %v3599 = vsub.f32 %v3234, %v3573
  %v3600 = vsub.f32 %v3239, %v3573
  %v3601 = vsub.f32 %v3244, %v3573
  %v3602 = vsub.f32 %v3249, %v3573
  %v3603 = vsub.f32 %v3254, %v3573
  %v3604 = vsub.f32 %v3259, %v3573
  %v3605 = vsub.f32 %v3264, %v3573
  %v3606 = vsub.f32 %v3269, %v3573
  %v3607 = vsub.f32 %v3274, %v3574
  %v3608 = vsub.f32 %v3279, %v3574
  %v3609 = vsub.f32 %v3284, %v3574
  %v3610 = vsub.f32 %v3289, %v3574
  %v3611 = vsub.f32 %v3294, %v3574
  %v3612 = vsub.f32 %v3299, %v3574
  %v3613 = vsub.f32 %v3304, %v3574
  %v3614 = vsub.f32 %v3309, %v3574
  %v3615 = vsub.f32 %v3314, %v3574
  %v3616 = vsub.f32 %v3319, %v3574
  %v3617 = vsub.f32 %v3324, %v3574
  %v3618 = vsub.f32 %v3329, %v3574
  %v3619 = vsub.f32 %v3334, %v3574
  %v3620 = vsub.f32 %v3339, %v3574
  %v3621 = vsub.f32 %v3344, %v3574
  %v3622 = vsub.f32 %v3349, %v3574
  %v3623 = vsub.f32 %v3354, %v3574
  %v3624 = vsub.f32 %v3359, %v3574
  %v3625 = vsub.f32 %v3364, %v3574
  %v3626 = vsub.f32 %v3369, %v3574
  %v3627 = vsub.f32 %v3374, %v3574
  %v3628 = vsub.f32 %v3379, %v3574
  %v3629 = vsub.f32 %v3384, %v3574
  %v3630 = vsub.f32 %v3389, %v3574
  %v3631 = vsub.f32 %v3394, %v3574
  %v3632 = vsub.f32 %v3399, %v3574
  %v3633 = vsub.f32 %v3404, %v3574
  %v3634 = vsub.f32 %v3409, %v3574
  %v3635 = vsub.f32 %v3414, %v3574
  %v3636 = vsub.f32 %v3419, %v3574
  %v3637 = vsub.f32 %v3424, %v3574
  %v3638 = vsub.f32 %v3429, %v3574
  %v3639 = vmul.f32 %v3575, %v3575
  %v3640 = vmul.f32 %v3576, %v3576
  %v3641 = vmul.f32 %v3577, %v3577
  %v3642 = vmul.f32 %v3578, %v3578
  %v3643 = vmul.f32 %v3579, %v3579
  %v3644 = vmul.f32 %v3580, %v3580
  %v3645 = vmul.f32 %v3581, %v3581
  %v3646 = vmul.f32 %v3582, %v3582
  %v3647 = vmul.f32 %v3583, %v3583
  %v3648 = vmul.f32 %v3584, %v3584
  %v3649 = vmul.f32 %v3585, %v3585
  %v3650 = vmul.f32 %v3586, %v3586
  %v3651 = vmul.f32 %v3587, %v3587
  %v3652 = vmul.f32 %v3588, %v3588
  %v3653 = vmul.f32 %v3589, %v3589
  %v3654 = vmul.f32 %v3590, %v3590
  %v3655 = vmul.f32 %v3591, %v3591
  %v3656 = vmul.f32 %v3592, %v3592
  %v3657 = vmul.f32 %v3593, %v3593
  %v3658 = vmul.f32 %v3594, %v3594
  %v3659 = vmul.f32 %v3595, %v3595
  %v3660 = vmul.f32 %v3596, %v3596
  %v3661 = vmul.f32 %v3597, %v3597
  %v3662 = vmul.f32 %v3598, %v3598
  %v3663 = vmul.f32 %v3599, %v3599
  %v3664 = vmul.f32 %v3600, %v3600
  %v3665 = vmul.f32 %v3601, %v3601
  %v3666 = vmul.f32 %v3602, %v3602
  %v3667 = vmul.f32 %v3603, %v3603
  %v3668 = vmul.f32 %v3604, %v3604
  %v3669 = vmul.f32 %v3605, %v3605
  %v3670 = vmul.f32 %v3606, %v3606
  %v3671 = vmul.f32 %v3607, %v3607
  %v3672 = vmul.f32 %v3608, %v3608
  %v3673 = vmul.f32 %v3609, %v3609
  %v3674 = vmul.f32 %v3610, %v3610
  %v3675 = vmul.f32 %v3611, %v3611
  %v3676 = vmul.f32 %v3612, %v3612
  %v3677 = vmul.f32 %v3613, %v3613
  %v3678 = vmul.f32 %v3614, %v3614
  %v3679 = vmul.f32 %v3615, %v3615
  %v3680 = vmul.f32 %v3616, %v3616
  %v3681 = vmul.f32 %v3617, %v3617
  %v3682 = vmul.f32 %v3618, %v3618
  %v3683 = vmul.f32 %v3619, %v3619
  %v3684 = vmul.f32 %v3620, %v3620
  %v3685 = vmul.f32 %v3621, %v3621
  %v3686 = vmul.f32 %v3622, %v3622
  %v3687 = vmul.f32 %v3623, %v3623
  %v3688 = vmul.f32 %v3624, %v3624
  %v3689 = vmul.f32 %v3625, %v3625
  %v3690 = vmul.f32 %v3626, %v3626
  %v3691 = vmul.f32 %v3627, %v3627
  %v3692 = vmul.f32 %v3628, %v3628
  %v3693 = vmul.f32 %v3629, %v3629
  %v3694 = vmul.f32 %v3630, %v3630
  %v3695 = vmul.f32 %v3631, %v3631
  %v3696 = vmul.f32 %v3632, %v3632
  %v3697 = vmul.f32 %v3633, %v3633
  %v3698 = vmul.f32 %v3634, %v3634
  %v3699 = vmul.f32 %v3635, %v3635
  %v3700 = vmul.f32 %v3636, %v3636
  %v3701 = vmul.f32 %v3637, %v3637
  %v3702 = vmul.f32 %v3638, %v3638
  %v3703 = vsel %vm2397, %v3639, 0.0
  %v3704 = vsel %vm2397, %v3640, 0.0
  %v3705 = vadd.f32 %v3703, %v3704
  %v3706 = vsel %vm2397, %v3641, 0.0
  %v3707 = vadd.f32 %v3705, %v3706
  %v3708 = vsel %vm2397, %v3642, 0.0
  %v3709 = vadd.f32 %v3707, %v3708
  %v3710 = vsel %vm2397, %v3643, 0.0
  %v3711 = vadd.f32 %v3709, %v3710
  %v3712 = vsel %vm2397, %v3644, 0.0
  %v3713 = vadd.f32 %v3711, %v3712
  %v3714 = vsel %vm2397, %v3645, 0.0
  %v3715 = vadd.f32 %v3713, %v3714
  %v3716 = vsel %vm2397, %v3646, 0.0
  %v3717 = vadd.f32 %v3715, %v3716
  %v3718 = vsel %vm2397, %v3647, 0.0
  %v3719 = vadd.f32 %v3717, %v3718
  %v3720 = vsel %vm2397, %v3648, 0.0
  %v3721 = vadd.f32 %v3719, %v3720
  %v3722 = vsel %vm2397, %v3649, 0.0
  %v3723 = vadd.f32 %v3721, %v3722
  %v3724 = vsel %vm2397, %v3650, 0.0
  %v3725 = vadd.f32 %v3723, %v3724
  %v3726 = vsel %vm2397, %v3651, 0.0
  %v3727 = vadd.f32 %v3725, %v3726
  %v3728 = vsel %vm2397, %v3652, 0.0
  %v3729 = vadd.f32 %v3727, %v3728
  %v3730 = vsel %vm2397, %v3653, 0.0
  %v3731 = vadd.f32 %v3729, %v3730
  %v3732 = vsel %vm2397, %v3654, 0.0
  %v3733 = vadd.f32 %v3731, %v3732
  %v3734 = vsel %vm2397, %v3655, 0.0
  %v3735 = vadd.f32 %v3733, %v3734
  %v3736 = vsel %vm2397, %v3656, 0.0
  %v3737 = vadd.f32 %v3735, %v3736
  %v3738 = vsel %vm2397, %v3657, 0.0
  %v3739 = vadd.f32 %v3737, %v3738
  %v3740 = vsel %vm2397, %v3658, 0.0
  %v3741 = vadd.f32 %v3739, %v3740
  %v3742 = vsel %vm2397, %v3659, 0.0
  %v3743 = vadd.f32 %v3741, %v3742
  %v3744 = vsel %vm2397, %v3660, 0.0
  %v3745 = vadd.f32 %v3743, %v3744
  %v3746 = vsel %vm2397, %v3661, 0.0
  %v3747 = vadd.f32 %v3745, %v3746
  %v3748 = vsel %vm2397, %v3662, 0.0
  %v3749 = vadd.f32 %v3747, %v3748
  %v3750 = vsel %vm2397, %v3663, 0.0
  %v3751 = vadd.f32 %v3749, %v3750
  %v3752 = vsel %vm2397, %v3664, 0.0
  %v3753 = vadd.f32 %v3751, %v3752
  %v3754 = vsel %vm2397, %v3665, 0.0
  %v3755 = vadd.f32 %v3753, %v3754
  %v3756 = vsel %vm2397, %v3666, 0.0
  %v3757 = vadd.f32 %v3755, %v3756
  %v3758 = vsel %vm2397, %v3667, 0.0
  %v3759 = vadd.f32 %v3757, %v3758
  %v3760 = vsel %vm2397, %v3668, 0.0
  %v3761 = vadd.f32 %v3759, %v3760
  %v3762 = vsel %vm2397, %v3669, 0.0
  %v3763 = vadd.f32 %v3761, %v3762
  %v3764 = vsel %vm2397, %v3670, 0.0
  %v3765 = vadd.f32 %v3763, %v3764
  %v3766 = vrot.slane %v3765, 4
  %v3767 = vadd.f32 %v3765, %v3766
  %v3768 = vrot.slane %v3767, 2
  %v3769 = vadd.f32 %v3767, %v3768
  %v3770 = vrot.slane %v3769, 1
  %v3771 = vadd.f32 %v3769, %v3770
  %v3772 = vsel %vm2397, %v3671, 0.0
  %v3773 = vsel %vm2397, %v3672, 0.0
  %v3774 = vadd.f32 %v3772, %v3773
  %v3775 = vsel %vm2397, %v3673, 0.0
  %v3776 = vadd.f32 %v3774, %v3775
  %v3777 = vsel %vm2397, %v3674, 0.0
  %v3778 = vadd.f32 %v3776, %v3777
  %v3779 = vsel %vm2397, %v3675, 0.0
  %v3780 = vadd.f32 %v3778, %v3779
  %v3781 = vsel %vm2397, %v3676, 0.0
  %v3782 = vadd.f32 %v3780, %v3781
  %v3783 = vsel %vm2397, %v3677, 0.0
  %v3784 = vadd.f32 %v3782, %v3783
  %v3785 = vsel %vm2397, %v3678, 0.0
  %v3786 = vadd.f32 %v3784, %v3785
  %v3787 = vsel %vm2397, %v3679, 0.0
  %v3788 = vadd.f32 %v3786, %v3787
  %v3789 = vsel %vm2397, %v3680, 0.0
  %v3790 = vadd.f32 %v3788, %v3789
  %v3791 = vsel %vm2397, %v3681, 0.0
  %v3792 = vadd.f32 %v3790, %v3791
  %v3793 = vsel %vm2397, %v3682, 0.0
  %v3794 = vadd.f32 %v3792, %v3793
  %v3795 = vsel %vm2397, %v3683, 0.0
  %v3796 = vadd.f32 %v3794, %v3795
  %v3797 = vsel %vm2397, %v3684, 0.0
  %v3798 = vadd.f32 %v3796, %v3797
  %v3799 = vsel %vm2397, %v3685, 0.0
  %v3800 = vadd.f32 %v3798, %v3799
  %v3801 = vsel %vm2397, %v3686, 0.0
  %v3802 = vadd.f32 %v3800, %v3801
  %v3803 = vsel %vm2397, %v3687, 0.0
  %v3804 = vadd.f32 %v3802, %v3803
  %v3805 = vsel %vm2397, %v3688, 0.0
  %v3806 = vadd.f32 %v3804, %v3805
  %v3807 = vsel %vm2397, %v3689, 0.0
  %v3808 = vadd.f32 %v3806, %v3807
  %v3809 = vsel %vm2397, %v3690, 0.0
  %v3810 = vadd.f32 %v3808, %v3809
  %v3811 = vsel %vm2397, %v3691, 0.0
  %v3812 = vadd.f32 %v3810, %v3811
  %v3813 = vsel %vm2397, %v3692, 0.0
  %v3814 = vadd.f32 %v3812, %v3813
  %v3815 = vsel %vm2397, %v3693, 0.0
  %v3816 = vadd.f32 %v3814, %v3815
  %v3817 = vsel %vm2397, %v3694, 0.0
  %v3818 = vadd.f32 %v3816, %v3817
  %v3819 = vsel %vm2397, %v3695, 0.0
  %v3820 = vadd.f32 %v3818, %v3819
  %v3821 = vsel %vm2397, %v3696, 0.0
  %v3822 = vadd.f32 %v3820, %v3821
  %v3823 = vsel %vm2397, %v3697, 0.0
  %v3824 = vadd.f32 %v3822, %v3823
  %v3825 = vsel %vm2397, %v3698, 0.0
  %v3826 = vadd.f32 %v3824, %v3825
  %v3827 = vsel %vm2397, %v3699, 0.0
  %v3828 = vadd.f32 %v3826, %v3827
  %v3829 = vsel %vm2397, %v3700, 0.0
  %v3830 = vadd.f32 %v3828, %v3829
  %v3831 = vsel %vm2397, %v3701, 0.0
  %v3832 = vadd.f32 %v3830, %v3831
  %v3833 = vsel %vm2397, %v3702, 0.0
  %v3834 = vadd.f32 %v3832, %v3833
  %v3835 = vrot.slane %v3834, 4
  %v3836 = vadd.f32 %v3834, %v3835
  %v3837 = vrot.slane %v3836, 2
  %v3838 = vadd.f32 %v3836, %v3837
  %v3839 = vrot.slane %v3838, 1
  %v3840 = vadd.f32 %v3838, %v3839
  %v3841 = vmul.f32 %v3771, %v3572
  %v3842 = vmul.f32 %v3840, %v3572
  %v3843 = vadd.f32 %v3841, 1e-05
  %v3844 = vadd.f32 %v3842, 1e-05
  %v3845 = vrsqrt.pop %v3843
  %v3846 = vrsqrt.pop %v3844
  %v3847 = vmul.f32 %v3575, %v3845
  %v3848 = vmul.f32 %v3576, %v3845
  %v3849 = vmul.f32 %v3577, %v3845
  %v3850 = vmul.f32 %v3578, %v3845
  %v3851 = vmul.f32 %v3579, %v3845
  %v3852 = vmul.f32 %v3580, %v3845
  %v3853 = vmul.f32 %v3581, %v3845
  %v3854 = vmul.f32 %v3582, %v3845
  %v3855 = vmul.f32 %v3583, %v3845
  %v3856 = vmul.f32 %v3584, %v3845
  %v3857 = vmul.f32 %v3585, %v3845
  %v3858 = vmul.f32 %v3586, %v3845
  %v3859 = vmul.f32 %v3587, %v3845
  %v3860 = vmul.f32 %v3588, %v3845
  %v3861 = vmul.f32 %v3589, %v3845
  %v3862 = vmul.f32 %v3590, %v3845
  %v3863 = vmul.f32 %v3591, %v3845
  %v3864 = vmul.f32 %v3592, %v3845
  %v3865 = vmul.f32 %v3593, %v3845
  %v3866 = vmul.f32 %v3594, %v3845
  %v3867 = vmul.f32 %v3595, %v3845
  %v3868 = vmul.f32 %v3596, %v3845
  %v3869 = vmul.f32 %v3597, %v3845
  %v3870 = vmul.f32 %v3598, %v3845
  %v3871 = vmul.f32 %v3599, %v3845
  %v3872 = vmul.f32 %v3600, %v3845
  %v3873 = vmul.f32 %v3601, %v3845
  %v3874 = vmul.f32 %v3602, %v3845
  %v3875 = vmul.f32 %v3603, %v3845
  %v3876 = vmul.f32 %v3604, %v3845
  %v3877 = vmul.f32 %v3605, %v3845
  %v3878 = vmul.f32 %v3606, %v3845
  %v3879 = vmul.f32 %v3607, %v3846
  %v3880 = vmul.f32 %v3608, %v3846
  %v3881 = vmul.f32 %v3609, %v3846
  %v3882 = vmul.f32 %v3610, %v3846
  %v3883 = vmul.f32 %v3611, %v3846
  %v3884 = vmul.f32 %v3612, %v3846
  %v3885 = vmul.f32 %v3613, %v3846
  %v3886 = vmul.f32 %v3614, %v3846
  %v3887 = vmul.f32 %v3615, %v3846
  %v3888 = vmul.f32 %v3616, %v3846
  %v3889 = vmul.f32 %v3617, %v3846
  %v3890 = vmul.f32 %v3618, %v3846
  %v3891 = vmul.f32 %v3619, %v3846
  %v3892 = vmul.f32 %v3620, %v3846
  %v3893 = vmul.f32 %v3621, %v3846
  %v3894 = vmul.f32 %v3622, %v3846
  %v3895 = vmul.f32 %v3623, %v3846
  %v3896 = vmul.f32 %v3624, %v3846
  %v3897 = vmul.f32 %v3625, %v3846
  %v3898 = vmul.f32 %v3626, %v3846
  %v3899 = vmul.f32 %v3627, %v3846
  %v3900 = vmul.f32 %v3628, %v3846
  %v3901 = vmul.f32 %v3629, %v3846
  %v3902 = vmul.f32 %v3630, %v3846
  %v3903 = vmul.f32 %v3631, %v3846
  %v3904 = vmul.f32 %v3632, %v3846
  %v3905 = vmul.f32 %v3633, %v3846
  %v3906 = vmul.f32 %v3634, %v3846
  %v3907 = vmul.f32 %v3635, %v3846
  %v3908 = vmul.f32 %v3636, %v3846
  %v3909 = vmul.f32 %v3637, %v3846
  %v3910 = vmul.f32 %v3638, %v3846
  %v3912 = vlaneseq
  %v3913 = vshrl.u32 %v3912, 7
  %v3914 = vsub.s32 0, %v3913
  %v3915 = vrot.slane %v3432, %v3914
  %v3917 = vmul.f32 %v3847, %v3915
  %v3918 = vmul.f32 %v3848, %v3915
  %v3919 = vmul.f32 %v3849, %v3915
  %v3920 = vmul.f32 %v3850, %v3915
  %v3921 = vmul.f32 %v3851, %v3915
  %v3922 = vmul.f32 %v3852, %v3915
  %v3923 = vmul.f32 %v3853, %v3915
  %v3924 = vmul.f32 %v3854, %v3915
  %v3925 = vmul.f32 %v3855, %v3915
  %v3926 = vmul.f32 %v3856, %v3915
  %v3927 = vmul.f32 %v3857, %v3915
  %v3928 = vmul.f32 %v3858, %v3915
  %v3929 = vmul.f32 %v3859, %v3915
  %v3930 = vmul.f32 %v3860, %v3915
  %v3931 = vmul.f32 %v3861, %v3915
  %v3932 = vmul.f32 %v3862, %v3915
  %v3933 = vmul.f32 %v3863, %v3915
  %v3934 = vmul.f32 %v3864, %v3915
  %v3935 = vmul.f32 %v3865, %v3915
  %v3936 = vmul.f32 %v3866, %v3915
  %v3937 = vmul.f32 %v3867, %v3915
  %v3938 = vmul.f32 %v3868, %v3915
  %v3939 = vmul.f32 %v3869, %v3915
  %v3940 = vmul.f32 %v3870, %v3915
  %v3941 = vmul.f32 %v3871, %v3915
  %v3942 = vmul.f32 %v3872, %v3915
  %v3943 = vmul.f32 %v3873, %v3915
  %v3944 = vmul.f32 %v3874, %v3915
  %v3945 = vmul.f32 %v3875, %v3915
  %v3946 = vmul.f32 %v3876, %v3915
  %v3947 = vmul.f32 %v3877, %v3915
  %v3948 = vmul.f32 %v3878, %v3915
  %v3949 = vmul.f32 %v3879, %v3915
  %v3950 = vmul.f32 %v3880, %v3915
  %v3951 = vmul.f32 %v3881, %v3915
  %v3952 = vmul.f32 %v3882, %v3915
  %v3953 = vmul.f32 %v3883, %v3915
  %v3954 = vmul.f32 %v3884, %v3915
  %v3955 = vmul.f32 %v3885, %v3915
  %v3956 = vmul.f32 %v3886, %v3915
  %v3957 = vmul.f32 %v3887, %v3915
  %v3958 = vmul.f32 %v3888, %v3915
  %v3959 = vmul.f32 %v3889, %v3915
  %v3960 = vmul.f32 %v3890, %v3915
  %v3961 = vmul.f32 %v3891, %v3915
  %v3962 = vmul.f32 %v3892, %v3915
  %v3963 = vmul.f32 %v3893, %v3915
  %v3964 = vmul.f32 %v3894, %v3915
  %v3965 = vmul.f32 %v3895, %v3915
  %v3966 = vmul.f32 %v3896, %v3915
  %v3967 = vmul.f32 %v3897, %v3915
  %v3968 = vmul.f32 %v3898, %v3915
  %v3969 = vmul.f32 %v3899, %v3915
  %v3970 = vmul.f32 %v3900, %v3915
  %v3971 = vmul.f32 %v3901, %v3915
  %v3972 = vmul.f32 %v3902, %v3915
  %v3973 = vmul.f32 %v3903, %v3915
  %v3974 = vmul.f32 %v3904, %v3915
  %v3975 = vmul.f32 %v3905, %v3915
  %v3976 = vmul.f32 %v3906, %v3915
  %v3977 = vmul.f32 %v3907, %v3915
  %v3978 = vmul.f32 %v3908, %v3915
  %v3979 = vmul.f32 %v3909, %v3915
  %v3980 = vmul.f32 %v3910, %v3915
  %v3982 = vlaneseq
  %v3983 = vshrl.u32 %v3982, 7
  %v3984 = vsub.s32 0, %v3983
  %v3985 = vrot.slane %v3433, %v3984
  %v3987 = vadd.f32 %v3917, %v3985
  %v3988 = vadd.f32 %v3918, %v3985
  %v3989 = vadd.f32 %v3919, %v3985
  %v3990 = vadd.f32 %v3920, %v3985
  %v3991 = vadd.f32 %v3921, %v3985
  %v3992 = vadd.f32 %v3922, %v3985
  %v3993 = vadd.f32 %v3923, %v3985
  %v3994 = vadd.f32 %v3924, %v3985
  %v3995 = vadd.f32 %v3925, %v3985
  %v3996 = vadd.f32 %v3926, %v3985
  %v3997 = vadd.f32 %v3927, %v3985
  %v3998 = vadd.f32 %v3928, %v3985
  %v3999 = vadd.f32 %v3929, %v3985
  %v4000 = vadd.f32 %v3930, %v3985
  %v4001 = vadd.f32 %v3931, %v3985
  %v4002 = vadd.f32 %v3932, %v3985
  %v4003 = vadd.f32 %v3933, %v3985
  %v4004 = vadd.f32 %v3934, %v3985
  %v4005 = vadd.f32 %v3935, %v3985
  %v4006 = vadd.f32 %v3936, %v3985
  %v4007 = vadd.f32 %v3937, %v3985
  %v4008 = vadd.f32 %v3938, %v3985
  %v4009 = vadd.f32 %v3939, %v3985
  %v4010 = vadd.f32 %v3940, %v3985
  %v4011 = vadd.f32 %v3941, %v3985
  %v4012 = vadd.f32 %v3942, %v3985
  %v4013 = vadd.f32 %v3943, %v3985
  %v4014 = vadd.f32 %v3944, %v3985
  %v4015 = vadd.f32 %v3945, %v3985
  %v4016 = vadd.f32 %v3946, %v3985
  %v4017 = vadd.f32 %v3947, %v3985
  %v4018 = vadd.f32 %v3948, %v3985
  %v4019 = vadd.f32 %v3949, %v3985
  %v4020 = vadd.f32 %v3950, %v3985
  %v4021 = vadd.f32 %v3951, %v3985
  %v4022 = vadd.f32 %v3952, %v3985
  %v4023 = vadd.f32 %v3953, %v3985
  %v4024 = vadd.f32 %v3954, %v3985
  %v4025 = vadd.f32 %v3955, %v3985
  %v4026 = vadd.f32 %v3956, %v3985
  %v4027 = vadd.f32 %v3957, %v3985
  %v4028 = vadd.f32 %v3958, %v3985
  %v4029 = vadd.f32 %v3959, %v3985
  %v4030 = vadd.f32 %v3960, %v3985
  %v4031 = vadd.f32 %v3961, %v3985
  %v4032 = vadd.f32 %v3962, %v3985
  %v4033 = vadd.f32 %v3963, %v3985
  %v4034 = vadd.f32 %v3964, %v3985
  %v4035 = vadd.f32 %v3965, %v3985
  %v4036 = vadd.f32 %v3966, %v3985
  %v4037 = vadd.f32 %v3967, %v3985
  %v4038 = vadd.f32 %v3968, %v3985
  %v4039 = vadd.f32 %v3969, %v3985
  %v4040 = vadd.f32 %v3970, %v3985
  %v4041 = vadd.f32 %v3971, %v3985
  %v4042 = vadd.f32 %v3972, %v3985
  %v4043 = vadd.f32 %v3973, %v3985
  %v4044 = vadd.f32 %v3974, %v3985
  %v4045 = vadd.f32 %v3975, %v3985
  %v4046 = vadd.f32 %v3976, %v3985
  %v4047 = vadd.f32 %v3977, %v3985
  %v4048 = vadd.f32 %v3978, %v3985
  %v4049 = vadd.f32 %v3979, %v3985
  %v4050 = vadd.f32 %v3980, %v3985
  %v4051 = vmax.f32 %v3987, 0.0
  %v4052 = vmax.f32 %v3988, 0.0
  %v4053 = vmax.f32 %v3989, 0.0
  %v4054 = vmax.f32 %v3990, 0.0
  %v4055 = vmax.f32 %v3991, 0.0
  %v4056 = vmax.f32 %v3992, 0.0
  %v4057 = vmax.f32 %v3993, 0.0
  %v4058 = vmax.f32 %v3994, 0.0
  %v4059 = vmax.f32 %v3995, 0.0
  %v4060 = vmax.f32 %v3996, 0.0
  %v4061 = vmax.f32 %v3997, 0.0
  %v4062 = vmax.f32 %v3998, 0.0
  %v4063 = vmax.f32 %v3999, 0.0
  %v4064 = vmax.f32 %v4000, 0.0
  %v4065 = vmax.f32 %v4001, 0.0
  %v4066 = vmax.f32 %v4002, 0.0
  %v4067 = vmax.f32 %v4003, 0.0
  %v4068 = vmax.f32 %v4004, 0.0
  %v4069 = vmax.f32 %v4005, 0.0
  %v4070 = vmax.f32 %v4006, 0.0
  %v4071 = vmax.f32 %v4007, 0.0
  %v4072 = vmax.f32 %v4008, 0.0
  %v4073 = vmax.f32 %v4009, 0.0
  %v4074 = vmax.f32 %v4010, 0.0
  %v4075 = vmax.f32 %v4011, 0.0
  %v4076 = vmax.f32 %v4012, 0.0
  %v4077 = vmax.f32 %v4013, 0.0
  %v4078 = vmax.f32 %v4014, 0.0
  %v4079 = vmax.f32 %v4015, 0.0
  %v4080 = vmax.f32 %v4016, 0.0
  %v4081 = vmax.f32 %v4017, 0.0
  %v4082 = vmax.f32 %v4018, 0.0
  %v4083 = vmax.f32 %v4019, 0.0
  %v4084 = vmax.f32 %v4020, 0.0
  %v4085 = vmax.f32 %v4021, 0.0
  %v4086 = vmax.f32 %v4022, 0.0
  %v4087 = vmax.f32 %v4023, 0.0
  %v4088 = vmax.f32 %v4024, 0.0
  %v4089 = vmax.f32 %v4025, 0.0
  %v4090 = vmax.f32 %v4026, 0.0
  %v4091 = vmax.f32 %v4027, 0.0
  %v4092 = vmax.f32 %v4028, 0.0
  %v4093 = vmax.f32 %v4029, 0.0
  %v4094 = vmax.f32 %v4030, 0.0
  %v4095 = vmax.f32 %v4031, 0.0
  %v4096 = vmax.f32 %v4032, 0.0
  %v4097 = vmax.f32 %v4033, 0.0
  %v4098 = vmax.f32 %v4034, 0.0
  %v4099 = vmax.f32 %v4035, 0.0
  %v4100 = vmax.f32 %v4036, 0.0
  %v4101 = vmax.f32 %v4037, 0.0
  %v4102 = vmax.f32 %v4038, 0.0
  %v4103 = vmax.f32 %v4039, 0.0
  %v4104 = vmax.f32 %v4040, 0.0
  %v4105 = vmax.f32 %v4041, 0.0
  %v4106 = vmax.f32 %v4042, 0.0
  %v4107 = vmax.f32 %v4043, 0.0
  %v4108 = vmax.f32 %v4044, 0.0
  %v4109 = vmax.f32 %v4045, 0.0
  %v4110 = vmax.f32 %v4046, 0.0
  %v4111 = vmax.f32 %v4047, 0.0
  %v4112 = vmax.f32 %v4048, 0.0
  %v4113 = vmax.f32 %v4049, 0.0
  %v4114 = vmax.f32 %v4050, 0.0
  %v4115 = vadd.f32 %v4051, %v4053
  %v4116 = vadd.f32 %v4052, %v4054
  %v4117 = vadd.f32 %v4055, %v4057
  %v4118 = vadd.f32 %v4056, %v4058
  %v4119 = vadd.f32 %v4059, %v4061
  %v4120 = vadd.f32 %v4060, %v4062
  %v4121 = vadd.f32 %v4063, %v4065
  %v4122 = vadd.f32 %v4064, %v4066
  %v4123 = vadd.f32 %v4067, %v4069
  %v4124 = vadd.f32 %v4068, %v4070
  %v4125 = vadd.f32 %v4071, %v4073
  %v4126 = vadd.f32 %v4072, %v4074
  %v4127 = vadd.f32 %v4075, %v4077
  %v4128 = vadd.f32 %v4076, %v4078
  %v4129 = vadd.f32 %v4079, %v4081
  %v4130 = vadd.f32 %v4080, %v4082
  %v4131 = vadd.f32 %v4083, %v4085
  %v4132 = vadd.f32 %v4084, %v4086
  %v4133 = vadd.f32 %v4087, %v4089
  %v4134 = vadd.f32 %v4088, %v4090
  %v4135 = vadd.f32 %v4091, %v4093
  %v4136 = vadd.f32 %v4092, %v4094
  %v4137 = vadd.f32 %v4095, %v4097
  %v4138 = vadd.f32 %v4096, %v4098
  %v4139 = vadd.f32 %v4099, %v4101
  %v4140 = vadd.f32 %v4100, %v4102
  %v4141 = vadd.f32 %v4103, %v4105
  %v4142 = vadd.f32 %v4104, %v4106
  %v4143 = vadd.f32 %v4107, %v4109
  %v4144 = vadd.f32 %v4108, %v4110
  %v4145 = vadd.f32 %v4111, %v4113
  %v4146 = vadd.f32 %v4112, %v4114
  %v4147 = vmul.f32 %v4115, 0.5
  %v4148 = vmul.f32 %v4116, 0.5
  %v4149 = vmul.f32 %v4117, 0.5
  %v4150 = vmul.f32 %v4118, 0.5
  %v4151 = vmul.f32 %v4119, 0.5
  %v4152 = vmul.f32 %v4120, 0.5
  %v4153 = vmul.f32 %v4121, 0.5
  %v4154 = vmul.f32 %v4122, 0.5
  %v4155 = vmul.f32 %v4123, 0.5
  %v4156 = vmul.f32 %v4124, 0.5
  %v4157 = vmul.f32 %v4125, 0.5
  %v4158 = vmul.f32 %v4126, 0.5
  %v4159 = vmul.f32 %v4127, 0.5
  %v4160 = vmul.f32 %v4128, 0.5
  %v4161 = vmul.f32 %v4129, 0.5
  %v4162 = vmul.f32 %v4130, 0.5
  %v4163 = vmul.f32 %v4131, 0.5
  %v4164 = vmul.f32 %v4132, 0.5
  %v4165 = vmul.f32 %v4133, 0.5
  %v4166 = vmul.f32 %v4134, 0.5
  %v4167 = vmul.f32 %v4135, 0.5
  %v4168 = vmul.f32 %v4136, 0.5
  %v4169 = vmul.f32 %v4137, 0.5
  %v4170 = vmul.f32 %v4138, 0.5
  %v4171 = vmul.f32 %v4139, 0.5
  %v4172 = vmul.f32 %v4140, 0.5
  %v4173 = vmul.f32 %v4141, 0.5
  %v4174 = vmul.f32 %v4142, 0.5
  %v4175 = vmul.f32 %v4143, 0.5
  %v4176 = vmul.f32 %v4144, 0.5
  %v4177 = vmul.f32 %v4145, 0.5
  %v4178 = vmul.f32 %v4146, 0.5
  %4179 = vst.msk [vmem:[#allocation2] sm:$0xff] %vm2397, %v4147
  %4180 = vst.msk [vmem:[#allocation2 + $0x8] sm:$0xff] %vm2397, %v4148
  %4181 = vst.msk [vmem:[#allocation2 + $0x10] sm:$0xff] %vm2397, %v4149
  %4182 = vst.msk [vmem:[#allocation2 + $0x18] sm:$0xff] %vm2397, %v4150
  %4183 = vst.msk [vmem:[#allocation2 + $0x20] sm:$0xff] %vm2397, %v4151
  %4184 = vst.msk [vmem:[#allocation2 + $0x28] sm:$0xff] %vm2397, %v4152
  %4185 = vst.msk [vmem:[#allocation2 + $0x30] sm:$0xff] %vm2397, %v4153
  %4186 = vst.msk [vmem:[#allocation2 + $0x38] sm:$0xff] %vm2397, %v4154
  %4187 = vst.msk [vmem:[#allocation2 + $0x40] sm:$0xff] %vm2397, %v4155
  %4188 = vst.msk [vmem:[#allocation2 + $0x48] sm:$0xff] %vm2397, %v4156
  %4189 = vst.msk [vmem:[#allocation2 + $0x50] sm:$0xff] %vm2397, %v4157
  %4190 = vst.msk [vmem:[#allocation2 + $0x58] sm:$0xff] %vm2397, %v4158
  %4191 = vst.msk [vmem:[#allocation2 + $0x60] sm:$0xff] %vm2397, %v4159
  %4192 = vst.msk [vmem:[#allocation2 + $0x68] sm:$0xff] %vm2397, %v4160
  %4193 = vst.msk [vmem:[#allocation2 + $0x70] sm:$0xff] %vm2397, %v4161
  %4194 = vst.msk [vmem:[#allocation2 + $0x78] sm:$0xff] %vm2397, %v4162
  %4195 = vst.msk [vmem:[#allocation2 + $0x80] sm:$0xff] %vm2397, %v4163
  %4196 = vst.msk [vmem:[#allocation2 + $0x88] sm:$0xff] %vm2397, %v4164
  %4197 = vst.msk [vmem:[#allocation2 + $0x90] sm:$0xff] %vm2397, %v4165
  %4198 = vst.msk [vmem:[#allocation2 + $0x98] sm:$0xff] %vm2397, %v4166
  %4199 = vst.msk [vmem:[#allocation2 + $0xa0] sm:$0xff] %vm2397, %v4167
  %4200 = vst.msk [vmem:[#allocation2 + $0xa8] sm:$0xff] %vm2397, %v4168
  %4201 = vst.msk [vmem:[#allocation2 + $0xb0] sm:$0xff] %vm2397, %v4169
  %4202 = vst.msk [vmem:[#allocation2 + $0xb8] sm:$0xff] %vm2397, %v4170
  %4203 = vst.msk [vmem:[#allocation2 + $0xc0] sm:$0xff] %vm2397, %v4171
  %4204 = vst.msk [vmem:[#allocation2 + $0xc8] sm:$0xff] %vm2397, %v4172
  %4205 = vst.msk [vmem:[#allocation2 + $0xd0] sm:$0xff] %vm2397, %v4173
  %4206 = vst.msk [vmem:[#allocation2 + $0xd8] sm:$0xff] %vm2397, %v4174
  %4207 = vst.msk [vmem:[#allocation2 + $0xe0] sm:$0xff] %vm2397, %v4175
  %4208 = vst.msk [vmem:[#allocation2 + $0xe8] sm:$0xff] %vm2397, %v4176
  %4209 = vst.msk [vmem:[#allocation2 + $0xf0] sm:$0xff] %vm2397, %v4177
  %4210 = vst.msk [vmem:[#allocation2 + $0xf8] sm:$0xff] %vm2397, %v4178
  %v4211 = vld [vmem:[#allocation2] ss:$2 sm:$0xff]
  %s4212 = scalar_lea.vmem [#allocation2], 16
  %v4213 = vld [vmem:[%s4212] ss:$2 sm:$0xff]
  %s4214 = scalar_lea.vmem [#allocation2], 32
  %v4215 = vld [vmem:[%s4214] ss:$2 sm:$0xff]
  %s4216 = scalar_lea.vmem [#allocation2], 48
  %v4217 = vld [vmem:[%s4216] ss:$2 sm:$0xff]
  %s4218 = scalar_lea.vmem [#allocation2], 64
  %v4219 = vld [vmem:[%s4218] ss:$2 sm:$0xff]
  %s4220 = scalar_lea.vmem [#allocation2], 80
  %v4221 = vld [vmem:[%s4220] ss:$2 sm:$0xff]
  %s4222 = scalar_lea.vmem [#allocation2], 96
  %v4223 = vld [vmem:[%s4222] ss:$2 sm:$0xff]
  %s4224 = scalar_lea.vmem [#allocation2], 112
  %v4225 = vld [vmem:[%s4224] ss:$2 sm:$0xff]
  %s4226 = scalar_lea.vmem [#allocation2], 128
  %v4227 = vld [vmem:[%s4226] ss:$2 sm:$0xff]
  %s4228 = scalar_lea.vmem [#allocation2], 144
  %v4229 = vld [vmem:[%s4228] ss:$2 sm:$0xff]
  %s4230 = scalar_lea.vmem [#allocation2], 160
  %v4231 = vld [vmem:[%s4230] ss:$2 sm:$0xff]
  %s4232 = scalar_lea.vmem [#allocation2], 176
  %v4233 = vld [vmem:[%s4232] ss:$2 sm:$0xff]
  %s4234 = scalar_lea.vmem [#allocation2], 192
  %v4235 = vld [vmem:[%s4234] ss:$2 sm:$0xff]
  %s4236 = scalar_lea.vmem [#allocation2], 208
  %v4237 = vld [vmem:[%s4236] ss:$2 sm:$0xff]
  %s4238 = scalar_lea.vmem [#allocation2], 224
  %v4239 = vld [vmem:[%s4238] ss:$2 sm:$0xff]
  %s4240 = scalar_lea.vmem [#allocation2], 240
  %v4241 = vld [vmem:[%s4240] ss:$2 sm:$0xff]
  %s4242 = scalar_lea.vmem [#allocation2], 1
  %v4243 = vld [vmem:[%s4242] ss:$2 sm:$0xff]
  %s4244 = scalar_lea.vmem [#allocation2], 17
  %v4245 = vld [vmem:[%s4244] ss:$2 sm:$0xff]
  %s4246 = scalar_lea.vmem [#allocation2], 33
  %v4247 = vld [vmem:[%s4246] ss:$2 sm:$0xff]
  %s4248 = scalar_lea.vmem [#allocation2], 49
  %v4249 = vld [vmem:[%s4248] ss:$2 sm:$0xff]
  %s4250 = scalar_lea.vmem [#allocation2], 65
  %v4251 = vld [vmem:[%s4250] ss:$2 sm:$0xff]
  %s4252 = scalar_lea.vmem [#allocation2], 81
  %v4253 = vld [vmem:[%s4252] ss:$2 sm:$0xff]
  %s4254 = scalar_lea.vmem [#allocation2], 97
  %v4255 = vld [vmem:[%s4254] ss:$2 sm:$0xff]
  %s4256 = scalar_lea.vmem [#allocation2], 113
  %v4257 = vld [vmem:[%s4256] ss:$2 sm:$0xff]
  %s4258 = scalar_lea.vmem [#allocation2], 129
  %v4259 = vld [vmem:[%s4258] ss:$2 sm:$0xff]
  %s4260 = scalar_lea.vmem [#allocation2], 145
  %v4261 = vld [vmem:[%s4260] ss:$2 sm:$0xff]
  %s4262 = scalar_lea.vmem [#allocation2], 161
  %v4263 = vld [vmem:[%s4262] ss:$2 sm:$0xff]
  %s4264 = scalar_lea.vmem [#allocation2], 177
  %v4265 = vld [vmem:[%s4264] ss:$2 sm:$0xff]
  %s4266 = scalar_lea.vmem [#allocation2], 193
  %v4267 = vld [vmem:[%s4266] ss:$2 sm:$0xff]
  %s4268 = scalar_lea.vmem [#allocation2], 209
  %v4269 = vld [vmem:[%s4268] ss:$2 sm:$0xff]
  %s4270 = scalar_lea.vmem [#allocation2], 225
  %v4271 = vld [vmem:[%s4270] ss:$2 sm:$0xff]
  %s4272 = scalar_lea.vmem [#allocation2], 241
  %v4273 = vld [vmem:[%s4272] ss:$2 sm:$0xff]
  %v4274 = vadd.f32 %v4211, %v4243
  %v4275 = vadd.f32 %v4213, %v4245
  %v4276 = vadd.f32 %v4215, %v4247
  %v4277 = vadd.f32 %v4217, %v4249
  %v4278 = vadd.f32 %v4219, %v4251
  %v4279 = vadd.f32 %v4221, %v4253
  %v4280 = vadd.f32 %v4223, %v4255
  %v4281 = vadd.f32 %v4225, %v4257
  %v4282 = vadd.f32 %v4227, %v4259
  %v4283 = vadd.f32 %v4229, %v4261
  %v4284 = vadd.f32 %v4231, %v4263
  %v4285 = vadd.f32 %v4233, %v4265
  %v4286 = vadd.f32 %v4235, %v4267
  %v4287 = vadd.f32 %v4237, %v4269
  %v4288 = vadd.f32 %v4239, %v4271
  %v4289 = vadd.f32 %v4241, %v4273
  %v4290 = vmul.f32 %v4274, 0.5
  %v4291 = vmul.f32 %v4275, 0.5
  %v4292 = vmul.f32 %v4276, 0.5
  %v4293 = vmul.f32 %v4277, 0.5
  %v4294 = vmul.f32 %v4278, 0.5
  %v4295 = vmul.f32 %v4279, 0.5
  %v4296 = vmul.f32 %v4280, 0.5
  %v4297 = vmul.f32 %v4281, 0.5
  %v4298 = vmul.f32 %v4282, 0.5
  %v4299 = vmul.f32 %v4283, 0.5
  %v4300 = vmul.f32 %v4284, 0.5
  %v4301 = vmul.f32 %v4285, 0.5
  %v4302 = vmul.f32 %v4286, 0.5
  %v4303 = vmul.f32 %v4287, 0.5
  %v4304 = vmul.f32 %v4288, 0.5
  %v4305 = vmul.f32 %v4289, 0.5
  %v4306 = vld [vmem:[%s4] sm:$0xff]
  %v4307 = vld [vmem:[%s4 + $0x8] sm:$0xff]
  %v4308 = vld [vmem:[%s4 + $0x10] sm:$0xff]
  %v4309 = vld [vmem:[%s4 + $0x18] sm:$0xff]
  %v4310 = vld [vmem:[%s4 + $0x20] sm:$0xff]
  %v4311 = vld [vmem:[%s4 + $0x28] sm:$0xff]
  %v4312 = vld [vmem:[%s4 + $0x30] sm:$0xff]
  %v4313 = vld [vmem:[%s4 + $0x38] sm:$0xff]
  %v4314 = vld [vmem:[%s4 + $0x40] sm:$0xff]
  %v4331 = vrot.slane %v4290, 7
  %v4332 = vrot.slane %v4291, 7
  %v4333 = vrot.slane %v4292, 7
  %v4334 = vrot.slane %v4293, 7
  %v4335 = vrot.slane %v4294, 7
  %v4336 = vrot.slane %v4295, 7
  %v4337 = vrot.slane %v4296, 7
  %v4338 = vrot.slane %v4297, 7
  %v4339 = vrot.slane %v4298, 7
  %v4340 = vrot.slane %v4299, 7
  %v4341 = vrot.slane %v4300, 7
  %v4342 = vrot.slane %v4301, 7
  %v4343 = vrot.slane %v4302, 7
  %v4344 = vrot.slane %v4303, 7
  %v4345 = vrot.slane %v4304, 7
  %v4346 = vrot.slane %v4305, 7
  %v4363 = vsel %vm169, 0.0, %v4331
  %v4364 = vsel %vm169, 0.0, %v4332
  %v4365 = vsel %vm169, 0.0, %v4333
  %v4366 = vsel %vm169, 0.0, %v4334
  %v4367 = vsel %vm169, 0.0, %v4335
  %v4368 = vsel %vm169, 0.0, %v4336
  %v4369 = vsel %vm169, 0.0, %v4337
  %v4370 = vsel %vm169, 0.0, %v4338
  %v4371 = vsel %vm169, 0.0, %v4339
  %v4372 = vsel %vm169, 0.0, %v4340
  %v4373 = vsel %vm169, 0.0, %v4341
  %v4374 = vsel %vm169, 0.0, %v4342
  %v4375 = vsel %vm169, 0.0, %v4343
  %v4376 = vsel %vm169, 0.0, %v4344
  %v4377 = vsel %vm169, 0.0, %v4345
  %v4378 = vsel %vm169, 0.0, %v4346
  %v4379 = vsel %vm169, %v4331, 0.0
  %v4380 = vsel %vm169, %v4332, 0.0
  %v4381 = vsel %vm169, %v4333, 0.0
  %v4382 = vsel %vm169, %v4334, 0.0
  %v4383 = vsel %vm169, %v4335, 0.0
  %v4384 = vsel %vm169, %v4336, 0.0
  %v4385 = vsel %vm169, %v4337, 0.0
  %v4386 = vsel %vm169, %v4338, 0.0
  %v4387 = vsel %vm169, %v4339, 0.0
  %v4388 = vsel %vm169, %v4340, 0.0
  %v4389 = vsel %vm169, %v4341, 0.0
  %v4390 = vsel %vm169, %v4342, 0.0
  %v4391 = vsel %vm169, %v4343, 0.0
  %v4392 = vsel %vm169, %v4344, 0.0
  %v4393 = vsel %vm169, %v4345, 0.0
  %v4394 = vsel %vm169, %v4346, 0.0
  %v4423 = vsel %vm492, %v493, %v496
  %v4424 = vrot.slane %v4363, 1
  %v4425 = vrot.slane %v4379, 1
  %v4426 = vsel %vm492, %v4424, %v4425
  %v4427 = vrot.slane %v4364, 1
  %v4428 = vrot.slane %v4380, 1
  %v4429 = vsel %vm492, %v4427, %v4428
  %v4430 = vrot.slane %v4365, 1
  %v4431 = vrot.slane %v4381, 1
  %v4432 = vsel %vm492, %v4430, %v4431
  %v4433 = vrot.slane %v4366, 1
  %v4434 = vrot.slane %v4382, 1
  %v4435 = vsel %vm492, %v4433, %v4434
  %v4436 = vrot.slane %v4367, 1
  %v4437 = vrot.slane %v4383, 1
  %v4438 = vsel %vm492, %v4436, %v4437
  %v4439 = vrot.slane %v4368, 1
  %v4440 = vrot.slane %v4384, 1
  %v4441 = vsel %vm492, %v4439, %v4440
  %v4442 = vrot.slane %v4369, 1
  %v4443 = vrot.slane %v4385, 1
  %v4444 = vsel %vm492, %v4442, %v4443
  %v4445 = vrot.slane %v4371, 1
  %v4446 = vrot.slane %v4387, 1
  %v4447 = vsel %vm492, %v4445, %v4446
  %v4448 = vrot.slane %v4372, 1
  %v4449 = vrot.slane %v4388, 1
  %v4450 = vsel %vm492, %v4448, %v4449
  %v4451 = vrot.slane %v4373, 1
  %v4452 = vrot.slane %v4389, 1
  %v4453 = vsel %vm492, %v4451, %v4452
  %v4454 = vrot.slane %v4374, 1
  %v4455 = vrot.slane %v4390, 1
  %v4456 = vsel %vm492, %v4454, %v4455
  %v4457 = vrot.slane %v4375, 1
  %v4458 = vrot.slane %v4391, 1
  %v4459 = vsel %vm492, %v4457, %v4458
  %v4460 = vrot.slane %v4376, 1
  %v4461 = vrot.slane %v4392, 1
  %v4462 = vsel %vm492, %v4460, %v4461
  %v4463 = vrot.slane %v4377, 1
  %v4464 = vrot.slane %v4393, 1
  %v4465 = vsel %vm492, %v4463, %v4464
  %4466 = vrot.lane.b32.xlu0 %v4423, 8
  %v4467 = vpop.permute.xlu0 %4466
  %4468 = vrot.lane.b32.xlu0 %v4426, 8
  %v4469 = vpop.permute.xlu0 %4468
  %4470 = vrot.lane.b32.xlu0 %v4429, 8
  %v4471 = vpop.permute.xlu0 %4470
  %4472 = vrot.lane.b32.xlu0 %v4432, 8
  %v4473 = vpop.permute.xlu0 %4472
  %4474 = vrot.lane.b32.xlu0 %v4435, 8
  %v4475 = vpop.permute.xlu0 %4474
  %4476 = vrot.lane.b32.xlu0 %v4438, 8
  %v4477 = vpop.permute.xlu0 %4476
  %4478 = vrot.lane.b32.xlu0 %v4441, 8
  %v4479 = vpop.permute.xlu0 %4478
  %4480 = vrot.lane.b32.xlu0 %v4444, 8
  %v4481 = vpop.permute.xlu0 %4480
  %4482 = vrot.lane.b32.xlu0 %v4447, 8
  %v4483 = vpop.permute.xlu0 %4482
  %4484 = vrot.lane.b32.xlu0 %v4450, 8
  %v4485 = vpop.permute.xlu0 %4484
  %4486 = vrot.lane.b32.xlu0 %v4453, 8
  %v4487 = vpop.permute.xlu0 %4486
  %4488 = vrot.lane.b32.xlu0 %v4456, 8
  %v4489 = vpop.permute.xlu0 %4488
  %4490 = vrot.lane.b32.xlu0 %v4459, 8
  %v4491 = vpop.permute.xlu0 %4490
  %4492 = vrot.lane.b32.xlu0 %v4462, 8
  %v4493 = vpop.permute.xlu0 %4492
  %4494 = vrot.lane.b32.xlu0 %v4465, 8
  %v4495 = vpop.permute.xlu0 %4494
  %v4511 = vsel %vm834, %v835, %v838
  %v4512 = vrot.slane %v4363, 2
  %v4513 = vrot.slane %v4379, 2
  %v4514 = vsel %vm834, %v4512, %v4513
  %v4515 = vrot.slane %v4364, 2
  %v4516 = vrot.slane %v4380, 2
  %v4517 = vsel %vm834, %v4515, %v4516
  %v4518 = vrot.slane %v4365, 2
  %v4519 = vrot.slane %v4381, 2
  %v4520 = vsel %vm834, %v4518, %v4519
  %v4521 = vrot.slane %v4366, 2
  %v4522 = vrot.slane %v4382, 2
  %v4523 = vsel %vm834, %v4521, %v4522
  %v4524 = vrot.slane %v4367, 2
  %v4525 = vrot.slane %v4383, 2
  %v4526 = vsel %vm834, %v4524, %v4525
  %v4527 = vrot.slane %v4368, 2
  %v4528 = vrot.slane %v4384, 2
  %v4529 = vsel %vm834, %v4527, %v4528
  %v4530 = vrot.slane %v4369, 2
  %v4531 = vrot.slane %v4385, 2
  %v4532 = vsel %vm834, %v4530, %v4531
  %v4533 = vrot.slane %v4371, 2
  %v4534 = vrot.slane %v4387, 2
  %v4535 = vsel %vm834, %v4533, %v4534
  %v4536 = vrot.slane %v4372, 2
  %v4537 = vrot.slane %v4388, 2
  %v4538 = vsel %vm834, %v4536, %v4537
  %v4539 = vrot.slane %v4373, 2
  %v4540 = vrot.slane %v4389, 2
  %v4541 = vsel %vm834, %v4539, %v4540
  %v4542 = vrot.slane %v4374, 2
  %v4543 = vrot.slane %v4390, 2
  %v4544 = vsel %vm834, %v4542, %v4543
  %v4545 = vrot.slane %v4375, 2
  %v4546 = vrot.slane %v4391, 2
  %v4547 = vsel %vm834, %v4545, %v4546
  %v4548 = vrot.slane %v4376, 2
  %v4549 = vrot.slane %v4392, 2
  %v4550 = vsel %vm834, %v4548, %v4549
  %v4551 = vrot.slane %v4377, 2
  %v4552 = vrot.slane %v4393, 2
  %v4553 = vsel %vm834, %v4551, %v4552
  %4554 = vrot.lane.b32.xlu0 %v4511, 16
  %v4555 = vpop.permute.xlu0 %4554
  %4556 = vrot.lane.b32.xlu0 %v4514, 16
  %v4557 = vpop.permute.xlu0 %4556
  %4558 = vrot.lane.b32.xlu0 %v4517, 16
  %v4559 = vpop.permute.xlu0 %4558
  %4560 = vrot.lane.b32.xlu0 %v4520, 16
  %v4561 = vpop.permute.xlu0 %4560
  %4562 = vrot.lane.b32.xlu0 %v4523, 16
  %v4563 = vpop.permute.xlu0 %4562
  %4564 = vrot.lane.b32.xlu0 %v4526, 16
  %v4565 = vpop.permute.xlu0 %4564
  %4566 = vrot.lane.b32.xlu0 %v4529, 16
  %v4567 = vpop.permute.xlu0 %4566
  %4568 = vrot.lane.b32.xlu0 %v4532, 16
  %v4569 = vpop.permute.xlu0 %4568
  %4570 = vrot.lane.b32.xlu0 %v4535, 16
  %v4571 = vpop.permute.xlu0 %4570
  %4572 = vrot.lane.b32.xlu0 %v4538, 16
  %v4573 = vpop.permute.xlu0 %4572
  %4574 = vrot.lane.b32.xlu0 %v4541, 16
  %v4575 = vpop.permute.xlu0 %4574
  %4576 = vrot.lane.b32.xlu0 %v4544, 16
  %v4577 = vpop.permute.xlu0 %4576
  %4578 = vrot.lane.b32.xlu0 %v4547, 16
  %v4579 = vpop.permute.xlu0 %4578
  %4580 = vrot.lane.b32.xlu0 %v4550, 16
  %v4581 = vpop.permute.xlu0 %4580
  %4582 = vrot.lane.b32.xlu0 %v4553, 16
  %v4583 = vpop.permute.xlu0 %4582
  %4601 = vrot.lane.b32.xlu0 %v4363, 24
  %v4602 = vpop.permute.xlu0 %4601
  %4603 = vrot.lane.b32.xlu0 %v4364, 24
  %v4604 = vpop.permute.xlu0 %4603
  %4605 = vrot.lane.b32.xlu0 %v4365, 24
  %v4606 = vpop.permute.xlu0 %4605
  %4607 = vrot.lane.b32.xlu0 %v4366, 24
  %v4608 = vpop.permute.xlu0 %4607
  %4609 = vrot.lane.b32.xlu0 %v4367, 24
  %v4610 = vpop.permute.xlu0 %4609
  %4611 = vrot.lane.b32.xlu0 %v4368, 24
  %v4612 = vpop.permute.xlu0 %4611
  %4613 = vrot.lane.b32.xlu0 %v4369, 24
  %v4614 = vpop.permute.xlu0 %4613
  %4615 = vrot.lane.b32.xlu0 %v4370, 24
  %v4616 = vpop.permute.xlu0 %4615
  %4617 = vrot.lane.b32.xlu0 %v4371, 24
  %v4618 = vpop.permute.xlu0 %4617
  %4619 = vrot.lane.b32.xlu0 %v4372, 24
  %v4620 = vpop.permute.xlu0 %4619
  %4621 = vrot.lane.b32.xlu0 %v4373, 24
  %v4622 = vpop.permute.xlu0 %4621
  %4623 = vrot.lane.b32.xlu0 %v4374, 24
  %v4624 = vpop.permute.xlu0 %4623
  %4625 = vrot.lane.b32.xlu0 %v4375, 24
  %v4626 = vpop.permute.xlu0 %4625
  %4627 = vrot.lane.b32.xlu0 %v4376, 24
  %v4628 = vpop.permute.xlu0 %4627
  %4629 = vrot.lane.b32.xlu0 %v4377, 24
  %v4630 = vpop.permute.xlu0 %4629
  %4631 = vrot.lane.b32.xlu0 %v4378, 24
  %v4632 = vpop.permute.xlu0 %4631
  %v4651 = vrot.slane %v4370, 1
  %v4652 = vrot.slane %v4386, 1
  %v4653 = vsel %vm492, %v4651, %v4652
  %v4654 = vrot.slane %v4378, 1
  %v4655 = vrot.slane %v4394, 1
  %v4656 = vsel %vm492, %v4654, %v4655
  %4657 = vrot.lane.b32.xlu0 %v4426, 32
  %v4658 = vpop.permute.xlu0 %4657
  %4659 = vrot.lane.b32.xlu0 %v4429, 32
  %v4660 = vpop.permute.xlu0 %4659
  %4661 = vrot.lane.b32.xlu0 %v4432, 32
  %v4662 = vpop.permute.xlu0 %4661
  %4663 = vrot.lane.b32.xlu0 %v4435, 32
  %v4664 = vpop.permute.xlu0 %4663
  %4665 = vrot.lane.b32.xlu0 %v4438, 32
  %v4666 = vpop.permute.xlu0 %4665
  %4667 = vrot.lane.b32.xlu0 %v4441, 32
  %v4668 = vpop.permute.xlu0 %4667
  %4669 = vrot.lane.b32.xlu0 %v4444, 32
  %v4670 = vpop.permute.xlu0 %4669
  %4671 = vrot.lane.b32.xlu0 %v4653, 32
  %v4672 = vpop.permute.xlu0 %4671
  %4673 = vrot.lane.b32.xlu0 %v4447, 32
  %v4674 = vpop.permute.xlu0 %4673
  %4675 = vrot.lane.b32.xlu0 %v4450, 32
  %v4676 = vpop.permute.xlu0 %4675
  %4677 = vrot.lane.b32.xlu0 %v4453, 32
  %v4678 = vpop.permute.xlu0 %4677
  %4679 = vrot.lane.b32.xlu0 %v4456, 32
  %v4680 = vpop.permute.xlu0 %4679
  %4681 = vrot.lane.b32.xlu0 %v4459, 32
  %v4682 = vpop.permute.xlu0 %4681
  %4683 = vrot.lane.b32.xlu0 %v4462, 32
  %v4684 = vpop.permute.xlu0 %4683
  %4685 = vrot.lane.b32.xlu0 %v4465, 32
  %v4686 = vpop.permute.xlu0 %4685
  %4687 = vrot.lane.b32.xlu0 %v4656, 32
  %v4688 = vpop.permute.xlu0 %4687
  %v4705 = vrot.slane %v4370, 2
  %v4706 = vrot.slane %v4386, 2
  %v4707 = vsel %vm834, %v4705, %v4706
  %v4708 = vrot.slane %v4378, 2
  %v4709 = vrot.slane %v4394, 2
  %v4710 = vsel %vm834, %v4708, %v4709
  %4711 = vrot.lane.b32.xlu0 %v4514, 40
  %v4712 = vpop.permute.xlu0 %4711
  %4713 = vrot.lane.b32.xlu0 %v4517, 40
  %v4714 = vpop.permute.xlu0 %4713
  %4715 = vrot.lane.b32.xlu0 %v4520, 40
  %v4716 = vpop.permute.xlu0 %4715
  %4717 = vrot.lane.b32.xlu0 %v4523, 40
  %v4718 = vpop.permute.xlu0 %4717
  %4719 = vrot.lane.b32.xlu0 %v4526, 40
  %v4720 = vpop.permute.xlu0 %4719
  %4721 = vrot.lane.b32.xlu0 %v4529, 40
  %v4722 = vpop.permute.xlu0 %4721
  %4723 = vrot.lane.b32.xlu0 %v4532, 40
  %v4724 = vpop.permute.xlu0 %4723
  %4725 = vrot.lane.b32.xlu0 %v4707, 40
  %v4726 = vpop.permute.xlu0 %4725
  %4727 = vrot.lane.b32.xlu0 %v4535, 40
  %v4728 = vpop.permute.xlu0 %4727
  %4729 = vrot.lane.b32.xlu0 %v4538, 40
  %v4730 = vpop.permute.xlu0 %4729
  %4731 = vrot.lane.b32.xlu0 %v4541, 40
  %v4732 = vpop.permute.xlu0 %4731
  %4733 = vrot.lane.b32.xlu0 %v4544, 40
  %v4734 = vpop.permute.xlu0 %4733
  %4735 = vrot.lane.b32.xlu0 %v4547, 40
  %v4736 = vpop.permute.xlu0 %4735
  %4737 = vrot.lane.b32.xlu0 %v4550, 40
  %v4738 = vpop.permute.xlu0 %4737
  %4739 = vrot.lane.b32.xlu0 %v4553, 40
  %v4740 = vpop.permute.xlu0 %4739
  %4741 = vrot.lane.b32.xlu0 %v4710, 40
  %v4742 = vpop.permute.xlu0 %4741
  %4759 = vrot.lane.b32.xlu0 %v4364, 48
  %v4760 = vpop.permute.xlu0 %4759
  %4761 = vrot.lane.b32.xlu0 %v4365, 48
  %v4762 = vpop.permute.xlu0 %4761
  %4763 = vrot.lane.b32.xlu0 %v4366, 48
  %v4764 = vpop.permute.xlu0 %4763
  %4765 = vrot.lane.b32.xlu0 %v4367, 48
  %v4766 = vpop.permute.xlu0 %4765
  %4767 = vrot.lane.b32.xlu0 %v4368, 48
  %v4768 = vpop.permute.xlu0 %4767
  %4769 = vrot.lane.b32.xlu0 %v4369, 48
  %v4770 = vpop.permute.xlu0 %4769
  %4771 = vrot.lane.b32.xlu0 %v4370, 48
  %v4772 = vpop.permute.xlu0 %4771
  %4773 = vrot.lane.b32.xlu0 %v364, 48
  %v4774 = vpop.permute.xlu0 %4773
  %4775 = vrot.lane.b32.xlu0 %v4372, 48
  %v4776 = vpop.permute.xlu0 %4775
  %4777 = vrot.lane.b32.xlu0 %v4373, 48
  %v4778 = vpop.permute.xlu0 %4777
  %4779 = vrot.lane.b32.xlu0 %v4374, 48
  %v4780 = vpop.permute.xlu0 %4779
  %4781 = vrot.lane.b32.xlu0 %v4375, 48
  %v4782 = vpop.permute.xlu0 %4781
  %4783 = vrot.lane.b32.xlu0 %v4376, 48
  %v4784 = vpop.permute.xlu0 %4783
  %4785 = vrot.lane.b32.xlu0 %v4377, 48
  %v4786 = vpop.permute.xlu0 %4785
  %4787 = vrot.lane.b32.xlu0 %v4378, 48
  %v4788 = vpop.permute.xlu0 %4787
  %4804 = vrot.lane.b32.xlu0 %v4429, 56
  %v4805 = vpop.permute.xlu0 %4804
  %4806 = vrot.lane.b32.xlu0 %v4432, 56
  %v4807 = vpop.permute.xlu0 %4806
  %4808 = vrot.lane.b32.xlu0 %v4435, 56
  %v4809 = vpop.permute.xlu0 %4808
  %4810 = vrot.lane.b32.xlu0 %v4438, 56
  %v4811 = vpop.permute.xlu0 %4810
  %4812 = vrot.lane.b32.xlu0 %v4441, 56
  %v4813 = vpop.permute.xlu0 %4812
  %4814 = vrot.lane.b32.xlu0 %v4444, 56
  %v4815 = vpop.permute.xlu0 %4814
  %4816 = vrot.lane.b32.xlu0 %v4653, 56
  %v4817 = vpop.permute.xlu0 %4816
  %4818 = vrot.lane.b32.xlu0 %v4423, 56
  %v4819 = vpop.permute.xlu0 %4818
  %4820 = vrot.lane.b32.xlu0 %v4450, 56
  %v4821 = vpop.permute.xlu0 %4820
  %4822 = vrot.lane.b32.xlu0 %v4453, 56
  %v4823 = vpop.permute.xlu0 %4822
  %4824 = vrot.lane.b32.xlu0 %v4456, 56
  %v4825 = vpop.permute.xlu0 %4824
  %4826 = vrot.lane.b32.xlu0 %v4459, 56
  %v4827 = vpop.permute.xlu0 %4826
  %4828 = vrot.lane.b32.xlu0 %v4462, 56
  %v4829 = vpop.permute.xlu0 %4828
  %4830 = vrot.lane.b32.xlu0 %v4465, 56
  %v4831 = vpop.permute.xlu0 %4830
  %4832 = vrot.lane.b32.xlu0 %v4656, 56
  %v4833 = vpop.permute.xlu0 %4832
  %4849 = vrot.lane.b32.xlu0 %v4517, 64
  %v4850 = vpop.permute.xlu0 %4849
  %4851 = vrot.lane.b32.xlu0 %v4520, 64
  %v4852 = vpop.permute.xlu0 %4851
  %4853 = vrot.lane.b32.xlu0 %v4523, 64
  %v4854 = vpop.permute.xlu0 %4853
  %4855 = vrot.lane.b32.xlu0 %v4526, 64
  %v4856 = vpop.permute.xlu0 %4855
  %4857 = vrot.lane.b32.xlu0 %v4529, 64
  %v4858 = vpop.permute.xlu0 %4857
  %4859 = vrot.lane.b32.xlu0 %v4532, 64
  %v4860 = vpop.permute.xlu0 %4859
  %4861 = vrot.lane.b32.xlu0 %v4707, 64
  %v4862 = vpop.permute.xlu0 %4861
  %4863 = vrot.lane.b32.xlu0 %v4511, 64
  %v4864 = vpop.permute.xlu0 %4863
  %4865 = vrot.lane.b32.xlu0 %v4538, 64
  %v4866 = vpop.permute.xlu0 %4865
  %4867 = vrot.lane.b32.xlu0 %v4541, 64
  %v4868 = vpop.permute.xlu0 %4867
  %4869 = vrot.lane.b32.xlu0 %v4544, 64
  %v4870 = vpop.permute.xlu0 %4869
  %4871 = vrot.lane.b32.xlu0 %v4547, 64
  %v4872 = vpop.permute.xlu0 %4871
  %4873 = vrot.lane.b32.xlu0 %v4550, 64
  %v4874 = vpop.permute.xlu0 %4873
  %4875 = vrot.lane.b32.xlu0 %v4553, 64
  %v4876 = vpop.permute.xlu0 %4875
  %4877 = vrot.lane.b32.xlu0 %v4710, 64
  %v4878 = vpop.permute.xlu0 %4877
  %v4894 = vsel %vm2397, %v364, %v4467
  %v4895 = vsel %vm2397, %v4363, %v4469
  %v4896 = vsel %vm2397, %v4364, %v4471
  %v4897 = vsel %vm2397, %v4365, %v4473
  %v4898 = vsel %vm2397, %v4366, %v4475
  %v4899 = vsel %vm2397, %v4367, %v4477
  %v4900 = vsel %vm2397, %v4368, %v4479
  %v4901 = vsel %vm2397, %v4369, %v4481
  %v4902 = vsel %vm2397, %v4371, %v4483
  %v4903 = vsel %vm2397, %v4372, %v4485
  %v4904 = vsel %vm2397, %v4373, %v4487
  %v4905 = vsel %vm2397, %v4374, %v4489
  %v4906 = vsel %vm2397, %v4375, %v4491
  %v4907 = vsel %vm2397, %v4376, %v4493
  %v4908 = vsel %vm2397, %v4377, %v4495
  %v4909 = vsel %vm2525, %v4894, %v4555
  %v4910 = vsel %vm2525, %v4895, %v4557
  %v4911 = vsel %vm2525, %v4896, %v4559
  %v4912 = vsel %vm2525, %v4897, %v4561
  %v4913 = vsel %vm2525, %v4898, %v4563
  %v4914 = vsel %vm2525, %v4899, %v4565
  %v4915 = vsel %vm2525, %v4900, %v4567
  %v4916 = vsel %vm2525, %v4901, %v4569
  %v4917 = vsel %vm2525, %v4902, %v4571
  %v4918 = vsel %vm2525, %v4903, %v4573
  %v4919 = vsel %vm2525, %v4904, %v4575
  %v4920 = vsel %vm2525, %v4905, %v4577
  %v4921 = vsel %vm2525, %v4906, %v4579
  %v4922 = vsel %vm2525, %v4907, %v4581
  %v4923 = vsel %vm2525, %v4908, %v4583
  %v4924 = vsel %vm2655, %v4909, %v4602
  %v4925 = vsel %vm2655, %v4910, %v4604
  %v4926 = vsel %vm2655, %v4911, %v4606
  %v4927 = vsel %vm2655, %v4912, %v4608
  %v4928 = vsel %vm2655, %v4913, %v4610
  %v4929 = vsel %vm2655, %v4914, %v4612
  %v4930 = vsel %vm2655, %v4915, %v4614
  %v4931 = vsel %vm2655, %v4916, %v4616
  %v4932 = vsel %vm2655, %v4909, %v4618
  %v4933 = vsel %vm2655, %v4917, %v4620
  %v4934 = vsel %vm2655, %v4918, %v4622
  %v4935 = vsel %vm2655, %v4919, %v4624
  %v4936 = vsel %vm2655, %v4920, %v4626
  %v4937 = vsel %vm2655, %v4921, %v4628
  %v4938 = vsel %vm2655, %v4922, %v4630
  %v4939 = vsel %vm2655, %v4923, %v4632
  %v4940 = vsel %vm2785, %v4924, %v4658
  %v4941 = vsel %vm2785, %v4925, %v4660
  %v4942 = vsel %vm2785, %v4926, %v4662
  %v4943 = vsel %vm2785, %v4927, %v4664
  %v4944 = vsel %vm2785, %v4928, %v4666
  %v4945 = vsel %vm2785, %v4929, %v4668
  %v4946 = vsel %vm2785, %v4930, %v4670
  %v4947 = vsel %vm2785, %v4931, %v4672
  %v4948 = vsel %vm2785, %v4932, %v4674
  %v4949 = vsel %vm2785, %v4933, %v4676
  %v4950 = vsel %vm2785, %v4934, %v4678
  %v4951 = vsel %vm2785, %v4935, %v4680
  %v4952 = vsel %vm2785, %v4936, %v4682
  %v4953 = vsel %vm2785, %v4937, %v4684
  %v4954 = vsel %vm2785, %v4938, %v4686
  %v4955 = vsel %vm2785, %v4939, %v4688
  %vm4956 = vcmask 326656
  %v4957 = vsel %vm4956, %v4940, %v4712
  %v4958 = vsel %vm4956, %v4941, %v4714
  %v4959 = vsel %vm4956, %v4942, %v4716
  %v4960 = vsel %vm4956, %v4943, %v4718
  %v4961 = vsel %vm4956, %v4944, %v4720
  %v4962 = vsel %vm4956, %v4945, %v4722
  %v4963 = vsel %vm4956, %v4946, %v4724
  %v4964 = vsel %vm4956, %v4947, %v4726
  %v4965 = vsel %vm4956, %v4948, %v4728
  %v4966 = vsel %vm4956, %v4949, %v4730
  %v4967 = vsel %vm4956, %v4950, %v4732
  %v4968 = vsel %vm4956, %v4951, %v4734
  %v4969 = vsel %vm4956, %v4952, %v4736
  %v4970 = vsel %vm4956, %v4953, %v4738
  %v4971 = vsel %vm4956, %v4954, %v4740
  %v4972 = vsel %vm4956, %v4955, %v4742
  %vm4973 = vcmask 392192
  %v4974 = vsel %vm4973, %v4957, %v4760
  %v4975 = vsel %vm4973, %v4958, %v4762
  %v4976 = vsel %vm4973, %v4959, %v4764
  %v4977 = vsel %vm4973, %v4960, %v4766
  %v4978 = vsel %vm4973, %v4961, %v4768
  %v4979 = vsel %vm4973, %v4962, %v4770
  %v4980 = vsel %vm4973, %v4963, %v4772
  %v4981 = vsel %vm4973, %v4964, %v4774
  %v4982 = vsel %vm4973, %v4965, %v4776
  %v4983 = vsel %vm4973, %v4966, %v4778
  %v4984 = vsel %vm4973, %v4967, %v4780
  %v4985 = vsel %vm4973, %v4968, %v4782
  %v4986 = vsel %vm4973, %v4969, %v4784
  %v4987 = vsel %vm4973, %v4970, %v4786
  %v4988 = vsel %vm4973, %v4971, %v4788
  %v4989 = vsel %vm4973, %v4972, %v4774
  %vm4990 = vcmask 457728
  %v4991 = vsel %vm4990, %v4974, %v4805
  %v4992 = vsel %vm4990, %v4975, %v4807
  %v4993 = vsel %vm4990, %v4976, %v4809
  %v4994 = vsel %vm4990, %v4977, %v4811
  %v4995 = vsel %vm4990, %v4978, %v4813
  %v4996 = vsel %vm4990, %v4979, %v4815
  %v4997 = vsel %vm4990, %v4980, %v4817
  %v4998 = vsel %vm4990, %v4981, %v4819
  %v4999 = vsel %vm4990, %v4982, %v4821
  %v5000 = vsel %vm4990, %v4983, %v4823
  %v5001 = vsel %vm4990, %v4984, %v4825
  %v5002 = vsel %vm4990, %v4985, %v4827
  %v5003 = vsel %vm4990, %v4986, %v4829
  %v5004 = vsel %vm4990, %v4987, %v4831
  %v5005 = vsel %vm4990, %v4988, %v4833
  %v5006 = vsel %vm4990, %v4989, %v4819
  %vm5007 = vcmask 523264
  %v5008 = vsel %vm5007, %v4991, %v4850
  %v5009 = vsel %vm5007, %v4992, %v4852
  %v5010 = vsel %vm5007, %v4993, %v4854
  %v5011 = vsel %vm5007, %v4994, %v4856
  %v5012 = vsel %vm5007, %v4995, %v4858
  %v5013 = vsel %vm5007, %v4996, %v4860
  %v5014 = vsel %vm5007, %v4997, %v4862
  %v5015 = vsel %vm5007, %v4998, %v4864
  %v5016 = vsel %vm5007, %v4999, %v4866
  %v5017 = vsel %vm5007, %v5000, %v4868
  %v5018 = vsel %vm5007, %v5001, %v4870
  %v5019 = vsel %vm5007, %v5002, %v4872
  %v5020 = vsel %vm5007, %v5003, %v4874
  %v5021 = vsel %vm5007, %v5004, %v4876
  %v5022 = vsel %vm5007, %v5005, %v4878
  %v5023 = vsel %vm5007, %v5006, %v4864
  %vm5024 = vcmask 588800
  %v5026 = vsel %vm5024, %v5008, 0
  %v5029 = vsel %vm5024, %v5009, 0
  %v5032 = vsel %vm5024, %v5010, 0
  %v5035 = vsel %vm5024, %v5011, 0
  %v5038 = vsel %vm5024, %v5012, 0
  %v5041 = vsel %vm5024, %v5013, 0
  %v5044 = vsel %vm5024, %v5014, 0
  %v5047 = vsel %vm5024, %v5015, 0
  %v5050 = vsel %vm5024, %v5016, 0
  %v5053 = vsel %vm5024, %v5017, 0
  %v5056 = vsel %vm5024, %v5018, 0
  %v5059 = vsel %vm5024, %v5019, 0
  %v5062 = vsel %vm5024, %v5020, 0
  %v5065 = vsel %vm5024, %v5021, 0
  %v5068 = vsel %vm5024, %v5022, 0
  %v5071 = vsel %vm5024, %v5023, 0
  %5073 = vmatprep.subr.mxu0 0.0
  %5074 = vmatpush1.msra.mxu0 0.0
  %5075 = vmatprep.subr.mxu0 0.0
  %5076 = vmatpush1.msra.mxu0 0.0
  %5077 = vmatprep.subr.mxu0 0.0
  %5078 = vmatpush1.msra.mxu0 0.0
  %5079 = vmatprep.subr.mxu0 0.0
  %5080 = vmatpush1.msra.mxu0 0.0
  %5081 = vmatprep.subr.mxu0 0.0
  %5082 = vmatpush1.msra.mxu0 0.0
  %5083 = vmatprep.subr.mxu0 0.0
  %5084 = vmatpush1.msra.mxu0 0.0
  %5085 = vmatprep.subr.mxu0 0.0
  %5086 = vmatpush1.msra.mxu0 0.0
  %5087 = vmatprep.subr.mxu0 0.0
  %5088 = vmatpush1.msra.mxu0 %v4314
  %5089 = vmatprep.subr.mxu0 0.0
  %5090 = vmatpush1.msra.mxu0 %v4313
  %5091 = vmatprep.subr.mxu0 0.0
  %5092 = vmatpush1.msra.mxu0 %v4312
  %5093 = vmatprep.subr.mxu0 0.0
  %5094 = vmatpush1.msra.mxu0 %v4311
  %5095 = vmatprep.subr.mxu0 0.0
  %5096 = vmatpush1.msra.mxu0 %v4310
  %5097 = vmatprep.subr.mxu0 0.0
  %5098 = vmatpush1.msra.mxu0 %v4309
  %5099 = vmatprep.subr.mxu0 0.0
  %5100 = vmatpush1.msra.mxu0 %v4308
  %5101 = vmatprep.subr.mxu0 0.0
  %5102 = vmatpush1.msra.mxu0 %v4307
  %5103 = vmatprep.subr.mxu0 0.0
  %5104 = vmatpush1.msra.mxu0 %v4306
  %5105 = vmatprep.subr.mxu0 0.0
  %5106 = vmatpush2.msra.mxu0 0.0
  %5107 = vmatprep.subr.mxu0 0.0
  %5108 = vmatpush2.msra.mxu0 0.0
  %5109 = vmatprep.subr.mxu0 0.0
  %5110 = vmatpush2.msra.mxu0 0.0
  %5111 = vmatprep.subr.mxu0 0.0
  %5112 = vmatpush2.msra.mxu0 0.0
  %5113 = vmatprep.subr.mxu0 0.0
  %5114 = vmatpush2.msra.mxu0 0.0
  %5115 = vmatprep.subr.mxu0 0.0
  %5116 = vmatpush2.msra.mxu0 0.0
  %5117 = vmatprep.subr.mxu0 0.0
  %5118 = vmatpush2.msra.mxu0 0.0
  %5119 = vmatprep.subr.mxu0 0.0
  %5120 = vmatpush2.msra.mxu0 0.0
  %5121 = vmatprep.subr.mxu0 0.0
  %5122 = vmatpush2.msra.mxu0 0.0
  %5123 = vmatprep.subr.mxu0 0.0
  %5124 = vmatpush2.msra.mxu0 0.0
  %5125 = vmatprep.subr.mxu0 0.0
  %5126 = vmatpush2.msra.mxu0 0.0
  %5127 = vmatprep.subr.mxu0 0.0
  %5128 = vmatpush2.msra.mxu0 0.0
  %5129 = vmatprep.subr.mxu0 0.0
  %5130 = vmatpush2.msra.mxu0 0.0
  %5131 = vmatprep.subr.mxu0 0.0
  %5132 = vmatpush2.msra.mxu0 0.0
  %5133 = vmatprep.subr.mxu0 0.0
  %5134 = vmatpush2.msra.mxu0 0.0
  %5135 = vmatprep.subr.mxu0 0.0
  %5136 = vmatpush2.msra.mxu0 0.0
  %5137 = vmatprep.mubr.f32.mxu0 0.0
  %5138 = vmatmul.mubr.f32.gmra.mxu0 %v5026
  %v5139 = vpop.f32.mrf.mxu0
  %v5140 = vadd.f32 0.0, %v5139
  %v5141 = vpop.f32.mrf.mxu0
  %5142 = vmatprep.mubr.f32.mxu0 0.0
  %5143 = vmatmul.mubr.f32.gmra.mxu0 %v5029
  %v5144 = vpop.f32.mrf.mxu0
  %v5145 = vadd.f32 0.0, %v5144
  %v5146 = vpop.f32.mrf.mxu0
  %5147 = vmatprep.mubr.f32.mxu0 0.0
  %5148 = vmatmul.mubr.f32.gmra.mxu0 %v5032
  %v5149 = vpop.f32.mrf.mxu0
  %v5150 = vadd.f32 0.0, %v5149
  %v5151 = vpop.f32.mrf.mxu0
  %5152 = vmatprep.mubr.f32.mxu0 0.0
  %5153 = vmatmul.mubr.f32.gmra.mxu0 %v5035
  %v5154 = vpop.f32.mrf.mxu0
  %v5155 = vadd.f32 0.0, %v5154
  %v5156 = vpop.f32.mrf.mxu0
  %5157 = vmatprep.mubr.f32.mxu0 0.0
  %5158 = vmatmul.mubr.f32.gmra.mxu0 %v5038
  %v5159 = vpop.f32.mrf.mxu0
  %v5160 = vadd.f32 0.0, %v5159
  %v5161 = vpop.f32.mrf.mxu0
  %5162 = vmatprep.mubr.f32.mxu0 0.0
  %5163 = vmatmul.mubr.f32.gmra.mxu0 %v5041
  %v5164 = vpop.f32.mrf.mxu0
  %v5165 = vadd.f32 0.0, %v5164
  %v5166 = vpop.f32.mrf.mxu0
  %5167 = vmatprep.mubr.f32.mxu0 0.0
  %5168 = vmatmul.mubr.f32.gmra.mxu0 %v5044
  %v5169 = vpop.f32.mrf.mxu0
  %v5170 = vadd.f32 0.0, %v5169
  %v5171 = vpop.f32.mrf.mxu0
  %5172 = vmatprep.mubr.f32.mxu0 0.0
  %5173 = vmatmul.mubr.f32.gmra.mxu0 %v5047
  %v5174 = vpop.f32.mrf.mxu0
  %v5175 = vadd.f32 0.0, %v5174
  %v5176 = vpop.f32.mrf.mxu0
  %5177 = vmatprep.mubr.f32.mxu0 0.0
  %5178 = vmatmul.mubr.f32.gmra.mxu0 %v5050
  %v5179 = vpop.f32.mrf.mxu0
  %v5180 = vadd.f32 0.0, %v5179
  %v5181 = vpop.f32.mrf.mxu0
  %5182 = vmatprep.mubr.f32.mxu0 0.0
  %5183 = vmatmul.mubr.f32.gmra.mxu0 %v5053
  %v5184 = vpop.f32.mrf.mxu0
  %v5185 = vadd.f32 0.0, %v5184
  %v5186 = vpop.f32.mrf.mxu0
  %5187 = vmatprep.mubr.f32.mxu0 0.0
  %5188 = vmatmul.mubr.f32.gmra.mxu0 %v5056
  %v5189 = vpop.f32.mrf.mxu0
  %v5190 = vadd.f32 0.0, %v5189
  %v5191 = vpop.f32.mrf.mxu0
  %5192 = vmatprep.mubr.f32.mxu0 0.0
  %5193 = vmatmul.mubr.f32.gmra.mxu0 %v5059
  %v5194 = vpop.f32.mrf.mxu0
  %v5195 = vadd.f32 0.0, %v5194
  %v5196 = vpop.f32.mrf.mxu0
  %5197 = vmatprep.mubr.f32.mxu0 0.0
  %5198 = vmatmul.mubr.f32.gmra.mxu0 %v5062
  %v5199 = vpop.f32.mrf.mxu0
  %v5200 = vadd.f32 0.0, %v5199
  %v5201 = vpop.f32.mrf.mxu0
  %5202 = vmatprep.mubr.f32.mxu0 0.0
  %5203 = vmatmul.mubr.f32.gmra.mxu0 %v5065
  %v5204 = vpop.f32.mrf.mxu0
  %v5205 = vadd.f32 0.0, %v5204
  %v5206 = vpop.f32.mrf.mxu0
  %5207 = vmatprep.mubr.f32.mxu0 0.0
  %5208 = vmatmul.mubr.f32.gmra.mxu0 %v5068
  %v5209 = vpop.f32.mrf.mxu0
  %v5210 = vadd.f32 0.0, %v5209
  %v5211 = vpop.f32.mrf.mxu0
  %5212 = vmatprep.mubr.f32.mxu0 0.0
  %5213 = vmatmul.mubr.f32.gmra.mxu0 %v5071
  %v5214 = vpop.f32.mrf.mxu0
  %v5215 = vadd.f32 0.0, %v5214
  %v5216 = vpop.f32.mrf.mxu0
  %5217 = vdwg.mxu0
  %v5218 = vld [vmem:[%s5] sm:$0x1]
  %v5219 = vld [vmem:[%s6] sm:$0x1]
  %v5220 = vsel %vm2397, %v5140, 0.0
  %v5221 = vsel %vm2397, %v5145, 0.0
  %v5222 = vadd.f32 %v5220, %v5221
  %v5223 = vsel %vm2397, %v5150, 0.0
  %v5224 = vadd.f32 %v5222, %v5223
  %v5225 = vsel %vm2397, %v5155, 0.0
  %v5226 = vadd.f32 %v5224, %v5225
  %v5227 = vsel %vm2397, %v5160, 0.0
  %v5228 = vadd.f32 %v5226, %v5227
  %v5229 = vsel %vm2397, %v5165, 0.0
  %v5230 = vadd.f32 %v5228, %v5229
  %v5231 = vsel %vm2397, %v5170, 0.0
  %v5232 = vadd.f32 %v5230, %v5231
  %v5233 = vsel %vm2397, %v5175, 0.0
  %v5234 = vadd.f32 %v5232, %v5233
  %v5235 = vrot.slane %v5234, 4
  %v5236 = vadd.f32 %v5234, %v5235
  %v5237 = vrot.slane %v5236, 2
  %v5238 = vadd.f32 %v5236, %v5237
  %v5239 = vrot.slane %v5238, 1
  %v5240 = vadd.f32 %v5238, %v5239
  %v5241 = vsel %vm2397, %v5180, 0.0
  %v5242 = vsel %vm2397, %v5185, 0.0
  %v5243 = vadd.f32 %v5241, %v5242
  %v5244 = vsel %vm2397, %v5190, 0.0
  %v5245 = vadd.f32 %v5243, %v5244
  %v5246 = vsel %vm2397, %v5195, 0.0
  %v5247 = vadd.f32 %v5245, %v5246
  %v5248 = vsel %vm2397, %v5200, 0.0
  %v5249 = vadd.f32 %v5247, %v5248
  %v5250 = vsel %vm2397, %v5205, 0.0
  %v5251 = vadd.f32 %v5249, %v5250
  %v5252 = vsel %vm2397, %v5210, 0.0
  %v5253 = vadd.f32 %v5251, %v5252
  %v5254 = vsel %vm2397, %v5215, 0.0
  %v5255 = vadd.f32 %v5253, %v5254
  %v5256 = vrot.slane %v5255, 4
  %v5257 = vadd.f32 %v5255, %v5256
  %v5258 = vrot.slane %v5257, 2
  %v5259 = vadd.f32 %v5257, %v5258
  %v5260 = vrot.slane %v5259, 1
  %v5261 = vadd.f32 %v5259, %v5260
  %v5262 = vrcp.pop 64.0
  %v5263 = vmul.f32 %v5240, %v5262
  %v5264 = vmul.f32 %v5261, %v5262
  %v5265 = vsub.f32 %v5140, %v5263
  %v5266 = vsub.f32 %v5145, %v5263
  %v5267 = vsub.f32 %v5150, %v5263
  %v5268 = vsub.f32 %v5155, %v5263
  %v5269 = vsub.f32 %v5160, %v5263
  %v5270 = vsub.f32 %v5165, %v5263
  %v5271 = vsub.f32 %v5170, %v5263
  %v5272 = vsub.f32 %v5175, %v5263
  %v5273 = vsub.f32 %v5180, %v5264
  %v5274 = vsub.f32 %v5185, %v5264
  %v5275 = vsub.f32 %v5190, %v5264
  %v5276 = vsub.f32 %v5195, %v5264
  %v5277 = vsub.f32 %v5200, %v5264
  %v5278 = vsub.f32 %v5205, %v5264
  %v5279 = vsub.f32 %v5210, %v5264
  %v5280 = vsub.f32 %v5215, %v5264
  %v5281 = vmul.f32 %v5265, %v5265
  %v5282 = vmul.f32 %v5266, %v5266
  %v5283 = vmul.f32 %v5267, %v5267
  %v5284 = vmul.f32 %v5268, %v5268
  %v5285 = vmul.f32 %v5269, %v5269
  %v5286 = vmul.f32 %v5270, %v5270
  %v5287 = vmul.f32 %v5271, %v5271
  %v5288 = vmul.f32 %v5272, %v5272
  %v5289 = vmul.f32 %v5273, %v5273
  %v5290 = vmul.f32 %v5274, %v5274
  %v5291 = vmul.f32 %v5275, %v5275
  %v5292 = vmul.f32 %v5276, %v5276
  %v5293 = vmul.f32 %v5277, %v5277
  %v5294 = vmul.f32 %v5278, %v5278
  %v5295 = vmul.f32 %v5279, %v5279
  %v5296 = vmul.f32 %v5280, %v5280
  %v5297 = vsel %vm2397, %v5281, 0.0
  %v5298 = vsel %vm2397, %v5282, 0.0
  %v5299 = vadd.f32 %v5297, %v5298
  %v5300 = vsel %vm2397, %v5283, 0.0
  %v5301 = vadd.f32 %v5299, %v5300
  %v5302 = vsel %vm2397, %v5284, 0.0
  %v5303 = vadd.f32 %v5301, %v5302
  %v5304 = vsel %vm2397, %v5285, 0.0
  %v5305 = vadd.f32 %v5303, %v5304
  %v5306 = vsel %vm2397, %v5286, 0.0
  %v5307 = vadd.f32 %v5305, %v5306
  %v5308 = vsel %vm2397, %v5287, 0.0
  %v5309 = vadd.f32 %v5307, %v5308
  %v5310 = vsel %vm2397, %v5288, 0.0
  %v5311 = vadd.f32 %v5309, %v5310
  %v5312 = vrot.slane %v5311, 4
  %v5313 = vadd.f32 %v5311, %v5312
  %v5314 = vrot.slane %v5313, 2
  %v5315 = vadd.f32 %v5313, %v5314
  %v5316 = vrot.slane %v5315, 1
  %v5317 = vadd.f32 %v5315, %v5316
  %v5318 = vsel %vm2397, %v5289, 0.0
  %v5319 = vsel %vm2397, %v5290, 0.0
  %v5320 = vadd.f32 %v5318, %v5319
  %v5321 = vsel %vm2397, %v5291, 0.0
  %v5322 = vadd.f32 %v5320, %v5321
  %v5323 = vsel %vm2397, %v5292, 0.0
  %v5324 = vadd.f32 %v5322, %v5323
  %v5325 = vsel %vm2397, %v5293, 0.0
  %v5326 = vadd.f32 %v5324, %v5325
  %v5327 = vsel %vm2397, %v5294, 0.0
  %v5328 = vadd.f32 %v5326, %v5327
  %v5329 = vsel %vm2397, %v5295, 0.0
  %v5330 = vadd.f32 %v5328, %v5329
  %v5331 = vsel %vm2397, %v5296, 0.0
  %v5332 = vadd.f32 %v5330, %v5331
  %v5333 = vrot.slane %v5332, 4
  %v5334 = vadd.f32 %v5332, %v5333
  %v5335 = vrot.slane %v5334, 2
  %v5336 = vadd.f32 %v5334, %v5335
  %v5337 = vrot.slane %v5336, 1
  %v5338 = vadd.f32 %v5336, %v5337
  %v5339 = vmul.f32 %v5317, %v5262
  %v5340 = vmul.f32 %v5338, %v5262
  %v5341 = vadd.f32 %v5339, 1e-05
  %v5342 = vadd.f32 %v5340, 1e-05
  %v5343 = vrsqrt.pop %v5341
  %v5344 = vrsqrt.pop %v5342
  %v5345 = vmul.f32 %v5265, %v5343
  %v5346 = vmul.f32 %v5266, %v5343
  %v5347 = vmul.f32 %v5267, %v5343
  %v5348 = vmul.f32 %v5268, %v5343
  %v5349 = vmul.f32 %v5269, %v5343
  %v5350 = vmul.f32 %v5270, %v5343
  %v5351 = vmul.f32 %v5271, %v5343
  %v5352 = vmul.f32 %v5272, %v5343
  %v5353 = vmul.f32 %v5273, %v5344
  %v5354 = vmul.f32 %v5274, %v5344
  %v5355 = vmul.f32 %v5275, %v5344
  %v5356 = vmul.f32 %v5276, %v5344
  %v5357 = vmul.f32 %v5277, %v5344
  %v5358 = vmul.f32 %v5278, %v5344
  %v5359 = vmul.f32 %v5279, %v5344
  %v5360 = vmul.f32 %v5280, %v5344
  %v5362 = vlaneseq
  %v5363 = vshrl.u32 %v5362, 7
  %v5364 = vsub.s32 0, %v5363
  %v5365 = vrot.slane %v5218, %v5364
  %v5367 = vmul.f32 %v5345, %v5365
  %v5368 = vmul.f32 %v5346, %v5365
  %v5369 = vmul.f32 %v5347, %v5365
  %v5370 = vmul.f32 %v5348, %v5365
  %v5371 = vmul.f32 %v5349, %v5365
  %v5372 = vmul.f32 %v5350, %v5365
  %v5373 = vmul.f32 %v5351, %v5365
  %v5374 = vmul.f32 %v5352, %v5365
  %v5375 = vmul.f32 %v5353, %v5365
  %v5376 = vmul.f32 %v5354, %v5365
  %v5377 = vmul.f32 %v5355, %v5365
  %v5378 = vmul.f32 %v5356, %v5365
  %v5379 = vmul.f32 %v5357, %v5365
  %v5380 = vmul.f32 %v5358, %v5365
  %v5381 = vmul.f32 %v5359, %v5365
  %v5382 = vmul.f32 %v5360, %v5365
  %v5384 = vlaneseq
  %v5385 = vshrl.u32 %v5384, 7
  %v5386 = vsub.s32 0, %v5385
  %v5387 = vrot.slane %v5219, %v5386
  %v5389 = vadd.f32 %v5367, %v5387
  %v5390 = vadd.f32 %v5368, %v5387
  %v5391 = vadd.f32 %v5369, %v5387
  %v5392 = vadd.f32 %v5370, %v5387
  %v5393 = vadd.f32 %v5371, %v5387
  %v5394 = vadd.f32 %v5372, %v5387
  %v5395 = vadd.f32 %v5373, %v5387
  %v5396 = vadd.f32 %v5374, %v5387
  %v5397 = vadd.f32 %v5375, %v5387
  %v5398 = vadd.f32 %v5376, %v5387
  %v5399 = vadd.f32 %v5377, %v5387
  %v5400 = vadd.f32 %v5378, %v5387
  %v5401 = vadd.f32 %v5379, %v5387
  %v5402 = vadd.f32 %v5380, %v5387
  %v5403 = vadd.f32 %v5381, %v5387
  %v5404 = vadd.f32 %v5382, %v5387
  %v5405 = vld [vmem:[%s7] sm:$0xf]
  %v5406 = vsel %vm2334, %v35, 0
  %v5408 = vsel %vm2334, %v36, 0
  %v5410 = vsel %vm2334, %v37, 0
  %v5412 = vsel %vm2334, %v38, 0
  %v5414 = vsel %vm2334, %v39, 0
  %v5416 = vsel %vm2334, %v40, 0
  %v5418 = vsel %vm2334, %v41, 0
  %v5420 = vsel %vm2334, %v42, 0
  %v5422 = vsel %vm2334, %v43, 0
  %v5424 = vsel %vm2334, %v44, 0
  %v5426 = vsel %vm2334, %v45, 0
  %v5428 = vsel %vm2334, %v46, 0
  %v5430 = vsel %vm2334, %v47, 0
  %v5432 = vsel %vm2334, %v48, 0
  %v5434 = vsel %vm2334, %v49, 0
  %v5436 = vsel %vm2334, %v50, 0
  %v5438 = vsel %vm2334, %v51, 0
  %v5440 = vsel %vm2334, %v52, 0
  %v5442 = vsel %vm2334, %v53, 0
  %v5444 = vsel %vm2334, %v54, 0
  %v5446 = vsel %vm2334, %v55, 0
  %v5448 = vsel %vm2334, %v56, 0
  %v5450 = vsel %vm2334, %v57, 0
  %v5452 = vsel %vm2334, %v58, 0
  %v5454 = vsel %vm2334, %v59, 0
  %v5456 = vsel %vm2334, %v60, 0
  %v5458 = vsel %vm2334, %v61, 0
  %v5460 = vsel %vm2334, %v62, 0
  %v5462 = vsel %vm2334, %v63, 0
  %v5464 = vsel %vm2334, %v64, 0
  %v5466 = vsel %vm2334, %v65, 0
  %v5468 = vsel %vm2334, %v66, 0
  %v5470 = vsel %vm2334, %v67, 0
  %v5472 = vsel %vm2334, %v68, 0
  %v5474 = vsel %vm2334, %v69, 0
  %v5476 = vsel %vm2334, %v70, 0
  %v5478 = vsel %vm2334, %v71, 0
  %v5480 = vsel %vm2334, %v72, 0
  %v5482 = vsel %vm2334, %v73, 0
  %v5484 = vsel %vm2334, %v74, 0
  %v5486 = vsel %vm2334, %v75, 0
  %v5488 = vsel %vm2334, %v76, 0
  %v5490 = vsel %vm2334, %v77, 0
  %v5492 = vsel %vm2334, %v78, 0
  %v5494 = vsel %vm2334, %v79, 0
  %v5496 = vsel %vm2334, %v80, 0
  %v5498 = vsel %vm2334, %v81, 0
  %v5500 = vsel %vm2334, %v82, 0
  %v5502 = vsel %vm2334, %v83, 0
  %v5504 = vsel %vm2334, %v84, 0
  %v5506 = vsel %vm2334, %v85, 0
  %v5508 = vsel %vm2334, %v86, 0
  %v5510 = vsel %vm2334, %v87, 0
  %v5512 = vsel %vm2334, %v88, 0
  %v5514 = vsel %vm2334, %v89, 0
  %v5516 = vsel %vm2334, %v90, 0
  %v5518 = vsel %vm2334, %v91, 0
  %v5520 = vsel %vm2334, %v92, 0
  %v5522 = vsel %vm2334, %v93, 0
  %v5524 = vsel %vm2334, %v94, 0
  %v5526 = vsel %vm2334, %v95, 0
  %v5528 = vsel %vm2334, %v96, 0
  %v5530 = vsel %vm2334, %v97, 0
  %v5532 = vsel %vm2334, %v98, 0
  %v5535 = vsel %vm3043, %v5405, 0
  %5537 = vmatprep.subr.mxu0 0.0
  %5538 = vmatpush1.msra.mxu0 0.0
  %5539 = vmatprep.subr.mxu0 0.0
  %5540 = vmatpush1.msra.mxu0 0.0
  %5541 = vmatprep.subr.mxu0 0.0
  %5542 = vmatpush1.msra.mxu0 0.0
  %5543 = vmatprep.subr.mxu0 0.0
  %5544 = vmatpush1.msra.mxu0 0.0
  %5545 = vmatprep.subr.mxu0 0.0
  %5546 = vmatpush1.msra.mxu0 0.0
  %5547 = vmatprep.subr.mxu0 0.0
  %5548 = vmatpush1.msra.mxu0 0.0
  %5549 = vmatprep.subr.mxu0 0.0
  %5550 = vmatpush1.msra.mxu0 0.0
  %5551 = vmatprep.subr.mxu0 0.0
  %5552 = vmatpush1.msra.mxu0 0.0
  %5553 = vmatprep.subr.mxu0 0.0
  %5554 = vmatpush1.msra.mxu0 0.0
  %5555 = vmatprep.subr.mxu0 0.0
  %5556 = vmatpush1.msra.mxu0 0.0
  %5557 = vmatprep.subr.mxu0 0.0
  %5558 = vmatpush1.msra.mxu0 0.0
  %5559 = vmatprep.subr.mxu0 0.0
  %5560 = vmatpush1.msra.mxu0 0.0
  %5561 = vmatprep.subr.mxu0 0.0
  %5562 = vmatpush1.msra.mxu0 0.0
  %5563 = vmatprep.subr.mxu0 0.0
  %5564 = vmatpush1.msra.mxu0 0.0
  %5565 = vmatprep.subr.mxu0 0.0
  %5566 = vmatpush1.msra.mxu0 0.0
  %5567 = vmatprep.subr.mxu0 0.0
  %5568 = vmatpush1.msra.mxu0 %v5535
  %5569 = vmatprep.subr.mxu0 0.0
  %5570 = vmatpush2.msra.mxu0 0.0
  %5571 = vmatprep.subr.mxu0 0.0
  %5572 = vmatpush2.msra.mxu0 0.0
  %5573 = vmatprep.subr.mxu0 0.0
  %5574 = vmatpush2.msra.mxu0 0.0
  %5575 = vmatprep.subr.mxu0 0.0
  %5576 = vmatpush2.msra.mxu0 0.0
  %5577 = vmatprep.subr.mxu0 0.0
  %5578 = vmatpush2.msra.mxu0 0.0
  %5579 = vmatprep.subr.mxu0 0.0
  %5580 = vmatpush2.msra.mxu0 0.0
  %5581 = vmatprep.subr.mxu0 0.0
  %5582 = vmatpush2.msra.mxu0 0.0
  %5583 = vmatprep.subr.mxu0 0.0
  %5584 = vmatpush2.msra.mxu0 0.0
  %5585 = vmatprep.subr.mxu0 0.0
  %5586 = vmatpush2.msra.mxu0 0.0
  %5587 = vmatprep.subr.mxu0 0.0
  %5588 = vmatpush2.msra.mxu0 0.0
  %5589 = vmatprep.subr.mxu0 0.0
  %5590 = vmatpush2.msra.mxu0 0.0
  %5591 = vmatprep.subr.mxu0 0.0
  %5592 = vmatpush2.msra.mxu0 0.0
  %5593 = vmatprep.subr.mxu0 0.0
  %5594 = vmatpush2.msra.mxu0 0.0
  %5595 = vmatprep.subr.mxu0 0.0
  %5596 = vmatpush2.msra.mxu0 0.0
  %5597 = vmatprep.subr.mxu0 0.0
  %5598 = vmatpush2.msra.mxu0 0.0
  %5599 = vmatprep.subr.mxu0 0.0
  %5600 = vmatpush2.msra.mxu0 0.0
  %5601 = vmatprep.mubr.f32.mxu0 0.0
  %5602 = vmatmul.mubr.f32.gmra.mxu0 %v5406
  %v5603 = vpop.f32.mrf.mxu0
  %v5604 = vadd.f32 0.0, %v5603
  %v5605 = vpop.f32.mrf.mxu0
  %5606 = vmatprep.mubr.f32.mxu0 0.0
  %5607 = vmatmul.mubr.f32.gmra.mxu0 %v5408
  %v5608 = vpop.f32.mrf.mxu0
  %v5609 = vadd.f32 0.0, %v5608
  %v5610 = vpop.f32.mrf.mxu0
  %5611 = vmatprep.mubr.f32.mxu0 0.0
  %5612 = vmatmul.mubr.f32.gmra.mxu0 %v5410
  %v5613 = vpop.f32.mrf.mxu0
  %v5614 = vadd.f32 0.0, %v5613
  %v5615 = vpop.f32.mrf.mxu0
  %5616 = vmatprep.mubr.f32.mxu0 0.0
  %5617 = vmatmul.mubr.f32.gmra.mxu0 %v5412
  %v5618 = vpop.f32.mrf.mxu0
  %v5619 = vadd.f32 0.0, %v5618
  %v5620 = vpop.f32.mrf.mxu0
  %5621 = vmatprep.mubr.f32.mxu0 0.0
  %5622 = vmatmul.mubr.f32.gmra.mxu0 %v5414
  %v5623 = vpop.f32.mrf.mxu0
  %v5624 = vadd.f32 0.0, %v5623
  %v5625 = vpop.f32.mrf.mxu0
  %5626 = vmatprep.mubr.f32.mxu0 0.0
  %5627 = vmatmul.mubr.f32.gmra.mxu0 %v5416
  %v5628 = vpop.f32.mrf.mxu0
  %v5629 = vadd.f32 0.0, %v5628
  %v5630 = vpop.f32.mrf.mxu0
  %5631 = vmatprep.mubr.f32.mxu0 0.0
  %5632 = vmatmul.mubr.f32.gmra.mxu0 %v5418
  %v5633 = vpop.f32.mrf.mxu0
  %v5634 = vadd.f32 0.0, %v5633
  %v5635 = vpop.f32.mrf.mxu0
  %5636 = vmatprep.mubr.f32.mxu0 0.0
  %5637 = vmatmul.mubr.f32.gmra.mxu0 %v5420
  %v5638 = vpop.f32.mrf.mxu0
  %v5639 = vadd.f32 0.0, %v5638
  %v5640 = vpop.f32.mrf.mxu0
  %5641 = vmatprep.mubr.f32.mxu0 0.0
  %5642 = vmatmul.mubr.f32.gmra.mxu0 %v5422
  %v5643 = vpop.f32.mrf.mxu0
  %v5644 = vadd.f32 0.0, %v5643
  %v5645 = vpop.f32.mrf.mxu0
  %5646 = vmatprep.mubr.f32.mxu0 0.0
  %5647 = vmatmul.mubr.f32.gmra.mxu0 %v5424
  %v5648 = vpop.f32.mrf.mxu0
  %v5649 = vadd.f32 0.0, %v5648
  %v5650 = vpop.f32.mrf.mxu0
  %5651 = vmatprep.mubr.f32.mxu0 0.0
  %5652 = vmatmul.mubr.f32.gmra.mxu0 %v5426
  %v5653 = vpop.f32.mrf.mxu0
  %v5654 = vadd.f32 0.0, %v5653
  %v5655 = vpop.f32.mrf.mxu0
  %5656 = vmatprep.mubr.f32.mxu0 0.0
  %5657 = vmatmul.mubr.f32.gmra.mxu0 %v5428
  %v5658 = vpop.f32.mrf.mxu0
  %v5659 = vadd.f32 0.0, %v5658
  %v5660 = vpop.f32.mrf.mxu0
  %5661 = vmatprep.mubr.f32.mxu0 0.0
  %5662 = vmatmul.mubr.f32.gmra.mxu0 %v5430
  %v5663 = vpop.f32.mrf.mxu0
  %v5664 = vadd.f32 0.0, %v5663
  %v5665 = vpop.f32.mrf.mxu0
  %5666 = vmatprep.mubr.f32.mxu0 0.0
  %5667 = vmatmul.mubr.f32.gmra.mxu0 %v5432
  %v5668 = vpop.f32.mrf.mxu0
  %v5669 = vadd.f32 0.0, %v5668
  %v5670 = vpop.f32.mrf.mxu0
  %5671 = vmatprep.mubr.f32.mxu0 0.0
  %5672 = vmatmul.mubr.f32.gmra.mxu0 %v5434
  %v5673 = vpop.f32.mrf.mxu0
  %v5674 = vadd.f32 0.0, %v5673
  %v5675 = vpop.f32.mrf.mxu0
  %5676 = vmatprep.mubr.f32.mxu0 0.0
  %5677 = vmatmul.mubr.f32.gmra.mxu0 %v5436
  %v5678 = vpop.f32.mrf.mxu0
  %v5679 = vadd.f32 0.0, %v5678
  %v5680 = vpop.f32.mrf.mxu0
  %5681 = vmatprep.mubr.f32.mxu0 0.0
  %5682 = vmatmul.mubr.f32.gmra.mxu0 %v5438
  %v5683 = vpop.f32.mrf.mxu0
  %v5684 = vadd.f32 0.0, %v5683
  %v5685 = vpop.f32.mrf.mxu0
  %5686 = vmatprep.mubr.f32.mxu0 0.0
  %5687 = vmatmul.mubr.f32.gmra.mxu0 %v5440
  %v5688 = vpop.f32.mrf.mxu0
  %v5689 = vadd.f32 0.0, %v5688
  %v5690 = vpop.f32.mrf.mxu0
  %5691 = vmatprep.mubr.f32.mxu0 0.0
  %5692 = vmatmul.mubr.f32.gmra.mxu0 %v5442
  %v5693 = vpop.f32.mrf.mxu0
  %v5694 = vadd.f32 0.0, %v5693
  %v5695 = vpop.f32.mrf.mxu0
  %5696 = vmatprep.mubr.f32.mxu0 0.0
  %5697 = vmatmul.mubr.f32.gmra.mxu0 %v5444
  %v5698 = vpop.f32.mrf.mxu0
  %v5699 = vadd.f32 0.0, %v5698
  %v5700 = vpop.f32.mrf.mxu0
  %5701 = vmatprep.mubr.f32.mxu0 0.0
  %5702 = vmatmul.mubr.f32.gmra.mxu0 %v5446
  %v5703 = vpop.f32.mrf.mxu0
  %v5704 = vadd.f32 0.0, %v5703
  %v5705 = vpop.f32.mrf.mxu0
  %5706 = vmatprep.mubr.f32.mxu0 0.0
  %5707 = vmatmul.mubr.f32.gmra.mxu0 %v5448
  %v5708 = vpop.f32.mrf.mxu0
  %v5709 = vadd.f32 0.0, %v5708
  %v5710 = vpop.f32.mrf.mxu0
  %5711 = vmatprep.mubr.f32.mxu0 0.0
  %5712 = vmatmul.mubr.f32.gmra.mxu0 %v5450
  %v5713 = vpop.f32.mrf.mxu0
  %v5714 = vadd.f32 0.0, %v5713
  %v5715 = vpop.f32.mrf.mxu0
  %5716 = vmatprep.mubr.f32.mxu0 0.0
  %5717 = vmatmul.mubr.f32.gmra.mxu0 %v5452
  %v5718 = vpop.f32.mrf.mxu0
  %v5719 = vadd.f32 0.0, %v5718
  %v5720 = vpop.f32.mrf.mxu0
  %5721 = vmatprep.mubr.f32.mxu0 0.0
  %5722 = vmatmul.mubr.f32.gmra.mxu0 %v5454
  %v5723 = vpop.f32.mrf.mxu0
  %v5724 = vadd.f32 0.0, %v5723
  %v5725 = vpop.f32.mrf.mxu0
  %5726 = vmatprep.mubr.f32.mxu0 0.0
  %5727 = vmatmul.mubr.f32.gmra.mxu0 %v5456
  %v5728 = vpop.f32.mrf.mxu0
  %v5729 = vadd.f32 0.0, %v5728
  %v5730 = vpop.f32.mrf.mxu0
  %5731 = vmatprep.mubr.f32.mxu0 0.0
  %5732 = vmatmul.mubr.f32.gmra.mxu0 %v5458
  %v5733 = vpop.f32.mrf.mxu0
  %v5734 = vadd.f32 0.0, %v5733
  %v5735 = vpop.f32.mrf.mxu0
  %5736 = vmatprep.mubr.f32.mxu0 0.0
  %5737 = vmatmul.mubr.f32.gmra.mxu0 %v5460
  %v5738 = vpop.f32.mrf.mxu0
  %v5739 = vadd.f32 0.0, %v5738
  %v5740 = vpop.f32.mrf.mxu0
  %5741 = vmatprep.mubr.f32.mxu0 0.0
  %5742 = vmatmul.mubr.f32.gmra.mxu0 %v5462
  %v5743 = vpop.f32.mrf.mxu0
  %v5744 = vadd.f32 0.0, %v5743
  %v5745 = vpop.f32.mrf.mxu0
  %5746 = vmatprep.mubr.f32.mxu0 0.0
  %5747 = vmatmul.mubr.f32.gmra.mxu0 %v5464
  %v5748 = vpop.f32.mrf.mxu0
  %v5749 = vadd.f32 0.0, %v5748
  %v5750 = vpop.f32.mrf.mxu0
  %5751 = vmatprep.mubr.f32.mxu0 0.0
  %5752 = vmatmul.mubr.f32.gmra.mxu0 %v5466
  %v5753 = vpop.f32.mrf.mxu0
  %v5754 = vadd.f32 0.0, %v5753
  %v5755 = vpop.f32.mrf.mxu0
  %5756 = vmatprep.mubr.f32.mxu0 0.0
  %5757 = vmatmul.mubr.f32.gmra.mxu0 %v5468
  %v5758 = vpop.f32.mrf.mxu0
  %v5759 = vadd.f32 0.0, %v5758
  %v5760 = vpop.f32.mrf.mxu0
  %5761 = vmatprep.mubr.f32.mxu0 0.0
  %5762 = vmatmul.mubr.f32.gmra.mxu0 %v5470
  %v5763 = vpop.f32.mrf.mxu0
  %v5764 = vadd.f32 0.0, %v5763
  %v5765 = vpop.f32.mrf.mxu0
  %5766 = vmatprep.mubr.f32.mxu0 0.0
  %5767 = vmatmul.mubr.f32.gmra.mxu0 %v5472
  %v5768 = vpop.f32.mrf.mxu0
  %v5769 = vadd.f32 0.0, %v5768
  %v5770 = vpop.f32.mrf.mxu0
  %5771 = vmatprep.mubr.f32.mxu0 0.0
  %5772 = vmatmul.mubr.f32.gmra.mxu0 %v5474
  %v5773 = vpop.f32.mrf.mxu0
  %v5774 = vadd.f32 0.0, %v5773
  %v5775 = vpop.f32.mrf.mxu0
  %5776 = vmatprep.mubr.f32.mxu0 0.0
  %5777 = vmatmul.mubr.f32.gmra.mxu0 %v5476
  %v5778 = vpop.f32.mrf.mxu0
  %v5779 = vadd.f32 0.0, %v5778
  %v5780 = vpop.f32.mrf.mxu0
  %5781 = vmatprep.mubr.f32.mxu0 0.0
  %5782 = vmatmul.mubr.f32.gmra.mxu0 %v5478
  %v5783 = vpop.f32.mrf.mxu0
  %v5784 = vadd.f32 0.0, %v5783
  %v5785 = vpop.f32.mrf.mxu0
  %5786 = vmatprep.mubr.f32.mxu0 0.0
  %5787 = vmatmul.mubr.f32.gmra.mxu0 %v5480
  %v5788 = vpop.f32.mrf.mxu0
  %v5789 = vadd.f32 0.0, %v5788
  %v5790 = vpop.f32.mrf.mxu0
  %5791 = vmatprep.mubr.f32.mxu0 0.0
  %5792 = vmatmul.mubr.f32.gmra.mxu0 %v5482
  %v5793 = vpop.f32.mrf.mxu0
  %v5794 = vadd.f32 0.0, %v5793
  %v5795 = vpop.f32.mrf.mxu0
  %5796 = vmatprep.mubr.f32.mxu0 0.0
  %5797 = vmatmul.mubr.f32.gmra.mxu0 %v5484
  %v5798 = vpop.f32.mrf.mxu0
  %v5799 = vadd.f32 0.0, %v5798
  %v5800 = vpop.f32.mrf.mxu0
  %5801 = vmatprep.mubr.f32.mxu0 0.0
  %5802 = vmatmul.mubr.f32.gmra.mxu0 %v5486
  %v5803 = vpop.f32.mrf.mxu0
  %v5804 = vadd.f32 0.0, %v5803
  %v5805 = vpop.f32.mrf.mxu0
  %5806 = vmatprep.mubr.f32.mxu0 0.0
  %5807 = vmatmul.mubr.f32.gmra.mxu0 %v5488
  %v5808 = vpop.f32.mrf.mxu0
  %v5809 = vadd.f32 0.0, %v5808
  %v5810 = vpop.f32.mrf.mxu0
  %5811 = vmatprep.mubr.f32.mxu0 0.0
  %5812 = vmatmul.mubr.f32.gmra.mxu0 %v5490
  %v5813 = vpop.f32.mrf.mxu0
  %v5814 = vadd.f32 0.0, %v5813
  %v5815 = vpop.f32.mrf.mxu0
  %5816 = vmatprep.mubr.f32.mxu0 0.0
  %5817 = vmatmul.mubr.f32.gmra.mxu0 %v5492
  %v5818 = vpop.f32.mrf.mxu0
  %v5819 = vadd.f32 0.0, %v5818
  %v5820 = vpop.f32.mrf.mxu0
  %5821 = vmatprep.mubr.f32.mxu0 0.0
  %5822 = vmatmul.mubr.f32.gmra.mxu0 %v5494
  %v5823 = vpop.f32.mrf.mxu0
  %v5824 = vadd.f32 0.0, %v5823
  %v5825 = vpop.f32.mrf.mxu0
  %5826 = vmatprep.mubr.f32.mxu0 0.0
  %5827 = vmatmul.mubr.f32.gmra.mxu0 %v5496
  %v5828 = vpop.f32.mrf.mxu0
  %v5829 = vadd.f32 0.0, %v5828
  %v5830 = vpop.f32.mrf.mxu0
  %5831 = vmatprep.mubr.f32.mxu0 0.0
  %5832 = vmatmul.mubr.f32.gmra.mxu0 %v5498
  %v5833 = vpop.f32.mrf.mxu0
  %v5834 = vadd.f32 0.0, %v5833
  %v5835 = vpop.f32.mrf.mxu0
  %5836 = vmatprep.mubr.f32.mxu0 0.0
  %5837 = vmatmul.mubr.f32.gmra.mxu0 %v5500
  %v5838 = vpop.f32.mrf.mxu0
  %v5839 = vadd.f32 0.0, %v5838
  %v5840 = vpop.f32.mrf.mxu0
  %5841 = vmatprep.mubr.f32.mxu0 0.0
  %5842 = vmatmul.mubr.f32.gmra.mxu0 %v5502
  %v5843 = vpop.f32.mrf.mxu0
  %v5844 = vadd.f32 0.0, %v5843
  %v5845 = vpop.f32.mrf.mxu0
  %5846 = vmatprep.mubr.f32.mxu0 0.0
  %5847 = vmatmul.mubr.f32.gmra.mxu0 %v5504
  %v5848 = vpop.f32.mrf.mxu0
  %v5849 = vadd.f32 0.0, %v5848
  %v5850 = vpop.f32.mrf.mxu0
  %5851 = vmatprep.mubr.f32.mxu0 0.0
  %5852 = vmatmul.mubr.f32.gmra.mxu0 %v5506
  %v5853 = vpop.f32.mrf.mxu0
  %v5854 = vadd.f32 0.0, %v5853
  %v5855 = vpop.f32.mrf.mxu0
  %5856 = vmatprep.mubr.f32.mxu0 0.0
  %5857 = vmatmul.mubr.f32.gmra.mxu0 %v5508
  %v5858 = vpop.f32.mrf.mxu0
  %v5859 = vadd.f32 0.0, %v5858
  %v5860 = vpop.f32.mrf.mxu0
  %5861 = vmatprep.mubr.f32.mxu0 0.0
  %5862 = vmatmul.mubr.f32.gmra.mxu0 %v5510
  %v5863 = vpop.f32.mrf.mxu0
  %v5864 = vadd.f32 0.0, %v5863
  %v5865 = vpop.f32.mrf.mxu0
  %5866 = vmatprep.mubr.f32.mxu0 0.0
  %5867 = vmatmul.mubr.f32.gmra.mxu0 %v5512
  %v5868 = vpop.f32.mrf.mxu0
  %v5869 = vadd.f32 0.0, %v5868
  %v5870 = vpop.f32.mrf.mxu0
  %5871 = vmatprep.mubr.f32.mxu0 0.0
  %5872 = vmatmul.mubr.f32.gmra.mxu0 %v5514
  %v5873 = vpop.f32.mrf.mxu0
  %v5874 = vadd.f32 0.0, %v5873
  %v5875 = vpop.f32.mrf.mxu0
  %5876 = vmatprep.mubr.f32.mxu0 0.0
  %5877 = vmatmul.mubr.f32.gmra.mxu0 %v5516
  %v5878 = vpop.f32.mrf.mxu0
  %v5879 = vadd.f32 0.0, %v5878
  %v5880 = vpop.f32.mrf.mxu0
  %5881 = vmatprep.mubr.f32.mxu0 0.0
  %5882 = vmatmul.mubr.f32.gmra.mxu0 %v5518
  %v5883 = vpop.f32.mrf.mxu0
  %v5884 = vadd.f32 0.0, %v5883
  %v5885 = vpop.f32.mrf.mxu0
  %5886 = vmatprep.mubr.f32.mxu0 0.0
  %5887 = vmatmul.mubr.f32.gmra.mxu0 %v5520
  %v5888 = vpop.f32.mrf.mxu0
  %v5889 = vadd.f32 0.0, %v5888
  %v5890 = vpop.f32.mrf.mxu0
  %5891 = vmatprep.mubr.f32.mxu0 0.0
  %5892 = vmatmul.mubr.f32.gmra.mxu0 %v5522
  %v5893 = vpop.f32.mrf.mxu0
  %v5894 = vadd.f32 0.0, %v5893
  %v5895 = vpop.f32.mrf.mxu0
  %5896 = vmatprep.mubr.f32.mxu0 0.0
  %5897 = vmatmul.mubr.f32.gmra.mxu0 %v5524
  %v5898 = vpop.f32.mrf.mxu0
  %v5899 = vadd.f32 0.0, %v5898
  %v5900 = vpop.f32.mrf.mxu0
  %5901 = vmatprep.mubr.f32.mxu0 0.0
  %5902 = vmatmul.mubr.f32.gmra.mxu0 %v5526
  %v5903 = vpop.f32.mrf.mxu0
  %v5904 = vadd.f32 0.0, %v5903
  %v5905 = vpop.f32.mrf.mxu0
  %5906 = vmatprep.mubr.f32.mxu0 0.0
  %5907 = vmatmul.mubr.f32.gmra.mxu0 %v5528
  %v5908 = vpop.f32.mrf.mxu0
  %v5909 = vadd.f32 0.0, %v5908
  %v5910 = vpop.f32.mrf.mxu0
  %5911 = vmatprep.mubr.f32.mxu0 0.0
  %5912 = vmatmul.mubr.f32.gmra.mxu0 %v5530
  %v5913 = vpop.f32.mrf.mxu0
  %v5914 = vadd.f32 0.0, %v5913
  %v5915 = vpop.f32.mrf.mxu0
  %5916 = vmatprep.mubr.f32.mxu0 0.0
  %5917 = vmatmul.mubr.f32.gmra.mxu0 %v5532
  %v5918 = vpop.f32.mrf.mxu0
  %v5919 = vadd.f32 0.0, %v5918
  %v5920 = vpop.f32.mrf.mxu0
  %5921 = vdwg.mxu0
  %v5922 = vadd.f32 %v5604, %v5614
  %v5923 = vadd.f32 %v5609, %v5619
  %v5924 = vadd.f32 %v5624, %v5634
  %v5925 = vadd.f32 %v5629, %v5639
  %v5926 = vadd.f32 %v5644, %v5654
  %v5927 = vadd.f32 %v5649, %v5659
  %v5928 = vadd.f32 %v5664, %v5674
  %v5929 = vadd.f32 %v5669, %v5679
  %v5930 = vadd.f32 %v5684, %v5694
  %v5931 = vadd.f32 %v5689, %v5699
  %v5932 = vadd.f32 %v5704, %v5714
  %v5933 = vadd.f32 %v5709, %v5719
  %v5934 = vadd.f32 %v5724, %v5734
  %v5935 = vadd.f32 %v5729, %v5739
  %v5936 = vadd.f32 %v5744, %v5754
  %v5937 = vadd.f32 %v5749, %v5759
  %v5938 = vadd.f32 %v5764, %v5774
  %v5939 = vadd.f32 %v5769, %v5779
  %v5940 = vadd.f32 %v5784, %v5794
  %v5941 = vadd.f32 %v5789, %v5799
  %v5942 = vadd.f32 %v5804, %v5814
  %v5943 = vadd.f32 %v5809, %v5819
  %v5944 = vadd.f32 %v5824, %v5834
  %v5945 = vadd.f32 %v5829, %v5839
  %v5946 = vadd.f32 %v5844, %v5854
  %v5947 = vadd.f32 %v5849, %v5859
  %v5948 = vadd.f32 %v5864, %v5874
  %v5949 = vadd.f32 %v5869, %v5879
  %v5950 = vadd.f32 %v5884, %v5894
  %v5951 = vadd.f32 %v5889, %v5899
  %v5952 = vadd.f32 %v5904, %v5914
  %v5953 = vadd.f32 %v5909, %v5919
  %v5954 = vmul.f32 %v5922, 0.5
  %v5955 = vmul.f32 %v5923, 0.5
  %v5956 = vmul.f32 %v5924, 0.5
  %v5957 = vmul.f32 %v5925, 0.5
  %v5958 = vmul.f32 %v5926, 0.5
  %v5959 = vmul.f32 %v5927, 0.5
  %v5960 = vmul.f32 %v5928, 0.5
  %v5961 = vmul.f32 %v5929, 0.5
  %v5962 = vmul.f32 %v5930, 0.5
  %v5963 = vmul.f32 %v5931, 0.5
  %v5964 = vmul.f32 %v5932, 0.5
  %v5965 = vmul.f32 %v5933, 0.5
  %v5966 = vmul.f32 %v5934, 0.5
  %v5967 = vmul.f32 %v5935, 0.5
  %v5968 = vmul.f32 %v5936, 0.5
  %v5969 = vmul.f32 %v5937, 0.5
  %v5970 = vmul.f32 %v5938, 0.5
  %v5971 = vmul.f32 %v5939, 0.5
  %v5972 = vmul.f32 %v5940, 0.5
  %v5973 = vmul.f32 %v5941, 0.5
  %v5974 = vmul.f32 %v5942, 0.5
  %v5975 = vmul.f32 %v5943, 0.5
  %v5976 = vmul.f32 %v5944, 0.5
  %v5977 = vmul.f32 %v5945, 0.5
  %v5978 = vmul.f32 %v5946, 0.5
  %v5979 = vmul.f32 %v5947, 0.5
  %v5980 = vmul.f32 %v5948, 0.5
  %v5981 = vmul.f32 %v5949, 0.5
  %v5982 = vmul.f32 %v5950, 0.5
  %v5983 = vmul.f32 %v5951, 0.5
  %v5984 = vmul.f32 %v5952, 0.5
  %v5985 = vmul.f32 %v5953, 0.5
  %5986 = vst.msk [vmem:[#allocation2] sm:$0xff] %vm2397, %v5954
  %5987 = vst.msk [vmem:[#allocation2 + $0x8] sm:$0xff] %vm2397, %v5955
  %5988 = vst.msk [vmem:[#allocation2 + $0x10] sm:$0xff] %vm2397, %v5956
  %5989 = vst.msk [vmem:[#allocation2 + $0x18] sm:$0xff] %vm2397, %v5957
  %5990 = vst.msk [vmem:[#allocation2 + $0x20] sm:$0xff] %vm2397, %v5958
  %5991 = vst.msk [vmem:[#allocation2 + $0x28] sm:$0xff] %vm2397, %v5959
  %5992 = vst.msk [vmem:[#allocation2 + $0x30] sm:$0xff] %vm2397, %v5960
  %5993 = vst.msk [vmem:[#allocation2 + $0x38] sm:$0xff] %vm2397, %v5961
  %5994 = vst.msk [vmem:[#allocation2 + $0x40] sm:$0xff] %vm2397, %v5962
  %5995 = vst.msk [vmem:[#allocation2 + $0x48] sm:$0xff] %vm2397, %v5963
  %5996 = vst.msk [vmem:[#allocation2 + $0x50] sm:$0xff] %vm2397, %v5964
  %5997 = vst.msk [vmem:[#allocation2 + $0x58] sm:$0xff] %vm2397, %v5965
  %5998 = vst.msk [vmem:[#allocation2 + $0x60] sm:$0xff] %vm2397, %v5966
  %5999 = vst.msk [vmem:[#allocation2 + $0x68] sm:$0xff] %vm2397, %v5967
  %6000 = vst.msk [vmem:[#allocation2 + $0x70] sm:$0xff] %vm2397, %v5968
  %6001 = vst.msk [vmem:[#allocation2 + $0x78] sm:$0xff] %vm2397, %v5969
  %6002 = vst.msk [vmem:[#allocation2 + $0x80] sm:$0xff] %vm2397, %v5970
  %6003 = vst.msk [vmem:[#allocation2 + $0x88] sm:$0xff] %vm2397, %v5971
  %6004 = vst.msk [vmem:[#allocation2 + $0x90] sm:$0xff] %vm2397, %v5972
  %6005 = vst.msk [vmem:[#allocation2 + $0x98] sm:$0xff] %vm2397, %v5973
  %6006 = vst.msk [vmem:[#allocation2 + $0xa0] sm:$0xff] %vm2397, %v5974
  %6007 = vst.msk [vmem:[#allocation2 + $0xa8] sm:$0xff] %vm2397, %v5975
  %6008 = vst.msk [vmem:[#allocation2 + $0xb0] sm:$0xff] %vm2397, %v5976
  %6009 = vst.msk [vmem:[#allocation2 + $0xb8] sm:$0xff] %vm2397, %v5977
  %6010 = vst.msk [vmem:[#allocation2 + $0xc0] sm:$0xff] %vm2397, %v5978
  %6011 = vst.msk [vmem:[#allocation2 + $0xc8] sm:$0xff] %vm2397, %v5979
  %6012 = vst.msk [vmem:[#allocation2 + $0xd0] sm:$0xff] %vm2397, %v5980
  %6013 = vst.msk [vmem:[#allocation2 + $0xd8] sm:$0xff] %vm2397, %v5981
  %6014 = vst.msk [vmem:[#allocation2 + $0xe0] sm:$0xff] %vm2397, %v5982
  %6015 = vst.msk [vmem:[#allocation2 + $0xe8] sm:$0xff] %vm2397, %v5983
  %6016 = vst.msk [vmem:[#allocation2 + $0xf0] sm:$0xff] %vm2397, %v5984
  %6017 = vst.msk [vmem:[#allocation2 + $0xf8] sm:$0xff] %vm2397, %v5985
  %v6018 = vld [vmem:[#allocation2] ss:$2 sm:$0xff]
  %v6019 = vld [vmem:[%s4212] ss:$2 sm:$0xff]
  %v6020 = vld [vmem:[%s4214] ss:$2 sm:$0xff]
  %v6021 = vld [vmem:[%s4216] ss:$2 sm:$0xff]
  %v6022 = vld [vmem:[%s4218] ss:$2 sm:$0xff]
  %v6023 = vld [vmem:[%s4220] ss:$2 sm:$0xff]
  %v6024 = vld [vmem:[%s4222] ss:$2 sm:$0xff]
  %v6025 = vld [vmem:[%s4224] ss:$2 sm:$0xff]
  %v6026 = vld [vmem:[%s4226] ss:$2 sm:$0xff]
  %v6027 = vld [vmem:[%s4228] ss:$2 sm:$0xff]
  %v6028 = vld [vmem:[%s4230] ss:$2 sm:$0xff]
  %v6029 = vld [vmem:[%s4232] ss:$2 sm:$0xff]
  %v6030 = vld [vmem:[%s4234] ss:$2 sm:$0xff]
  %v6031 = vld [vmem:[%s4236] ss:$2 sm:$0xff]
  %v6032 = vld [vmem:[%s4238] ss:$2 sm:$0xff]
  %v6033 = vld [vmem:[%s4240] ss:$2 sm:$0xff]
  %v6034 = vld [vmem:[%s4242] ss:$2 sm:$0xff]
  %v6035 = vld [vmem:[%s4244] ss:$2 sm:$0xff]
  %v6036 = vld [vmem:[%s4246] ss:$2 sm:$0xff]
  %v6037 = vld [vmem:[%s4248] ss:$2 sm:$0xff]
  %v6038 = vld [vmem:[%s4250] ss:$2 sm:$0xff]
  %v6039 = vld [vmem:[%s4252] ss:$2 sm:$0xff]
  %v6040 = vld [vmem:[%s4254] ss:$2 sm:$0xff]
  %v6041 = vld [vmem:[%s4256] ss:$2 sm:$0xff]
  %v6042 = vld [vmem:[%s4258] ss:$2 sm:$0xff]
  %v6043 = vld [vmem:[%s4260] ss:$2 sm:$0xff]
  %v6044 = vld [vmem:[%s4262] ss:$2 sm:$0xff]
  %v6045 = vld [vmem:[%s4264] ss:$2 sm:$0xff]
  %v6046 = vld [vmem:[%s4266] ss:$2 sm:$0xff]
  %v6047 = vld [vmem:[%s4268] ss:$2 sm:$0xff]
  %v6048 = vld [vmem:[%s4270] ss:$2 sm:$0xff]
  %v6049 = vld [vmem:[%s4272] ss:$2 sm:$0xff]
  %v6050 = vadd.f32 %v6018, %v6034
  %v6051 = vadd.f32 %v6019, %v6035
  %v6052 = vadd.f32 %v6020, %v6036
  %v6053 = vadd.f32 %v6021, %v6037
  %v6054 = vadd.f32 %v6022, %v6038
  %v6055 = vadd.f32 %v6023, %v6039
  %v6056 = vadd.f32 %v6024, %v6040
  %v6057 = vadd.f32 %v6025, %v6041
  %v6058 = vadd.f32 %v6026, %v6042
  %v6059 = vadd.f32 %v6027, %v6043
  %v6060 = vadd.f32 %v6028, %v6044
  %v6061 = vadd.f32 %v6029, %v6045
  %v6062 = vadd.f32 %v6030, %v6046
  %v6063 = vadd.f32 %v6031, %v6047
  %v6064 = vadd.f32 %v6032, %v6048
  %v6065 = vadd.f32 %v6033, %v6049
  %v6066 = vmul.f32 %v6050, 0.5
  %v6067 = vmul.f32 %v6051, 0.5
  %v6068 = vmul.f32 %v6052, 0.5
  %v6069 = vmul.f32 %v6053, 0.5
  %v6070 = vmul.f32 %v6054, 0.5
  %v6071 = vmul.f32 %v6055, 0.5
  %v6072 = vmul.f32 %v6056, 0.5
  %v6073 = vmul.f32 %v6057, 0.5
  %v6074 = vmul.f32 %v6058, 0.5
  %v6075 = vmul.f32 %v6059, 0.5
  %v6076 = vmul.f32 %v6060, 0.5
  %v6077 = vmul.f32 %v6061, 0.5
  %v6078 = vmul.f32 %v6062, 0.5
  %v6079 = vmul.f32 %v6063, 0.5
  %v6080 = vmul.f32 %v6064, 0.5
  %v6081 = vmul.f32 %v6065, 0.5
  %v6082 = vld [vmem:[%s8] sm:$0x1]
  %v6083 = vld [vmem:[%s9] sm:$0x1]
  %v6084 = vsel %vm2397, %v6066, 0.0
  %v6085 = vsel %vm2397, %v6067, 0.0
  %v6086 = vadd.f32 %v6084, %v6085
  %v6087 = vsel %vm2397, %v6068, 0.0
  %v6088 = vadd.f32 %v6086, %v6087
  %v6089 = vsel %vm2397, %v6069, 0.0
  %v6090 = vadd.f32 %v6088, %v6089
  %v6091 = vsel %vm2397, %v6070, 0.0
  %v6092 = vadd.f32 %v6090, %v6091
  %v6093 = vsel %vm2397, %v6071, 0.0
  %v6094 = vadd.f32 %v6092, %v6093
  %v6095 = vsel %vm2397, %v6072, 0.0
  %v6096 = vadd.f32 %v6094, %v6095
  %v6097 = vsel %vm2397, %v6073, 0.0
  %v6098 = vadd.f32 %v6096, %v6097
  %v6099 = vrot.slane %v6098, 4
  %v6100 = vadd.f32 %v6098, %v6099
  %v6101 = vrot.slane %v6100, 2
  %v6102 = vadd.f32 %v6100, %v6101
  %v6103 = vrot.slane %v6102, 1
  %v6104 = vadd.f32 %v6102, %v6103
  %v6105 = vsel %vm2397, %v6074, 0.0
  %v6106 = vsel %vm2397, %v6075, 0.0
  %v6107 = vadd.f32 %v6105, %v6106
  %v6108 = vsel %vm2397, %v6076, 0.0
  %v6109 = vadd.f32 %v6107, %v6108
  %v6110 = vsel %vm2397, %v6077, 0.0
  %v6111 = vadd.f32 %v6109, %v6110
  %v6112 = vsel %vm2397, %v6078, 0.0
  %v6113 = vadd.f32 %v6111, %v6112
  %v6114 = vsel %vm2397, %v6079, 0.0
  %v6115 = vadd.f32 %v6113, %v6114
  %v6116 = vsel %vm2397, %v6080, 0.0
  %v6117 = vadd.f32 %v6115, %v6116
  %v6118 = vsel %vm2397, %v6081, 0.0
  %v6119 = vadd.f32 %v6117, %v6118
  %v6120 = vrot.slane %v6119, 4
  %v6121 = vadd.f32 %v6119, %v6120
  %v6122 = vrot.slane %v6121, 2
  %v6123 = vadd.f32 %v6121, %v6122
  %v6124 = vrot.slane %v6123, 1
  %v6125 = vadd.f32 %v6123, %v6124
  %v6126 = vmul.f32 %v6104, %v5262
  %v6127 = vmul.f32 %v6125, %v5262
  %v6128 = vsub.f32 %v6066, %v6126
  %v6129 = vsub.f32 %v6067, %v6126
  %v6130 = vsub.f32 %v6068, %v6126
  %v6131 = vsub.f32 %v6069, %v6126
  %v6132 = vsub.f32 %v6070, %v6126
  %v6133 = vsub.f32 %v6071, %v6126
  %v6134 = vsub.f32 %v6072, %v6126
  %v6135 = vsub.f32 %v6073, %v6126
  %v6136 = vsub.f32 %v6074, %v6127
  %v6137 = vsub.f32 %v6075, %v6127
  %v6138 = vsub.f32 %v6076, %v6127
  %v6139 = vsub.f32 %v6077, %v6127
  %v6140 = vsub.f32 %v6078, %v6127
  %v6141 = vsub.f32 %v6079, %v6127
  %v6142 = vsub.f32 %v6080, %v6127
  %v6143 = vsub.f32 %v6081, %v6127
  %v6144 = vmul.f32 %v6128, %v6128
  %v6145 = vmul.f32 %v6129, %v6129
  %v6146 = vmul.f32 %v6130, %v6130
  %v6147 = vmul.f32 %v6131, %v6131
  %v6148 = vmul.f32 %v6132, %v6132
  %v6149 = vmul.f32 %v6133, %v6133
  %v6150 = vmul.f32 %v6134, %v6134
  %v6151 = vmul.f32 %v6135, %v6135
  %v6152 = vmul.f32 %v6136, %v6136
  %v6153 = vmul.f32 %v6137, %v6137
  %v6154 = vmul.f32 %v6138, %v6138
  %v6155 = vmul.f32 %v6139, %v6139
  %v6156 = vmul.f32 %v6140, %v6140
  %v6157 = vmul.f32 %v6141, %v6141
  %v6158 = vmul.f32 %v6142, %v6142
  %v6159 = vmul.f32 %v6143, %v6143
  %v6160 = vsel %vm2397, %v6144, 0.0
  %v6161 = vsel %vm2397, %v6145, 0.0
  %v6162 = vadd.f32 %v6160, %v6161
  %v6163 = vsel %vm2397, %v6146, 0.0
  %v6164 = vadd.f32 %v6162, %v6163
  %v6165 = vsel %vm2397, %v6147, 0.0
  %v6166 = vadd.f32 %v6164, %v6165
  %v6167 = vsel %vm2397, %v6148, 0.0
  %v6168 = vadd.f32 %v6166, %v6167
  %v6169 = vsel %vm2397, %v6149, 0.0
  %v6170 = vadd.f32 %v6168, %v6169
  %v6171 = vsel %vm2397, %v6150, 0.0
  %v6172 = vadd.f32 %v6170, %v6171
  %v6173 = vsel %vm2397, %v6151, 0.0
  %v6174 = vadd.f32 %v6172, %v6173
  %v6175 = vrot.slane %v6174, 4
  %v6176 = vadd.f32 %v6174, %v6175
  %v6177 = vrot.slane %v6176, 2
  %v6178 = vadd.f32 %v6176, %v6177
  %v6179 = vrot.slane %v6178, 1
  %v6180 = vadd.f32 %v6178, %v6179
  %v6181 = vsel %vm2397, %v6152, 0.0
  %v6182 = vsel %vm2397, %v6153, 0.0
  %v6183 = vadd.f32 %v6181, %v6182
  %v6184 = vsel %vm2397, %v6154, 0.0
  %v6185 = vadd.f32 %v6183, %v6184
  %v6186 = vsel %vm2397, %v6155, 0.0
  %v6187 = vadd.f32 %v6185, %v6186
  %v6188 = vsel %vm2397, %v6156, 0.0
  %v6189 = vadd.f32 %v6187, %v6188
  %v6190 = vsel %vm2397, %v6157, 0.0
  %v6191 = vadd.f32 %v6189, %v6190
  %v6192 = vsel %vm2397, %v6158, 0.0
  %v6193 = vadd.f32 %v6191, %v6192
  %v6194 = vsel %vm2397, %v6159, 0.0
  %v6195 = vadd.f32 %v6193, %v6194
  %v6196 = vrot.slane %v6195, 4
  %v6197 = vadd.f32 %v6195, %v6196
  %v6198 = vrot.slane %v6197, 2
  %v6199 = vadd.f32 %v6197, %v6198
  %v6200 = vrot.slane %v6199, 1
  %v6201 = vadd.f32 %v6199, %v6200
  %v6202 = vmul.f32 %v6180, %v5262
  %v6203 = vmul.f32 %v6201, %v5262
  %v6204 = vadd.f32 %v6202, 1e-05
  %v6205 = vadd.f32 %v6203, 1e-05
  %v6206 = vrsqrt.pop %v6204
  %v6207 = vrsqrt.pop %v6205
  %v6208 = vmul.f32 %v6128, %v6206
  %v6209 = vmul.f32 %v6129, %v6206
  %v6210 = vmul.f32 %v6130, %v6206
  %v6211 = vmul.f32 %v6131, %v6206
  %v6212 = vmul.f32 %v6132, %v6206
  %v6213 = vmul.f32 %v6133, %v6206
  %v6214 = vmul.f32 %v6134, %v6206
  %v6215 = vmul.f32 %v6135, %v6206
  %v6216 = vmul.f32 %v6136, %v6207
  %v6217 = vmul.f32 %v6137, %v6207
  %v6218 = vmul.f32 %v6138, %v6207
  %v6219 = vmul.f32 %v6139, %v6207
  %v6220 = vmul.f32 %v6140, %v6207
  %v6221 = vmul.f32 %v6141, %v6207
  %v6222 = vmul.f32 %v6142, %v6207
  %v6223 = vmul.f32 %v6143, %v6207
  %v6225 = vlaneseq
  %v6226 = vshrl.u32 %v6225, 7
  %v6227 = vsub.s32 0, %v6226
  %v6228 = vrot.slane %v6082, %v6227
  %v6230 = vmul.f32 %v6208, %v6228
  %v6231 = vmul.f32 %v6209, %v6228
  %v6232 = vmul.f32 %v6210, %v6228
  %v6233 = vmul.f32 %v6211, %v6228
  %v6234 = vmul.f32 %v6212, %v6228
  %v6235 = vmul.f32 %v6213, %v6228
  %v6236 = vmul.f32 %v6214, %v6228
  %v6237 = vmul.f32 %v6215, %v6228
  %v6238 = vmul.f32 %v6216, %v6228
  %v6239 = vmul.f32 %v6217, %v6228
  %v6240 = vmul.f32 %v6218, %v6228
  %v6241 = vmul.f32 %v6219, %v6228
  %v6242 = vmul.f32 %v6220, %v6228
  %v6243 = vmul.f32 %v6221, %v6228
  %v6244 = vmul.f32 %v6222, %v6228
  %v6245 = vmul.f32 %v6223, %v6228
  %v6247 = vlaneseq
  %v6248 = vshrl.u32 %v6247, 7
  %v6249 = vsub.s32 0, %v6248
  %v6250 = vrot.slane %v6083, %v6249
  %v6252 = vadd.f32 %v6230, %v6250
  %v6253 = vadd.f32 %v6231, %v6250
  %v6254 = vadd.f32 %v6232, %v6250
  %v6255 = vadd.f32 %v6233, %v6250
  %v6256 = vadd.f32 %v6234, %v6250
  %v6257 = vadd.f32 %v6235, %v6250
  %v6258 = vadd.f32 %v6236, %v6250
  %v6259 = vadd.f32 %v6237, %v6250
  %v6260 = vadd.f32 %v6238, %v6250
  %v6261 = vadd.f32 %v6239, %v6250
  %v6262 = vadd.f32 %v6240, %v6250
  %v6263 = vadd.f32 %v6241, %v6250
  %v6264 = vadd.f32 %v6242, %v6250
  %v6265 = vadd.f32 %v6243, %v6250
  %v6266 = vadd.f32 %v6244, %v6250
  %v6267 = vadd.f32 %v6245, %v6250
  %v6268 = vadd.f32 %v5389, %v6252
  %v6269 = vadd.f32 %v5390, %v6253
  %v6270 = vadd.f32 %v5391, %v6254
  %v6271 = vadd.f32 %v5392, %v6255
  %v6272 = vadd.f32 %v5393, %v6256
  %v6273 = vadd.f32 %v5394, %v6257
  %v6274 = vadd.f32 %v5395, %v6258
  %v6275 = vadd.f32 %v5396, %v6259
  %v6276 = vadd.f32 %v5397, %v6260
  %v6277 = vadd.f32 %v5398, %v6261
  %v6278 = vadd.f32 %v5399, %v6262
  %v6279 = vadd.f32 %v5400, %v6263
  %v6280 = vadd.f32 %v5401, %v6264
  %v6281 = vadd.f32 %v5402, %v6265
  %v6282 = vadd.f32 %v5403, %v6266
  %v6283 = vadd.f32 %v5404, %v6267
  %v6284 = vmax.f32 %v6268, 0.0
  %v6285 = vmax.f32 %v6269, 0.0
  %v6286 = vmax.f32 %v6270, 0.0
  %v6287 = vmax.f32 %v6271, 0.0
  %v6288 = vmax.f32 %v6272, 0.0
  %v6289 = vmax.f32 %v6273, 0.0
  %v6290 = vmax.f32 %v6274, 0.0
  %v6291 = vmax.f32 %v6275, 0.0
  %v6292 = vmax.f32 %v6276, 0.0
  %v6293 = vmax.f32 %v6277, 0.0
  %v6294 = vmax.f32 %v6278, 0.0
  %v6295 = vmax.f32 %v6279, 0.0
  %v6296 = vmax.f32 %v6280, 0.0
  %v6297 = vmax.f32 %v6281, 0.0
  %v6298 = vmax.f32 %v6282, 0.0
  %v6299 = vmax.f32 %v6283, 0.0
  %6300 = vst.msk [vmem:[%s10] sm:$0xff] %vm2397, %v6284
  %6301 = vst.msk [vmem:[%s10 + $0x8] sm:$0xff] %vm2397, %v6285
  %6302 = vst.msk [vmem:[%s10 + $0x10] sm:$0xff] %vm2397, %v6286
  %6303 = vst.msk [vmem:[%s10 + $0x18] sm:$0xff] %vm2397, %v6287
  %6304 = vst.msk [vmem:[%s10 + $0x20] sm:$0xff] %vm2397, %v6288
  %6305 = vst.msk [vmem:[%s10 + $0x28] sm:$0xff] %vm2397, %v6289
  %6306 = vst.msk [vmem:[%s10 + $0x30] sm:$0xff] %vm2397, %v6290
  %6307 = vst.msk [vmem:[%s10 + $0x38] sm:$0xff] %vm2397, %v6291
  %6308 = vst.msk [vmem:[%s10 + $0x40] sm:$0xff] %vm2397, %v6292
  %6309 = vst.msk [vmem:[%s10 + $0x48] sm:$0xff] %vm2397, %v6293
  %6310 = vst.msk [vmem:[%s10 + $0x50] sm:$0xff] %vm2397, %v6294
  %6311 = vst.msk [vmem:[%s10 + $0x58] sm:$0xff] %vm2397, %v6295
  %6312 = vst.msk [vmem:[%s10 + $0x60] sm:$0xff] %vm2397, %v6296
  %6313 = vst.msk [vmem:[%s10 + $0x68] sm:$0xff] %vm2397, %v6297
  %6314 = vst.msk [vmem:[%s10 + $0x70] sm:$0xff] %vm2397, %v6298
  %6315 = vst.msk [vmem:[%s10 + $0x78] sm:$0xff] %vm2397, %v6299
  // Predicated region
  $region42: #{tpu_custom_call.1} parent=0 // pred_check
    _
  $region43: #{tpu_custom_call.1} parent=0 // pred_check_branch
    %6317 = sbr.rel (0) target = $region45
  $region44: #{tpu_custom_call.1} parent=0 // pred_region
    _
  $region45: #{tpu_custom_call.1} parent=0 // pred_fallthru
    _
  // Predicated region
  $region46: #{tpu_custom_call.1} parent=0 // pred_check
    _
  $region47: #{tpu_custom_call.1} parent=0 // pred_check_branch
    %6319 = sbr.rel (0) target = $region49
  $region48: #{tpu_custom_call.1} parent=0 // pred_region
    _
  $region49: #{tpu_custom_call.1} parent=0 // pred_fallthru
    _

</llo_original>
